<compile_context>
chip_gen: v7x
topology: tpu7x:2x2x1
jax: 0.10.0
libtpu: 0.0.40
codegen_flags: <defaults>
</compile_context>

<pallas_src>
import functools

import jax
import jax.numpy as jnp
from jax.experimental import pallas as pl
from jax.experimental.pallas import tpu as pltpu

LN_EPS = 1e-5  # PyTorch LayerNorm / TransformerEncoderLayer default


def _round_up(n, m):
    return ((n + m - 1) // m) * m


def _layernorm(x, w, b):
    mean = jnp.mean(x, axis=-1, keepdims=True)
    var = jnp.mean(jnp.square(x - mean), axis=-1, keepdims=True)
    return (x - mean) * jax.lax.rsqrt(var + LN_EPS) * w + b


def _layer_body(h, compute_dtype, wvo, wff1, bff1, wff2, vecs):
    """One post-LN encoder layer on a (TB, d_model) f32 activation tile."""
    bvo, ln1w, ln1b = vecs[0:1], vecs[1:2], vecs[2:3]
    bff2, ln2w, ln2b = vecs[3:4], vecs[4:5], vecs[5:6]
    # seq_len == 1 => softmax over one key == 1 => attention == out_proj(v_proj(h));
    # W_v @ W_o pre-fused offline -> a single matmul (exact in f32).
    sa = jnp.dot(h.astype(compute_dtype), wvo,
                 preferred_element_type=jnp.float32) + bvo
    h = _layernorm(h + sa, ln1w, ln1b)
    f1 = jnp.dot(h.astype(compute_dtype), wff1,
                 preferred_element_type=jnp.float32) + bff1
    f1 = jnp.maximum(f1, 0.0)
    ff = jnp.dot(f1.astype(compute_dtype), wff2,
                 preferred_element_type=jnp.float32) + bff2
    return _layernorm(h + ff, ln2w, ln2b)


def _tfe_kernel_resident(num_layers, compute_dtype,
                         x_ref, w_in_ref, b_in_ref,
                         wvo_ref, wff1_ref, bff1_ref, wff2_ref, vecs_ref,
                         out_ref):
    """All weights VMEM-resident (small/medium configs)."""
    h = jnp.dot(x_ref[...].astype(compute_dtype), w_in_ref[...],
                preferred_element_type=jnp.float32) + b_in_ref[...]
    for l in range(num_layers):                      # static -> unrolled
        h = _layer_body(h, compute_dtype, wvo_ref[l], wff1_ref[l],
                        bff1_ref[l], wff2_ref[l], vecs_ref[l])
    out_ref[...] = h.astype(out_ref.dtype)


def _tfe_kernel_streamed(num_layers, compute_dtype,
                         x_ref, w_in_ref, b_in_ref,
                         wvo_hbm, wff1_hbm, bff1_ref, wff2_hbm, vecs_ref,
                         out_ref,
                         wvo_buf, wff1_buf, wff2_buf, sems):
    """Large configs: big per-layer weights stream HBM->VMEM, double-buffered."""
    def start(l, slot):
        pltpu.make_async_copy(wvo_hbm.at[l], wvo_buf.at[slot], sems.at[0, slot]).start()
        pltpu.make_async_copy(wff1_hbm.at[l], wff1_buf.at[slot], sems.at[1, slot]).start()
        pltpu.make_async_copy(wff2_hbm.at[l], wff2_buf.at[slot], sems.at[2, slot]).start()

    def wait(l, slot):
        pltpu.make_async_copy(wvo_hbm.at[l], wvo_buf.at[slot], sems.at[0, slot]).wait()
        pltpu.make_async_copy(wff1_hbm.at[l], wff1_buf.at[slot], sems.at[1, slot]).wait()
        pltpu.make_async_copy(wff2_hbm.at[l], wff2_buf.at[slot], sems.at[2, slot]).wait()

    start(0, 0)  # layer-0 weight DMA overlaps the input projection below
    h = jnp.dot(x_ref[...].astype(compute_dtype), w_in_ref[...],
                preferred_element_type=jnp.float32) + b_in_ref[...]
    for l in range(num_layers):                      # static -> unrolled
        slot = l & 1
        wait(l, slot)
        if l + 1 < num_layers:                       # prefetch next layer's weights
            start(l + 1, 1 - slot)
        h = _layer_body(h, compute_dtype, wvo_buf[slot], wff1_buf[slot],
                        bff1_ref[l], wff2_buf[slot], vecs_ref[l])
    out_ref[...] = h.astype(out_ref.dtype)


def transformer_feature_extractor(x, params, *, batch_tile=None,
                                  compute_dtype=jnp.bfloat16,
                                  layer_stream=None):
    """x: (B, input_dim) float32 -> (B, d_model) float32."""
    B, input_dim = x.shape
    d_model = params["w_in"].shape[1]
    dim_feedforward = params["wff1"].shape[2]
    num_layers = params["wv"].shape[0]
    cdt = jnp.dtype(compute_dtype)
    itemsize = cdt.itemsize

    # ---- offline (plain-JAX, once) weight preprocessing ----------------------
    wvo = jnp.einsum("lij,ljk->lik", params["wv"], params["wo"])
    bvo = jnp.einsum("lrj,ljk->lrk", params["bv"], params["wo"]) + params["bo"]
    # Pack all per-layer (1, d_model) vectors into one (L, 6, d_model) array.
    vecs = jnp.concatenate(
        [bvo, params["ln1w"], params["ln1b"],
         params["bff2"], params["ln2w"], params["ln2b"]], axis=1).astype(jnp.float32)

    w_in = params["w_in"].astype(cdt)
    wvo = wvo.astype(cdt)
    wff1 = params["wff1"].astype(cdt)
    wff2 = params["wff2"].astype(cdt)
    b_in = params["b_in"].astype(jnp.float32)
    bff1 = params["bff1"].astype(jnp.float32)

    def _bytes(a):
        return int(a.size) * a.dtype.itemsize

    big_weight_bytes = _bytes(w_in) + _bytes(wvo) + _bytes(wff1) + _bytes(wff2)
    small_weight_bytes = _bytes(b_in) + _bytes(bff1) + _bytes(vecs)
    per_layer_big_bytes = (d_model * d_model + 2 * d_model * dim_feedforward) * itemsize

    # Device VMEM capacity (clamp the limit honestly; 64 MiB/TC on v7x).
    try:
        vmem_cap = int(pltpu.get_tpu_info().vmem_capacity_bytes)
    except Exception:
        vmem_cap = 64 << 20

    if layer_stream is None:
        layer_stream = (big_weight_bytes + small_weight_bytes) > (40 << 20)

    # ---- batch tiling ---------------------------------------------------------
    if batch_tile is None:
        # >= 2 grid steps when B permits so ('parallel',) shards across v7x's two
        # TensorCores; large tiles amortize weight reads / per-step overhead.
        cap = 512 if cdt == jnp.dtype(jnp.bfloat16) else 256
        if B <= 8:
            batch_tile = 8
        else:
            batch_tile = max(8, min(cap, _round_up((B + 1) // 2, 8)))
    B_pad = _round_up(B, batch_tile)
    if B_pad != B:
        x = jnp.pad(x, ((0, B_pad - B), (0, 0)))
    grid = (B_pad // batch_tile,)

    weights = [w_in, b_in, wvo, wff1, bff1, wff2, vecs]

    # I/O tiles (double-buffered) + live f32 activation temporaries.
    io_bytes = 2 * batch_tile * (input_dim + d_model) * 4
    act_bytes = batch_tile * (8 * d_model + 3 * dim_feedforward) * 4

    flops = 2 * B_pad * (input_dim * d_model
                         + num_layers * (d_model * d_model
                                         + 2 * d_model * dim_feedforward))
    cost = pl.CostEstimate(
        flops=int(flops),
        transcendentals=int(2 * num_layers * B_pad),
        bytes_accessed=int(big_weight_bytes + small_weight_bytes
                           + B_pad * input_dim * 4 + B_pad * d_model * 4))

    x_spec = pl.BlockSpec((batch_tile, input_dim), lambda i: (i, 0))
    # NOTE: if d_model < 128 the output lane width underfills vregs (masked
    # stores) and the MXU; prefer d_model a multiple of 128 in production.
    out_spec = pl.BlockSpec((batch_tile, d_model), lambda i: (i, 0))
    out_shape = jax.ShapeDtypeStruct((B_pad, d_model), jnp.float32)

    def invariant_spec(a, single_buffer):
        nd = a.ndim
        idx = lambda i, _nd=nd: (0,) * _nd
        if single_buffer:
            # Grid-invariant blocks: one resident copy is enough (halves VMEM).
            return pl.BlockSpec(a.shape, idx, pipeline_mode=pl.Buffered(1))
        return pl.BlockSpec(a.shape, idx)

    def run(single_buffer):
        buf = 1 if single_buffer else 2
        if layer_stream:
            kern = functools.partial(_tfe_kernel_streamed, num_layers, cdt)
            in_specs = [x_spec,
                        invariant_spec(w_in, single_buffer),
                        invariant_spec(b_in, single_buffer),
                        pl.BlockSpec(memory_space=pl.ANY),   # wvo  (HBM, streamed)
                        pl.BlockSpec(memory_space=pl.ANY),   # wff1 (HBM, streamed)
                        invariant_spec(bff1, single_buffer),
                        pl.BlockSpec(memory_space=pl.ANY),   # wff2 (HBM, streamed)
                        invariant_spec(vecs, single_buffer)]
            scratch = [pltpu.VMEM((2, d_model, d_model), cdt),
                       pltpu.VMEM((2, d_model, dim_feedforward), cdt),
                       pltpu.VMEM((2, dim_feedforward, d_model), cdt),
                       pltpu.SemaphoreType.DMA((3, 2))]
            resident_w = (buf * (_bytes(w_in) + small_weight_bytes)
                          + 2 * per_layer_big_bytes)
        else:
            kern = functools.partial(_tfe_kernel_resident, num_layers, cdt)
            in_specs = [x_spec] + [invariant_spec(w, single_buffer) for w in weights]
            scratch = []
            resident_w = buf * (big_weight_bytes + small_weight_bytes)

        vmem_limit = resident_w + io_bytes + act_bytes + (8 << 20)
        vmem_limit = int(min(max(vmem_limit, 32 << 20), vmem_cap - (8 << 20)))

        return pl.pallas_call(
            kern,
            out_shape=out_shape,
            grid_spec=pltpu.PrefetchScalarGridSpec(
                num_scalar_prefetch=0,
                grid=grid,
                in_specs=in_specs,
                out_specs=out_spec,
                scratch_shapes=scratch),
            compiler_params=pltpu.CompilerParams(
                dimension_semantics=("parallel",),
                vmem_limit_bytes=vmem_limit),
            cost_estimate=cost,
        )(x, *weights)

    try:
        out = run(True)
    except Exception:
        # Fallback if this jax version rejects pl.Buffered(1) on invariant blocks.
        out = run(False)
    return out[:B]


def init_params(key, input_dim, d_model, dim_feedforward, num_layers):
    """Deterministic synthetic weights (layout: (in_features, out_features))."""
    ks = jax.random.split(key, 8)
    s = 0.05
    return {
        "w_in": s * jax.random.normal(ks[0], (input_dim, d_model), jnp.float32),
        "b_in": s * jax.random.normal(ks[1], (1, d_model), jnp.float32),
        "wv": s * jax.random.normal(ks[2], (num_layers, d_model, d_model), jnp.float32),
        "bv": s * jax.random.normal(ks[3], (num_layers, 1, d_model), jnp.float32),
        "wo": s * jax.random.normal(ks[4], (num_layers, d_model, d_model), jnp.float32),
        "bo": s * jax.random.normal(ks[5], (num_layers, 1, d_model), jnp.float32),
        "ln1w": jnp.ones((num_layers, 1, d_model), jnp.float32),
        "ln1b": jnp.zeros((num_layers, 1, d_model), jnp.float32),
        "wff1": s * jax.random.normal(ks[6], (num_layers, d_model, dim_feedforward), jnp.float32),
        "bff1": jnp.zeros((num_layers, 1, dim_feedforward), jnp.float32),
        "wff2": s * jax.random.normal(ks[7], (num_layers, dim_feedforward, d_model), jnp.float32),
        "bff2": jnp.zeros((num_layers, 1, d_model), jnp.float32),
        "ln2w": jnp.ones((num_layers, 1, d_model), jnp.float32),
        "ln2b": jnp.zeros((num_layers, 1, d_model), jnp.float32),
    }


def reference_forward(x, params):
    """Pure-JAX reference of the original (un-fused) math, for correctness check."""
    h = x @ params["w_in"] + params["b_in"]
    L = params["wv"].shape[0]
    for l in range(L):
        sa = (h @ params["wv"][l] + params["bv"][l]) @ params["wo"][l] + params["bo"][l]
        h = _layernorm(h + sa, params["ln1w"][l], params["ln1b"][l])
        ff = jnp.maximum(h @ params["wff1"][l] + params["bff1"][l], 0.0) \
             @ params["wff2"][l] + params["bff2"][l]
        h = _layernorm(h + ff, params["ln2w"][l], params["ln2b"][l])
    return h


if __name__ == "__main__":
    # Small shapes consistent with the module (scaled-down hyperparameters).
    B, INPUT_DIM, D_MODEL, D_FF, N_LAYERS = 16, 128, 128, 256, 2

    key = jax.random.PRNGKey(0)
    kx, kp = jax.random.split(key)
    x = jax.random.normal(kx, (B, INPUT_DIM), jnp.float32)
    params = init_params(kp, INPUT_DIM, D_MODEL, D_FF, N_LAYERS)

    ref = jax.block_until_ready(reference_forward(x, params))

    # 1) production default: bf16 matmuls, f32 accumulation / LayerNorm.
    out = jax.block_until_ready(transformer_feature_extractor(x, params))
    assert out.shape == (B, D_MODEL)
    assert jnp.allclose(out, ref, atol=5e-2, rtol=5e-2)

    # 2) f32 opt-in parity path: exact match to the PyTorch math.
    out_f32 = jax.block_until_ready(
        transformer_feature_extractor(x, params, compute_dtype=jnp.float32))
    assert jnp.allclose(out_f32, ref, atol=1e-4, rtol=1e-4)

    # 3) ragged batch (zero-pad + slice path; no divisibility constraint).
    Br = 13
    out_r = jax.block_until_ready(
        transformer_feature_extractor(x[:Br], params, compute_dtype=jnp.float32))
    assert out_r.shape == (Br, D_MODEL)
    assert jnp.allclose(out_r, ref[:Br], atol=1e-4, rtol=1e-4)

    # 4) layer-streaming path (forced on to exercise the manual double-buffered
    #    HBM->VMEM weight pipeline used for large configs on v7x).
    out_s = jax.block_until_ready(
        transformer_feature_extractor(x, params, compute_dtype=jnp.float32,
                                      layer_stream=True))
    assert jnp.allclose(out_s, ref, atol=1e-4, rtol=1e-4)

    print("KERNEL_OK")
</pallas_src>

<mosaic_0001>
module attributes {stable_mosaic.version = 11 : i64} {
  func.func @_tfe_kernel_resident(%arg0: i32, %arg1: memref<8x128xf32, #tpu.memory_space<vmem>>, %arg2: memref<128x128xbf16, #tpu.memory_space<vmem>>, %arg3: memref<1x128xf32, #tpu.memory_space<vmem>>, %arg4: memref<2x128x128xbf16, #tpu.memory_space<vmem>>, %arg5: memref<2x128x256xbf16, #tpu.memory_space<vmem>>, %arg6: memref<2x1x256xf32, #tpu.memory_space<vmem>>, %arg7: memref<2x256x128xbf16, #tpu.memory_space<vmem>>, %arg8: memref<2x6x128xf32, #tpu.memory_space<vmem>>, %arg9: memref<8x128xf32, #tpu.memory_space<vmem>>) attributes {dimension_semantics = [#tpu.dimension_semantics<parallel>], iteration_bounds = array<i64: 2>, scalar_prefetch = 0 : i64, scratch_operands = 0 : i64, tpu.core_type = #tpu.core_type<tc>, window_params = [{transform_indices = @transform_0, window_bounds = array<i64: 8, 128>}, {pipeline_mode = #tpu.pipeline_mode<synchronous>, transform_indices = @transform_1, window_bounds = array<i64: 128, 128>}, {pipeline_mode = #tpu.pipeline_mode<synchronous>, transform_indices = @transform_2, window_bounds = array<i64: 1, 128>}, {pipeline_mode = #tpu.pipeline_mode<synchronous>, transform_indices = @transform_3, window_bounds = array<i64: 2, 128, 128>}, {pipeline_mode = #tpu.pipeline_mode<synchronous>, transform_indices = @transform_4, window_bounds = array<i64: 2, 128, 256>}, {pipeline_mode = #tpu.pipeline_mode<synchronous>, transform_indices = @transform_5, window_bounds = array<i64: 2, 1, 256>}, {pipeline_mode = #tpu.pipeline_mode<synchronous>, transform_indices = @transform_6, window_bounds = array<i64: 2, 256, 128>}, {pipeline_mode = #tpu.pipeline_mode<synchronous>, transform_indices = @transform_7, window_bounds = array<i64: 2, 6, 128>}, {transform_indices = @transform_8, window_bounds = array<i64: 8, 128>}]} {
    %c0 = arith.constant 0 : index
    %c0_0 = arith.constant 0 : index
    %0 = vector.load %arg1[%c0, %c0_0] : memref<8x128xf32, #tpu.memory_space<vmem>>, vector<8x128xf32>
    %1 = arith.truncf %0 : vector<8x128xf32> to vector<8x128xbf16>
    %c0_1 = arith.constant 0 : index
    %c0_2 = arith.constant 0 : index
    %2 = vector.load %arg2[%c0_1, %c0_2] : memref<128x128xbf16, #tpu.memory_space<vmem>>, vector<128x128xbf16>
    %cst = arith.constant dense<0.000000e+00> : vector<8x128xf32>
    %3 = tpu.matmul %1, %2, %cst {dimension_numbers = #tpu.dot_dimension_numbers<[1], [0], [0], [1], [0, 0, 1, 1], [], []>} : vector<8x128xbf16>, vector<128x128xbf16>, vector<8x128xf32> -> vector<8x128xf32>
    %c0_3 = arith.constant 0 : index
    %c0_4 = arith.constant 0 : index
    %4 = vector.load %arg3[%c0_3, %c0_4] : memref<1x128xf32, #tpu.memory_space<vmem>>, vector<1x128xf32>
    %5 = vector.broadcast %4 : vector<1x128xf32> to vector<8x128xf32>
    %6 = arith.addf %3, %5 : vector<8x128xf32>
    %c0_5 = arith.constant 0 : index
    %c0_6 = arith.constant 0 : index
    %c0_7 = arith.constant 0 : index
    %7 = vector.load %arg4[%c0_5, %c0_6, %c0_7] : memref<2x128x128xbf16, #tpu.memory_space<vmem>>, vector<1x128x128xbf16>
    %8 = vector.shape_cast %7 : vector<1x128x128xbf16> to vector<128x128xbf16>
    %c0_8 = arith.constant 0 : index
    %c0_9 = arith.constant 0 : index
    %c0_10 = arith.constant 0 : index
    %9 = vector.load %arg5[%c0_8, %c0_9, %c0_10] : memref<2x128x256xbf16, #tpu.memory_space<vmem>>, vector<1x128x256xbf16>
    %10 = vector.shape_cast %9 : vector<1x128x256xbf16> to vector<128x256xbf16>
    %c0_11 = arith.constant 0 : index
    %c0_12 = arith.constant 0 : index
    %c0_13 = arith.constant 0 : index
    %11 = vector.load %arg6[%c0_11, %c0_12, %c0_13] : memref<2x1x256xf32, #tpu.memory_space<vmem>>, vector<1x1x256xf32>
    %12 = vector.shape_cast %11 : vector<1x1x256xf32> to vector<1x256xf32>
    %c0_14 = arith.constant 0 : index
    %c0_15 = arith.constant 0 : index
    %c0_16 = arith.constant 0 : index
    %13 = vector.load %arg7[%c0_14, %c0_15, %c0_16] : memref<2x256x128xbf16, #tpu.memory_space<vmem>>, vector<1x256x128xbf16>
    %14 = vector.shape_cast %13 : vector<1x256x128xbf16> to vector<256x128xbf16>
    %c0_17 = arith.constant 0 : index
    %c0_18 = arith.constant 0 : index
    %c0_19 = arith.constant 0 : index
    %15 = vector.load %arg8[%c0_17, %c0_18, %c0_19] : memref<2x6x128xf32, #tpu.memory_space<vmem>>, vector<1x6x128xf32>
    %16 = vector.shape_cast %15 : vector<1x6x128xf32> to vector<6x128xf32>
    %17 = vector.extract_strided_slice %16 {offsets = [0, 0], sizes = [1, 128], strides = [1, 1]} : vector<6x128xf32> to vector<1x128xf32>
    %18 = vector.extract_strided_slice %16 {offsets = [1, 0], sizes = [1, 128], strides = [1, 1]} : vector<6x128xf32> to vector<1x128xf32>
    %19 = vector.extract_strided_slice %16 {offsets = [2, 0], sizes = [1, 128], strides = [1, 1]} : vector<6x128xf32> to vector<1x128xf32>
    %20 = vector.extract_strided_slice %16 {offsets = [3, 0], sizes = [1, 128], strides = [1, 1]} : vector<6x128xf32> to vector<1x128xf32>
    %21 = vector.extract_strided_slice %16 {offsets = [4, 0], sizes = [1, 128], strides = [1, 1]} : vector<6x128xf32> to vector<1x128xf32>
    %22 = vector.extract_strided_slice %16 {offsets = [5, 0], sizes = [1, 128], strides = [1, 1]} : vector<6x128xf32> to vector<1x128xf32>
    %23 = arith.truncf %6 : vector<8x128xf32> to vector<8x128xbf16>
    %cst_20 = arith.constant dense<0.000000e+00> : vector<8x128xf32>
    %24 = tpu.matmul %23, %8, %cst_20 {dimension_numbers = #tpu.dot_dimension_numbers<[1], [0], [0], [1], [0, 0, 1, 1], [], []>} : vector<8x128xbf16>, vector<128x128xbf16>, vector<8x128xf32> -> vector<8x128xf32>
    %25 = vector.broadcast %17 : vector<1x128xf32> to vector<8x128xf32>
    %26 = arith.addf %24, %25 : vector<8x128xf32>
    %27 = arith.addf %6, %26 : vector<8x128xf32>
    %cst_21 = arith.constant dense<0.000000e+00> : vector<8xf32>
    %28 = vector.multi_reduction <add>, %27, %cst_21 [1] : vector<8x128xf32> to vector<8xf32>
    %29 = vector.shape_cast %28 : vector<8xf32> to vector<8x1xf32>
    %cst_22 = arith.constant 1.280000e+02 : f32
    %30 = vector.broadcast %cst_22 : f32 to vector<8x1xf32>
    %31 = arith.divf %29, %30 : vector<8x1xf32>
    %32 = vector.broadcast %31 : vector<8x1xf32> to vector<8x128xf32>
    %33 = arith.subf %27, %32 : vector<8x128xf32>
    %34 = arith.mulf %33, %33 : vector<8x128xf32>
    %cst_23 = arith.constant dense<0.000000e+00> : vector<8xf32>
    %35 = vector.multi_reduction <add>, %34, %cst_23 [1] : vector<8x128xf32> to vector<8xf32>
    %36 = vector.shape_cast %35 : vector<8xf32> to vector<8x1xf32>
    %cst_24 = arith.constant 1.280000e+02 : f32
    %37 = vector.broadcast %cst_24 : f32 to vector<8x1xf32>
    %38 = arith.divf %36, %37 : vector<8x1xf32>
    %39 = vector.broadcast %31 : vector<8x1xf32> to vector<8x128xf32>
    %40 = arith.subf %27, %39 : vector<8x128xf32>
    %cst_25 = arith.constant 9.99999974E-6 : f32
    %41 = vector.broadcast %cst_25 : f32 to vector<8x1xf32>
    %42 = arith.addf %38, %41 : vector<8x1xf32>
    %43 = math.rsqrt %42 : vector<8x1xf32>
    %44 = vector.broadcast %43 : vector<8x1xf32> to vector<8x128xf32>
    %45 = arith.mulf %40, %44 : vector<8x128xf32>
    %46 = vector.broadcast %18 : vector<1x128xf32> to vector<8x128xf32>
    %47 = arith.mulf %45, %46 : vector<8x128xf32>
    %48 = vector.broadcast %19 : vector<1x128xf32> to vector<8x128xf32>
    %49 = arith.addf %47, %48 : vector<8x128xf32>
    %50 = arith.truncf %49 : vector<8x128xf32> to vector<8x128xbf16>
    %cst_26 = arith.constant dense<0.000000e+00> : vector<8x256xf32>
    %51 = tpu.matmul %50, %10, %cst_26 {dimension_numbers = #tpu.dot_dimension_numbers<[1], [0], [0], [1], [0, 0, 1, 1], [], []>} : vector<8x128xbf16>, vector<128x256xbf16>, vector<8x256xf32> -> vector<8x256xf32>
    %52 = vector.broadcast %12 : vector<1x256xf32> to vector<8x256xf32>
    %53 = arith.addf %51, %52 : vector<8x256xf32>
    %cst_27 = arith.constant 0.000000e+00 : f32
    %54 = vector.broadcast %cst_27 : f32 to vector<8x256xf32>
    %55 = arith.maximumf %53, %54 : vector<8x256xf32>
    %56 = arith.truncf %55 : vector<8x256xf32> to vector<8x256xbf16>
    %cst_28 = arith.constant dense<0.000000e+00> : vector<8x128xf32>
    %57 = tpu.matmul %56, %14, %cst_28 {dimension_numbers = #tpu.dot_dimension_numbers<[1], [0], [0], [1], [0, 0, 1, 1], [], []>} : vector<8x256xbf16>, vector<256x128xbf16>, vector<8x128xf32> -> vector<8x128xf32>
    %58 = vector.broadcast %20 : vector<1x128xf32> to vector<8x128xf32>
    %59 = arith.addf %57, %58 : vector<8x128xf32>
    %60 = arith.addf %49, %59 : vector<8x128xf32>
    %cst_29 = arith.constant dense<0.000000e+00> : vector<8xf32>
    %61 = vector.multi_reduction <add>, %60, %cst_29 [1] : vector<8x128xf32> to vector<8xf32>
    %62 = vector.shape_cast %61 : vector<8xf32> to vector<8x1xf32>
    %cst_30 = arith.constant 1.280000e+02 : f32
    %63 = vector.broadcast %cst_30 : f32 to vector<8x1xf32>
    %64 = arith.divf %62, %63 : vector<8x1xf32>
    %65 = vector.broadcast %64 : vector<8x1xf32> to vector<8x128xf32>
    %66 = arith.subf %60, %65 : vector<8x128xf32>
    %67 = arith.mulf %66, %66 : vector<8x128xf32>
    %cst_31 = arith.constant dense<0.000000e+00> : vector<8xf32>
    %68 = vector.multi_reduction <add>, %67, %cst_31 [1] : vector<8x128xf32> to vector<8xf32>
    %69 = vector.shape_cast %68 : vector<8xf32> to vector<8x1xf32>
    %cst_32 = arith.constant 1.280000e+02 : f32
    %70 = vector.broadcast %cst_32 : f32 to vector<8x1xf32>
    %71 = arith.divf %69, %70 : vector<8x1xf32>
    %72 = vector.broadcast %64 : vector<8x1xf32> to vector<8x128xf32>
    %73 = arith.subf %60, %72 : vector<8x128xf32>
    %cst_33 = arith.constant 9.99999974E-6 : f32
    %74 = vector.broadcast %cst_33 : f32 to vector<8x1xf32>
    %75 = arith.addf %71, %74 : vector<8x1xf32>
    %76 = math.rsqrt %75 : vector<8x1xf32>
    %77 = vector.broadcast %76 : vector<8x1xf32> to vector<8x128xf32>
    %78 = arith.mulf %73, %77 : vector<8x128xf32>
    %79 = vector.broadcast %21 : vector<1x128xf32> to vector<8x128xf32>
    %80 = arith.mulf %78, %79 : vector<8x128xf32>
    %81 = vector.broadcast %22 : vector<1x128xf32> to vector<8x128xf32>
    %82 = arith.addf %80, %81 : vector<8x128xf32>
    %c1 = arith.constant 1 : index
    %c0_34 = arith.constant 0 : index
    %c0_35 = arith.constant 0 : index
    %83 = vector.load %arg4[%c1, %c0_34, %c0_35] : memref<2x128x128xbf16, #tpu.memory_space<vmem>>, vector<1x128x128xbf16>
    %84 = vector.shape_cast %83 : vector<1x128x128xbf16> to vector<128x128xbf16>
    %c1_36 = arith.constant 1 : index
    %c0_37 = arith.constant 0 : index
    %c0_38 = arith.constant 0 : index
    %85 = vector.load %arg5[%c1_36, %c0_37, %c0_38] : memref<2x128x256xbf16, #tpu.memory_space<vmem>>, vector<1x128x256xbf16>
    %86 = vector.shape_cast %85 : vector<1x128x256xbf16> to vector<128x256xbf16>
    %c1_39 = arith.constant 1 : index
    %c0_40 = arith.constant 0 : index
    %c0_41 = arith.constant 0 : index
    %87 = vector.load %arg6[%c1_39, %c0_40, %c0_41] : memref<2x1x256xf32, #tpu.memory_space<vmem>>, vector<1x1x256xf32>
    %88 = vector.shape_cast %87 : vector<1x1x256xf32> to vector<1x256xf32>
    %c1_42 = arith.constant 1 : index
    %c0_43 = arith.constant 0 : index
    %c0_44 = arith.constant 0 : index
    %89 = vector.load %arg7[%c1_42, %c0_43, %c0_44] : memref<2x256x128xbf16, #tpu.memory_space<vmem>>, vector<1x256x128xbf16>
    %90 = vector.shape_cast %89 : vector<1x256x128xbf16> to vector<256x128xbf16>
    %c1_45 = arith.constant 1 : index
    %c0_46 = arith.constant 0 : index
    %c0_47 = arith.constant 0 : index
    %91 = vector.load %arg8[%c1_45, %c0_46, %c0_47] : memref<2x6x128xf32, #tpu.memory_space<vmem>>, vector<1x6x128xf32>
    %92 = vector.shape_cast %91 : vector<1x6x128xf32> to vector<6x128xf32>
    %93 = vector.extract_strided_slice %92 {offsets = [0, 0], sizes = [1, 128], strides = [1, 1]} : vector<6x128xf32> to vector<1x128xf32>
    %94 = vector.extract_strided_slice %92 {offsets = [1, 0], sizes = [1, 128], strides = [1, 1]} : vector<6x128xf32> to vector<1x128xf32>
    %95 = vector.extract_strided_slice %92 {offsets = [2, 0], sizes = [1, 128], strides = [1, 1]} : vector<6x128xf32> to vector<1x128xf32>
    %96 = vector.extract_strided_slice %92 {offsets = [3, 0], sizes = [1, 128], strides = [1, 1]} : vector<6x128xf32> to vector<1x128xf32>
    %97 = vector.extract_strided_slice %92 {offsets = [4, 0], sizes = [1, 128], strides = [1, 1]} : vector<6x128xf32> to vector<1x128xf32>
    %98 = vector.extract_strided_slice %92 {offsets = [5, 0], sizes = [1, 128], strides = [1, 1]} : vector<6x128xf32> to vector<1x128xf32>
    %99 = arith.truncf %82 : vector<8x128xf32> to vector<8x128xbf16>
    %cst_48 = arith.constant dense<0.000000e+00> : vector<8x128xf32>
    %100 = tpu.matmul %99, %84, %cst_48 {dimension_numbers = #tpu.dot_dimension_numbers<[1], [0], [0], [1], [0, 0, 1, 1], [], []>} : vector<8x128xbf16>, vector<128x128xbf16>, vector<8x128xf32> -> vector<8x128xf32>
    %101 = vector.broadcast %93 : vector<1x128xf32> to vector<8x128xf32>
    %102 = arith.addf %100, %101 : vector<8x128xf32>
    %103 = arith.addf %82, %102 : vector<8x128xf32>
    %cst_49 = arith.constant dense<0.000000e+00> : vector<8xf32>
    %104 = vector.multi_reduction <add>, %103, %cst_49 [1] : vector<8x128xf32> to vector<8xf32>
    %105 = vector.shape_cast %104 : vector<8xf32> to vector<8x1xf32>
    %cst_50 = arith.constant 1.280000e+02 : f32
    %106 = vector.broadcast %cst_50 : f32 to vector<8x1xf32>
    %107 = arith.divf %105, %106 : vector<8x1xf32>
    %108 = vector.broadcast %107 : vector<8x1xf32> to vector<8x128xf32>
    %109 = arith.subf %103, %108 : vector<8x128xf32>
    %110 = arith.mulf %109, %109 : vector<8x128xf32>
    %cst_51 = arith.constant dense<0.000000e+00> : vector<8xf32>
    %111 = vector.multi_reduction <add>, %110, %cst_51 [1] : vector<8x128xf32> to vector<8xf32>
    %112 = vector.shape_cast %111 : vector<8xf32> to vector<8x1xf32>
    %cst_52 = arith.constant 1.280000e+02 : f32
    %113 = vector.broadcast %cst_52 : f32 to vector<8x1xf32>
    %114 = arith.divf %112, %113 : vector<8x1xf32>
    %115 = vector.broadcast %107 : vector<8x1xf32> to vector<8x128xf32>
    %116 = arith.subf %103, %115 : vector<8x128xf32>
    %cst_53 = arith.constant 9.99999974E-6 : f32
    %117 = vector.broadcast %cst_53 : f32 to vector<8x1xf32>
    %118 = arith.addf %114, %117 : vector<8x1xf32>
    %119 = math.rsqrt %118 : vector<8x1xf32>
    %120 = vector.broadcast %119 : vector<8x1xf32> to vector<8x128xf32>
    %121 = arith.mulf %116, %120 : vector<8x128xf32>
    %122 = vector.broadcast %94 : vector<1x128xf32> to vector<8x128xf32>
    %123 = arith.mulf %121, %122 : vector<8x128xf32>
    %124 = vector.broadcast %95 : vector<1x128xf32> to vector<8x128xf32>
    %125 = arith.addf %123, %124 : vector<8x128xf32>
    %126 = arith.truncf %125 : vector<8x128xf32> to vector<8x128xbf16>
    %cst_54 = arith.constant dense<0.000000e+00> : vector<8x256xf32>
    %127 = tpu.matmul %126, %86, %cst_54 {dimension_numbers = #tpu.dot_dimension_numbers<[1], [0], [0], [1], [0, 0, 1, 1], [], []>} : vector<8x128xbf16>, vector<128x256xbf16>, vector<8x256xf32> -> vector<8x256xf32>
    %128 = vector.broadcast %88 : vector<1x256xf32> to vector<8x256xf32>
    %129 = arith.addf %127, %128 : vector<8x256xf32>
    %cst_55 = arith.constant 0.000000e+00 : f32
    %130 = vector.broadcast %cst_55 : f32 to vector<8x256xf32>
    %131 = arith.maximumf %129, %130 : vector<8x256xf32>
    %132 = arith.truncf %131 : vector<8x256xf32> to vector<8x256xbf16>
    %cst_56 = arith.constant dense<0.000000e+00> : vector<8x128xf32>
    %133 = tpu.matmul %132, %90, %cst_56 {dimension_numbers = #tpu.dot_dimension_numbers<[1], [0], [0], [1], [0, 0, 1, 1], [], []>} : vector<8x256xbf16>, vector<256x128xbf16>, vector<8x128xf32> -> vector<8x128xf32>
    %134 = vector.broadcast %96 : vector<1x128xf32> to vector<8x128xf32>
    %135 = arith.addf %133, %134 : vector<8x128xf32>
    %136 = arith.addf %125, %135 : vector<8x128xf32>
    %cst_57 = arith.constant dense<0.000000e+00> : vector<8xf32>
    %137 = vector.multi_reduction <add>, %136, %cst_57 [1] : vector<8x128xf32> to vector<8xf32>
    %138 = vector.shape_cast %137 : vector<8xf32> to vector<8x1xf32>
    %cst_58 = arith.constant 1.280000e+02 : f32
    %139 = vector.broadcast %cst_58 : f32 to vector<8x1xf32>
    %140 = arith.divf %138, %139 : vector<8x1xf32>
    %141 = vector.broadcast %140 : vector<8x1xf32> to vector<8x128xf32>
    %142 = arith.subf %136, %141 : vector<8x128xf32>
    %143 = arith.mulf %142, %142 : vector<8x128xf32>
    %cst_59 = arith.constant dense<0.000000e+00> : vector<8xf32>
    %144 = vector.multi_reduction <add>, %143, %cst_59 [1] : vector<8x128xf32> to vector<8xf32>
    %145 = vector.shape_cast %144 : vector<8xf32> to vector<8x1xf32>
    %cst_60 = arith.constant 1.280000e+02 : f32
    %146 = vector.broadcast %cst_60 : f32 to vector<8x1xf32>
    %147 = arith.divf %145, %146 : vector<8x1xf32>
    %148 = vector.broadcast %140 : vector<8x1xf32> to vector<8x128xf32>
    %149 = arith.subf %136, %148 : vector<8x128xf32>
    %cst_61 = arith.constant 9.99999974E-6 : f32
    %150 = vector.broadcast %cst_61 : f32 to vector<8x1xf32>
    %151 = arith.addf %147, %150 : vector<8x1xf32>
    %152 = math.rsqrt %151 : vector<8x1xf32>
    %153 = vector.broadcast %152 : vector<8x1xf32> to vector<8x128xf32>
    %154 = arith.mulf %149, %153 : vector<8x128xf32>
    %155 = vector.broadcast %97 : vector<1x128xf32> to vector<8x128xf32>
    %156 = arith.mulf %154, %155 : vector<8x128xf32>
    %157 = vector.broadcast %98 : vector<1x128xf32> to vector<8x128xf32>
    %158 = arith.addf %156, %157 : vector<8x128xf32>
    %c0_62 = arith.constant 0 : index
    %c0_63 = arith.constant 0 : index
    %159 = vector.load %arg9[%c0_62, %c0_63] : memref<8x128xf32, #tpu.memory_space<vmem>>, vector<8x128xf32>
    tpu.vector_store %arg9[%c0_62, %c0_63], %158 {strides = array<i32>} : memref<8x128xf32, #tpu.memory_space<vmem>>, vector<8x128xf32>,
    return
  }
  func.func @transform_0(%arg0: i32) -> (i32, i32) {
    %c0_i32 = arith.constant 0 : i32
    %c0_i32_0 = arith.constant 0 : i32
    return %arg0, %c0_i32 : i32, i32
  }
  func.func @transform_1(%arg0: i32) -> (i32, i32) {
    %c0_i32 = arith.constant 0 : i32
    %c0_i32_0 = arith.constant 0 : i32
    %c0_i32_1 = arith.constant 0 : i32
    return %c0_i32, %c0_i32_0 : i32, i32
  }
  func.func @transform_2(%arg0: i32) -> (i32, i32) {
    %c0_i32 = arith.constant 0 : i32
    %c0_i32_0 = arith.constant 0 : i32
    %c0_i32_1 = arith.constant 0 : i32
    return %c0_i32, %c0_i32_0 : i32, i32
  }
  func.func @transform_3(%arg0: i32) -> (i32, i32, i32) {
    %c0_i32 = arith.constant 0 : i32
    %c0_i32_0 = arith.constant 0 : i32
    %c0_i32_1 = arith.constant 0 : i32
    %c0_i32_2 = arith.constant 0 : i32
    return %c0_i32, %c0_i32_0, %c0_i32_1 : i32, i32, i32
  }
  func.func @transform_4(%arg0: i32) -> (i32, i32, i32) {
    %c0_i32 = arith.constant 0 : i32
    %c0_i32_0 = arith.constant 0 : i32
    %c0_i32_1 = arith.constant 0 : i32
    %c0_i32_2 = arith.constant 0 : i32
    return %c0_i32, %c0_i32_0, %c0_i32_1 : i32, i32, i32
  }
  func.func @transform_5(%arg0: i32) -> (i32, i32, i32) {
    %c0_i32 = arith.constant 0 : i32
    %c0_i32_0 = arith.constant 0 : i32
    %c0_i32_1 = arith.constant 0 : i32
    %c0_i32_2 = arith.constant 0 : i32
    return %c0_i32, %c0_i32_0, %c0_i32_1 : i32, i32, i32
  }
  func.func @transform_6(%arg0: i32) -> (i32, i32, i32) {
    %c0_i32 = arith.constant 0 : i32
    %c0_i32_0 = arith.constant 0 : i32
    %c0_i32_1 = arith.constant 0 : i32
    %c0_i32_2 = arith.constant 0 : i32
    return %c0_i32, %c0_i32_0, %c0_i32_1 : i32, i32, i32
  }
  func.func @transform_7(%arg0: i32) -> (i32, i32, i32) {
    %c0_i32 = arith.constant 0 : i32
    %c0_i32_0 = arith.constant 0 : i32
    %c0_i32_1 = arith.constant 0 : i32
    %c0_i32_2 = arith.constant 0 : i32
    return %c0_i32, %c0_i32_0, %c0_i32_1 : i32, i32, i32
  }
  func.func @transform_8(%arg0: i32) -> (i32, i32) {
    %c0_i32 = arith.constant 0 : i32
    %c0_i32_0 = arith.constant 0 : i32
    return %arg0, %c0_i32 : i32, i32
  }
}

module attributes {stable_mosaic.version = 11 : i64} {
  func.func @_tfe_kernel_resident(%arg0: i32, %arg1: memref<8x128xf32, #tpu.memory_space<vmem>>, %arg2: memref<128x128xbf16, #tpu.memory_space<vmem>>, %arg3: memref<1x128xf32, #tpu.memory_space<vmem>>, %arg4: memref<2x128x128xbf16, #tpu.memory_space<vmem>>, %arg5: memref<2x128x256xbf16, #tpu.memory_space<vmem>>, %arg6: memref<2x1x256xf32, #tpu.memory_space<vmem>>, %arg7: memref<2x256x128xbf16, #tpu.memory_space<vmem>>, %arg8: memref<2x6x128xf32, #tpu.memory_space<vmem>>, %arg9: memref<8x128xf32, #tpu.memory_space<vmem>>) attributes {dimension_semantics = [#tpu.dimension_semantics<parallel>], iteration_bounds = array<i64: 2>, scalar_prefetch = 0 : i64, scratch_operands = 0 : i64, tpu.core_type = #tpu.core_type<tc>, window_params = [{transform_indices = @transform_0, window_bounds = array<i64: 8, 128>}, {pipeline_mode = #tpu.pipeline_mode<synchronous>, transform_indices = @transform_1, window_bounds = array<i64: 128, 128>}, {pipeline_mode = #tpu.pipeline_mode<synchronous>, transform_indices = @transform_2, window_bounds = array<i64: 1, 128>}, {pipeline_mode = #tpu.pipeline_mode<synchronous>, transform_indices = @transform_3, window_bounds = array<i64: 2, 128, 128>}, {pipeline_mode = #tpu.pipeline_mode<synchronous>, transform_indices = @transform_4, window_bounds = array<i64: 2, 128, 256>}, {pipeline_mode = #tpu.pipeline_mode<synchronous>, transform_indices = @transform_5, window_bounds = array<i64: 2, 1, 256>}, {pipeline_mode = #tpu.pipeline_mode<synchronous>, transform_indices = @transform_6, window_bounds = array<i64: 2, 256, 128>}, {pipeline_mode = #tpu.pipeline_mode<synchronous>, transform_indices = @transform_7, window_bounds = array<i64: 2, 6, 128>}, {transform_indices = @transform_8, window_bounds = array<i64: 8, 128>}]} {
    %c0 = arith.constant 0 : index
    %c0_0 = arith.constant 0 : index
    %0 = vector.load %arg1[%c0, %c0_0] : memref<8x128xf32, #tpu.memory_space<vmem>>, vector<8x128xf32>
    %1 = arith.truncf %0 : vector<8x128xf32> to vector<8x128xbf16>
    %c0_1 = arith.constant 0 : index
    %c0_2 = arith.constant 0 : index
    %2 = vector.load %arg2[%c0_1, %c0_2] : memref<128x128xbf16, #tpu.memory_space<vmem>>, vector<128x128xbf16>
    %cst = arith.constant dense<0.000000e+00> : vector<8x128xf32>
    %3 = tpu.matmul %1, %2, %cst {dimension_numbers = #tpu.dot_dimension_numbers<[1], [0], [0], [1], [0, 0, 1, 1], [], []>} : vector<8x128xbf16>, vector<128x128xbf16>, vector<8x128xf32> -> vector<8x128xf32>
    %c0_3 = arith.constant 0 : index
    %c0_4 = arith.constant 0 : index
    %4 = vector.load %arg3[%c0_3, %c0_4] : memref<1x128xf32, #tpu.memory_space<vmem>>, vector<1x128xf32>
    %5 = vector.broadcast %4 : vector<1x128xf32> to vector<8x128xf32>
    %6 = arith.addf %3, %5 : vector<8x128xf32>
    %c0_5 = arith.constant 0 : index
    %c0_6 = arith.constant 0 : index
    %c0_7 = arith.constant 0 : index
    %7 = vector.load %arg4[%c0_5, %c0_6, %c0_7] : memref<2x128x128xbf16, #tpu.memory_space<vmem>>, vector<1x128x128xbf16>
    %8 = vector.shape_cast %7 : vector<1x128x128xbf16> to vector<128x128xbf16>
    %c0_8 = arith.constant 0 : index
    %c0_9 = arith.constant 0 : index
    %c0_10 = arith.constant 0 : index
    %9 = vector.load %arg5[%c0_8, %c0_9, %c0_10] : memref<2x128x256xbf16, #tpu.memory_space<vmem>>, vector<1x128x256xbf16>
    %10 = vector.shape_cast %9 : vector<1x128x256xbf16> to vector<128x256xbf16>
    %c0_11 = arith.constant 0 : index
    %c0_12 = arith.constant 0 : index
    %c0_13 = arith.constant 0 : index
    %11 = vector.load %arg6[%c0_11, %c0_12, %c0_13] : memref<2x1x256xf32, #tpu.memory_space<vmem>>, vector<1x1x256xf32>
    %12 = vector.shape_cast %11 : vector<1x1x256xf32> to vector<1x256xf32>
    %c0_14 = arith.constant 0 : index
    %c0_15 = arith.constant 0 : index
    %c0_16 = arith.constant 0 : index
    %13 = vector.load %arg7[%c0_14, %c0_15, %c0_16] : memref<2x256x128xbf16, #tpu.memory_space<vmem>>, vector<1x256x128xbf16>
    %14 = vector.shape_cast %13 : vector<1x256x128xbf16> to vector<256x128xbf16>
    %c0_17 = arith.constant 0 : index
    %c0_18 = arith.constant 0 : index
    %c0_19 = arith.constant 0 : index
    %15 = vector.load %arg8[%c0_17, %c0_18, %c0_19] : memref<2x6x128xf32, #tpu.memory_space<vmem>>, vector<1x6x128xf32>
    %16 = vector.shape_cast %15 : vector<1x6x128xf32> to vector<6x128xf32>
    %17 = vector.extract_strided_slice %16 {offsets = [0, 0], sizes = [1, 128], strides = [1, 1]} : vector<6x128xf32> to vector<1x128xf32>
    %18 = vector.extract_strided_slice %16 {offsets = [1, 0], sizes = [1, 128], strides = [1, 1]} : vector<6x128xf32> to vector<1x128xf32>
    %19 = vector.extract_strided_slice %16 {offsets = [2, 0], sizes = [1, 128], strides = [1, 1]} : vector<6x128xf32> to vector<1x128xf32>
    %20 = vector.extract_strided_slice %16 {offsets = [3, 0], sizes = [1, 128], strides = [1, 1]} : vector<6x128xf32> to vector<1x128xf32>
    %21 = vector.extract_strided_slice %16 {offsets = [4, 0], sizes = [1, 128], strides = [1, 1]} : vector<6x128xf32> to vector<1x128xf32>
    %22 = vector.extract_strided_slice %16 {offsets = [5, 0], sizes = [1, 128], strides = [1, 1]} : vector<6x128xf32> to vector<1x128xf32>
    %23 = arith.truncf %6 : vector<8x128xf32> to vector<8x128xbf16>
    %cst_20 = arith.constant dense<0.000000e+00> : vector<8x128xf32>
    %24 = tpu.matmul %23, %8, %cst_20 {dimension_numbers = #tpu.dot_dimension_numbers<[1], [0], [0], [1], [0, 0, 1, 1], [], []>} : vector<8x128xbf16>, vector<128x128xbf16>, vector<8x128xf32> -> vector<8x128xf32>
    %25 = vector.broadcast %17 : vector<1x128xf32> to vector<8x128xf32>
    %26 = arith.addf %24, %25 : vector<8x128xf32>
    %27 = arith.addf %6, %26 : vector<8x128xf32>
    %cst_21 = arith.constant dense<0.000000e+00> : vector<8xf32>
    %28 = vector.multi_reduction <add>, %27, %cst_21 [1] : vector<8x128xf32> to vector<8xf32>
    %29 = vector.shape_cast %28 : vector<8xf32> to vector<8x1xf32>
    %cst_22 = arith.constant 1.280000e+02 : f32
    %30 = vector.broadcast %cst_22 : f32 to vector<8x1xf32>
    %31 = arith.divf %29, %30 : vector<8x1xf32>
    %32 = vector.broadcast %31 : vector<8x1xf32> to vector<8x128xf32>
    %33 = arith.subf %27, %32 : vector<8x128xf32>
    %34 = arith.mulf %33, %33 : vector<8x128xf32>
    %cst_23 = arith.constant dense<0.000000e+00> : vector<8xf32>
    %35 = vector.multi_reduction <add>, %34, %cst_23 [1] : vector<8x128xf32> to vector<8xf32>
    %36 = vector.shape_cast %35 : vector<8xf32> to vector<8x1xf32>
    %cst_24 = arith.constant 1.280000e+02 : f32
    %37 = vector.broadcast %cst_24 : f32 to vector<8x1xf32>
    %38 = arith.divf %36, %37 : vector<8x1xf32>
    %39 = vector.broadcast %31 : vector<8x1xf32> to vector<8x128xf32>
    %40 = arith.subf %27, %39 : vector<8x128xf32>
    %cst_25 = arith.constant 9.99999974E-6 : f32
    %41 = vector.broadcast %cst_25 : f32 to vector<8x1xf32>
    %42 = arith.addf %38, %41 : vector<8x1xf32>
    %43 = math.rsqrt %42 : vector<8x1xf32>
    %44 = vector.broadcast %43 : vector<8x1xf32> to vector<8x128xf32>
    %45 = arith.mulf %40, %44 : vector<8x128xf32>
    %46 = vector.broadcast %18 : vector<1x128xf32> to vector<8x128xf32>
    %47 = arith.mulf %45, %46 : vector<8x128xf32>
    %48 = vector.broadcast %19 : vector<1x128xf32> to vector<8x128xf32>
    %49 = arith.addf %47, %48 : vector<8x128xf32>
    %50 = arith.truncf %49 : vector<8x128xf32> to vector<8x128xbf16>
    %cst_26 = arith.constant dense<0.000000e+00> : vector<8x256xf32>
    %51 = tpu.matmul %50, %10, %cst_26 {dimension_numbers = #tpu.dot_dimension_numbers<[1], [0], [0], [1], [0, 0, 1, 1], [], []>} : vector<8x128xbf16>, vector<128x256xbf16>, vector<8x256xf32> -> vector<8x256xf32>
    %52 = vector.broadcast %12 : vector<1x256xf32> to vector<8x256xf32>
    %53 = arith.addf %51, %52 : vector<8x256xf32>
    %cst_27 = arith.constant 0.000000e+00 : f32
    %54 = vector.broadcast %cst_27 : f32 to vector<8x256xf32>
    %55 = arith.maximumf %53, %54 : vector<8x256xf32>
    %56 = arith.truncf %55 : vector<8x256xf32> to vector<8x256xbf16>
    %cst_28 = arith.constant dense<0.000000e+00> : vector<8x128xf32>
    %57 = tpu.matmul %56, %14, %cst_28 {dimension_numbers = #tpu.dot_dimension_numbers<[1], [0], [0], [1], [0, 0, 1, 1], [], []>} : vector<8x256xbf16>, vector<256x128xbf16>, vector<8x128xf32> -> vector<8x128xf32>
    %58 = vector.broadcast %20 : vector<1x128xf32> to vector<8x128xf32>
    %59 = arith.addf %57, %58 : vector<8x128xf32>
    %60 = arith.addf %49, %59 : vector<8x128xf32>
    %cst_29 = arith.constant dense<0.000000e+00> : vector<8xf32>
    %61 = vector.multi_reduction <add>, %60, %cst_29 [1] : vector<8x128xf32> to vector<8xf32>
    %62 = vector.shape_cast %61 : vector<8xf32> to vector<8x1xf32>
    %cst_30 = arith.constant 1.280000e+02 : f32
    %63 = vector.broadcast %cst_30 : f32 to vector<8x1xf32>
    %64 = arith.divf %62, %63 : vector<8x1xf32>
    %65 = vector.broadcast %64 : vector<8x1xf32> to vector<8x128xf32>
    %66 = arith.subf %60, %65 : vector<8x128xf32>
    %67 = arith.mulf %66, %66 : vector<8x128xf32>
    %cst_31 = arith.constant dense<0.000000e+00> : vector<8xf32>
    %68 = vector.multi_reduction <add>, %67, %cst_31 [1] : vector<8x128xf32> to vector<8xf32>
    %69 = vector.shape_cast %68 : vector<8xf32> to vector<8x1xf32>
    %cst_32 = arith.constant 1.280000e+02 : f32
    %70 = vector.broadcast %cst_32 : f32 to vector<8x1xf32>
    %71 = arith.divf %69, %70 : vector<8x1xf32>
    %72 = vector.broadcast %64 : vector<8x1xf32> to vector<8x128xf32>
    %73 = arith.subf %60, %72 : vector<8x128xf32>
    %cst_33 = arith.constant 9.99999974E-6 : f32
    %74 = vector.broadcast %cst_33 : f32 to vector<8x1xf32>
    %75 = arith.addf %71, %74 : vector<8x1xf32>
    %76 = math.rsqrt %75 : vector<8x1xf32>
    %77 = vector.broadcast %76 : vector<8x1xf32> to vector<8x128xf32>
    %78 = arith.mulf %73, %77 : vector<8x128xf32>
    %79 = vector.broadcast %21 : vector<1x128xf32> to vector<8x128xf32>
    %80 = arith.mulf %78, %79 : vector<8x128xf32>
    %81 = vector.broadcast %22 : vector<1x128xf32> to vector<8x128xf32>
    %82 = arith.addf %80, %81 : vector<8x128xf32>
    %c1 = arith.constant 1 : index
    %c0_34 = arith.constant 0 : index
    %c0_35 = arith.constant 0 : index
    %83 = vector.load %arg4[%c1, %c0_34, %c0_35] : memref<2x128x128xbf16, #tpu.memory_space<vmem>>, vector<1x128x128xbf16>
    %84 = vector.shape_cast %83 : vector<1x128x128xbf16> to vector<128x128xbf16>
    %c1_36 = arith.constant 1 : index
    %c0_37 = arith.constant 0 : index
    %c0_38 = arith.constant 0 : index
    %85 = vector.load %arg5[%c1_36, %c0_37, %c0_38] : memref<2x128x256xbf16, #tpu.memory_space<vmem>>, vector<1x128x256xbf16>
    %86 = vector.shape_cast %85 : vector<1x128x256xbf16> to vector<128x256xbf16>
    %c1_39 = arith.constant 1 : index
    %c0_40 = arith.constant 0 : index
    %c0_41 = arith.constant 0 : index
    %87 = vector.load %arg6[%c1_39, %c0_40, %c0_41] : memref<2x1x256xf32, #tpu.memory_space<vmem>>, vector<1x1x256xf32>
    %88 = vector.shape_cast %87 : vector<1x1x256xf32> to vector<1x256xf32>
    %c1_42 = arith.constant 1 : index
    %c0_43 = arith.constant 0 : index
    %c0_44 = arith.constant 0 : index
    %89 = vector.load %arg7[%c1_42, %c0_43, %c0_44] : memref<2x256x128xbf16, #tpu.memory_space<vmem>>, vector<1x256x128xbf16>
    %90 = vector.shape_cast %89 : vector<1x256x128xbf16> to vector<256x128xbf16>
    %c1_45 = arith.constant 1 : index
    %c0_46 = arith.constant 0 : index
    %c0_47 = arith.constant 0 : index
    %91 = vector.load %arg8[%c1_45, %c0_46, %c0_47] : memref<2x6x128xf32, #tpu.memory_space<vmem>>, vector<1x6x128xf32>
    %92 = vector.shape_cast %91 : vector<1x6x128xf32> to vector<6x128xf32>
    %93 = vector.extract_strided_slice %92 {offsets = [0, 0], sizes = [1, 128], strides = [1, 1]} : vector<6x128xf32> to vector<1x128xf32>
    %94 = vector.extract_strided_slice %92 {offsets = [1, 0], sizes = [1, 128], strides = [1, 1]} : vector<6x128xf32> to vector<1x128xf32>
    %95 = vector.extract_strided_slice %92 {offsets = [2, 0], sizes = [1, 128], strides = [1, 1]} : vector<6x128xf32> to vector<1x128xf32>
    %96 = vector.extract_strided_slice %92 {offsets = [3, 0], sizes = [1, 128], strides = [1, 1]} : vector<6x128xf32> to vector<1x128xf32>
    %97 = vector.extract_strided_slice %92 {offsets = [4, 0], sizes = [1, 128], strides = [1, 1]} : vector<6x128xf32> to vector<1x128xf32>
    %98 = vector.extract_strided_slice %92 {offsets = [5, 0], sizes = [1, 128], strides = [1, 1]} : vector<6x128xf32> to vector<1x128xf32>
    %99 = arith.truncf %82 : vector<8x128xf32> to vector<8x128xbf16>
    %cst_48 = arith.constant dense<0.000000e+00> : vector<8x128xf32>
    %100 = tpu.matmul %99, %84, %cst_48 {dimension_numbers = #tpu.dot_dimension_numbers<[1], [0], [0], [1], [0, 0, 1, 1], [], []>} : vector<8x128xbf16>, vector<128x128xbf16>, vector<8x128xf32> -> vector<8x128xf32>
    %101 = vector.broadcast %93 : vector<1x128xf32> to vector<8x128xf32>
    %102 = arith.addf %100, %101 : vector<8x128xf32>
    %103 = arith.addf %82, %102 : vector<8x128xf32>
    %cst_49 = arith.constant dense<0.000000e+00> : vector<8xf32>
    %104 = vector.multi_reduction <add>, %103, %cst_49 [1] : vector<8x128xf32> to vector<8xf32>
    %105 = vector.shape_cast %104 : vector<8xf32> to vector<8x1xf32>
    %cst_50 = arith.constant 1.280000e+02 : f32
    %106 = vector.broadcast %cst_50 : f32 to vector<8x1xf32>
    %107 = arith.divf %105, %106 : vector<8x1xf32>
    %108 = vector.broadcast %107 : vector<8x1xf32> to vector<8x128xf32>
    %109 = arith.subf %103, %108 : vector<8x128xf32>
    %110 = arith.mulf %109, %109 : vector<8x128xf32>
    %cst_51 = arith.constant dense<0.000000e+00> : vector<8xf32>
    %111 = vector.multi_reduction <add>, %110, %cst_51 [1] : vector<8x128xf32> to vector<8xf32>
    %112 = vector.shape_cast %111 : vector<8xf32> to vector<8x1xf32>
    %cst_52 = arith.constant 1.280000e+02 : f32
    %113 = vector.broadcast %cst_52 : f32 to vector<8x1xf32>
    %114 = arith.divf %112, %113 : vector<8x1xf32>
    %115 = vector.broadcast %107 : vector<8x1xf32> to vector<8x128xf32>
    %116 = arith.subf %103, %115 : vector<8x128xf32>
    %cst_53 = arith.constant 9.99999974E-6 : f32
    %117 = vector.broadcast %cst_53 : f32 to vector<8x1xf32>
    %118 = arith.addf %114, %117 : vector<8x1xf32>
    %119 = math.rsqrt %118 : vector<8x1xf32>
    %120 = vector.broadcast %119 : vector<8x1xf32> to vector<8x128xf32>
    %121 = arith.mulf %116, %120 : vector<8x128xf32>
    %122 = vector.broadcast %94 : vector<1x128xf32> to vector<8x128xf32>
    %123 = arith.mulf %121, %122 : vector<8x128xf32>
    %124 = vector.broadcast %95 : vector<1x128xf32> to vector<8x128xf32>
    %125 = arith.addf %123, %124 : vector<8x128xf32>
    %126 = arith.truncf %125 : vector<8x128xf32> to vector<8x128xbf16>
    %cst_54 = arith.constant dense<0.000000e+00> : vector<8x256xf32>
    %127 = tpu.matmul %126, %86, %cst_54 {dimension_numbers = #tpu.dot_dimension_numbers<[1], [0], [0], [1], [0, 0, 1, 1], [], []>} : vector<8x128xbf16>, vector<128x256xbf16>, vector<8x256xf32> -> vector<8x256xf32>
    %128 = vector.broadcast %88 : vector<1x256xf32> to vector<8x256xf32>
    %129 = arith.addf %127, %128 : vector<8x256xf32>
    %cst_55 = arith.constant 0.000000e+00 : f32
    %130 = vector.broadcast %cst_55 : f32 to vector<8x256xf32>
    %131 = arith.maximumf %129, %130 : vector<8x256xf32>
    %132 = arith.truncf %131 : vector<8x256xf32> to vector<8x256xbf16>
    %cst_56 = arith.constant dense<0.000000e+00> : vector<8x128xf32>
    %133 = tpu.matmul %132, %90, %cst_56 {dimension_numbers = #tpu.dot_dimension_numbers<[1], [0], [0], [1], [0, 0, 1, 1], [], []>} : vector<8x256xbf16>, vector<256x128xbf16>, vector<8x128xf32> -> vector<8x128xf32>
    %134 = vector.broadcast %96 : vector<1x128xf32> to vector<8x128xf32>
    %135 = arith.addf %133, %134 : vector<8x128xf32>
    %136 = arith.addf %125, %135 : vector<8x128xf32>
    %cst_57 = arith.constant dense<0.000000e+00> : vector<8xf32>
    %137 = vector.multi_reduction <add>, %136, %cst_57 [1] : vector<8x128xf32> to vector<8xf32>
    %138 = vector.shape_cast %137 : vector<8xf32> to vector<8x1xf32>
    %cst_58 = arith.constant 1.280000e+02 : f32
    %139 = vector.broadcast %cst_58 : f32 to vector<8x1xf32>
    %140 = arith.divf %138, %139 : vector<8x1xf32>
    %141 = vector.broadcast %140 : vector<8x1xf32> to vector<8x128xf32>
    %142 = arith.subf %136, %141 : vector<8x128xf32>
    %143 = arith.mulf %142, %142 : vector<8x128xf32>
    %cst_59 = arith.constant dense<0.000000e+00> : vector<8xf32>
    %144 = vector.multi_reduction <add>, %143, %cst_59 [1] : vector<8x128xf32> to vector<8xf32>
    %145 = vector.shape_cast %144 : vector<8xf32> to vector<8x1xf32>
    %cst_60 = arith.constant 1.280000e+02 : f32
    %146 = vector.broadcast %cst_60 : f32 to vector<8x1xf32>
    %147 = arith.divf %145, %146 : vector<8x1xf32>
    %148 = vector.broadcast %140 : vector<8x1xf32> to vector<8x128xf32>
    %149 = arith.subf %136, %148 : vector<8x128xf32>
    %cst_61 = arith.constant 9.99999974E-6 : f32
    %150 = vector.broadcast %cst_61 : f32 to vector<8x1xf32>
    %151 = arith.addf %147, %150 : vector<8x1xf32>
    %152 = math.rsqrt %151 : vector<8x1xf32>
    %153 = vector.broadcast %152 : vector<8x1xf32> to vector<8x128xf32>
    %154 = arith.mulf %149, %153 : vector<8x128xf32>
    %155 = vector.broadcast %97 : vector<1x128xf32> to vector<8x128xf32>
    %156 = arith.mulf %154, %155 : vector<8x128xf32>
    %157 = vector.broadcast %98 : vector<1x128xf32> to vector<8x128xf32>
    %158 = arith.addf %156, %157 : vector<8x128xf32>
    %c0_62 = arith.constant 0 : index
    %c0_63 = arith.constant 0 : index
    %159 = vector.load %arg9[%c0_62, %c0_63] : memref<8x128xf32, #tpu.memory_space<vmem>>, vector<8x128xf32>
    tpu.vector_store %arg9[%c0_62, %c0_63], %158 {strides = array<i32>} : memref<8x128xf32, #tpu.memory_space<vmem>>, vector<8x128xf32>,
    return
  }
  func.func @transform_0(%arg0: i32) -> (i32, i32) {
    %c0_i32 = arith.constant 0 : i32
    %c0_i32_0 = arith.constant 0 : i32
    return %arg0, %c0_i32 : i32, i32
  }
  func.func @transform_1(%arg0: i32) -> (i32, i32) {
    %c0_i32 = arith.constant 0 : i32
    %c0_i32_0 = arith.constant 0 : i32
    %c0_i32_1 = arith.constant 0 : i32
    return %c0_i32, %c0_i32_0 : i32, i32
  }
  func.func @transform_2(%arg0: i32) -> (i32, i32) {
    %c0_i32 = arith.constant 0 : i32
    %c0_i32_0 = arith.constant 0 : i32
    %c0_i32_1 = arith.constant 0 : i32
    return %c0_i32, %c0_i32_0 : i32, i32
  }
  func.func @transform_3(%arg0: i32) -> (i32, i32, i32) {
    %c0_i32 = arith.constant 0 : i32
    %c0_i32_0 = arith.constant 0 : i32
    %c0_i32_1 = arith.constant 0 : i32
    %c0_i32_2 = arith.constant 0 : i32
    return %c0_i32, %c0_i32_0, %c0_i32_1 : i32, i32, i32
  }
  func.func @transform_4(%arg0: i32) -> (i32, i32, i32) {
    %c0_i32 = arith.constant 0 : i32
    %c0_i32_0 = arith.constant 0 : i32
    %c0_i32_1 = arith.constant 0 : i32
    %c0_i32_2 = arith.constant 0 : i32
    return %c0_i32, %c0_i32_0, %c0_i32_1 : i32, i32, i32
  }
  func.func @transform_5(%arg0: i32) -> (i32, i32, i32) {
    %c0_i32 = arith.constant 0 : i32
    %c0_i32_0 = arith.constant 0 : i32
    %c0_i32_1 = arith.constant 0 : i32
    %c0_i32_2 = arith.constant 0 : i32
    return %c0_i32, %c0_i32_0, %c0_i32_1 : i32, i32, i32
  }
  func.func @transform_6(%arg0: i32) -> (i32, i32, i32) {
    %c0_i32 = arith.constant 0 : i32
    %c0_i32_0 = arith.constant 0 : i32
    %c0_i32_1 = arith.constant 0 : i32
    %c0_i32_2 = arith.constant 0 : i32
    return %c0_i32, %c0_i32_0, %c0_i32_1 : i32, i32, i32
  }
  func.func @transform_7(%arg0: i32) -> (i32, i32, i32) {
    %c0_i32 = arith.constant 0 : i32
    %c0_i32_0 = arith.constant 0 : i32
    %c0_i32_1 = arith.constant 0 : i32
    %c0_i32_2 = arith.constant 0 : i32
    return %c0_i32, %c0_i32_0, %c0_i32_1 : i32, i32, i32
  }
  func.func @transform_8(%arg0: i32) -> (i32, i32) {
    %c0_i32 = arith.constant 0 : i32
    %c0_i32_0 = arith.constant 0 : i32
    return %arg0, %c0_i32 : i32, i32
  }
}

</mosaic_0001>

<llo_original>
// kernel: tpu_custom_call.1
$region0: #{tpu_custom_call.1}
  #allocation0 [shape = 'u32[]', space=smem, size = 0x4, offset = 0x4, fixed_abs, tag = 'smem constant byte address 0x4 - core index']
  #allocation1 [shape = 'u32[144,128]{1,0:T(1,128)}', space=vmem, size = 0x12000, scoped, tag = 'internal scratch']
  %s0 = inlined_call_operand.vmem [shape: f32[16,128], index: 0, kind: input, shape index: {}]
  %s1 = inlined_call_operand.hbm [shape: bf16[128,128], index: 1, kind: input, shape index: {}]
  %s2 = inlined_call_operand.vmem [shape: f32[1,128], index: 2, kind: input, shape index: {}]
  %s3 = inlined_call_operand.hbm [shape: bf16[2,128,128], index: 3, kind: input, shape index: {}]
  %s4 = inlined_call_operand.hbm [shape: bf16[2,128,256], index: 4, kind: input, shape index: {}]
  %s5 = inlined_call_operand.vmem [shape: f32[2,1,256], index: 5, kind: input, shape index: {}]
  %s6 = inlined_call_operand.hbm [shape: bf16[2,256,128], index: 6, kind: input, shape index: {}]
  %s7 = inlined_call_operand.vmem [shape: f32[2,6,128], index: 7, kind: input, shape index: {}]
  %s8 = inlined_call_operand.hbm [shape: f32[16,128], index: 8, kind: output, shape index: {}]
  %s9 = sld [smem:[#allocation0]]
  $region81: #{tpu_custom_call.1} parent=0
    _
  %s11 = ssub.s32 1, %s9
  %s12 = scalar_select 0, %s11, %s9
  $region1: #{tpu_custom_call.1} parent=0
    #allocation2 [shape = 'u8[32768]{0}', space=vmem, size = 0x8000, scoped, tag = 'input window, operand 1, single buffered']
    #allocation3 [shape = 's32[2]{0}', space=sflag, size = 0x8, scoped, tag = 'scoped memory for tpu_custom_call.1']
    #allocation4 [shape = 's32[2]{0}', space=sflag, size = 0x8, scoped, tag = 'scoped memory for tpu_custom_call.1']
    #allocation5 [shape = 'u8[65536]{0}', space=vmem, size = 0x10000, scoped, tag = 'input window, operand 3, single buffered']
    #allocation6 [shape = 's32[1]{0}', space=sflag, size = 0x4, scoped, tag = 'scoped memory for tpu_custom_call.1']
    #allocation7 [shape = 'u8[131072]{0}', space=vmem, size = 0x20000, scoped, tag = 'input window, operand 4, single buffered']
    #allocation8 [shape = 'u8[131072]{0}', space=vmem, size = 0x20000, scoped, tag = 'input window, operand 6, single buffered']
    #allocation9 [shape = 's32[1]{0}', space=sflag, size = 0x4, scoped, tag = 'scoped memory for tpu_custom_call.1']
    #allocation10 [shape = 'u8[8192]{0}', space=vmem, size = 0x2000, scoped, tag = 'output window, operand 0']
    %13 = vsyncpa [#allocation3], 0
    %14 = vsyncpa [#allocation6], 0
    %15 = vsyncpa [#allocation9], 0
    %16 = vsyncpa [#allocation4], 0
    %s17 = scalar_lea.sflag [#allocation4], 1
    %18 = vsyncpa %s17, 0
    loop: start=0, step=1, limit=4
    $region2: #{tpu_custom_call.1} parent=1 // loop_pre_header
      _
    $region3: #{tpu_custom_call.1} parent=1 // loop_header
      %s20 = sphi 0, %s24
      %p21 = scmp.ge.s32.totalorder %s20, 4
      %s30 = sphi 0, %s32
      %s33 = sphi 0, %s30
      %s34 = sphi 0, %s33
      %s50 = sphi 0, %s34
      %s54 = sphi 0, %s54
      %s56 = sphi 0, %s54
      %s57 = sphi 0, %s56
      %s71 = sphi 0, %s57
      %s75 = sphi 0, %s75
      %s77 = sphi 0, %s75
      %s78 = sphi 0, %s77
      %s92 = sphi 0, %s78
      %s96 = sphi 0, %s96
      %s98 = sphi 0, %s96
      %s99 = sphi 0, %s98
      %s113 = sphi 0, %s99
      %s117 = sphi 0, %s117
      %s119 = sphi 0, %s117
      %s120 = sphi 0, %s119
      %s134 = sphi 0, %s120
      %s138 = sphi 0, %s138
      %s140 = sphi 0, %s138
      %s141 = sphi 0, %s140
      %s155 = sphi 0, %s141
      %s159 = sphi 0, %s159
      %s161 = sphi 0, %s159
      %s162 = sphi 0, %s161
      %s176 = sphi 0, %s162
      %s180 = sphi 0, %s180
      %s182 = sphi 0, %s180
      %s183 = sphi 0, %s182
      %s197 = sphi 0, %s183
      %s203 = sphi 0, %s205
      %s206 = sphi 0, %s203
      %s207 = sphi 0, %s206
      %s223 = sphi 0, %s207
    $region4: #{tpu_custom_call.1} parent=1 // loop_header_branch
      %23 = sbr.rel (%p21) target = $region8
    $region5: #{tpu_custom_call.1} parent=1 // loop_body
      %s25 = ssub.s32 %s20, 1
      %s26 = ssub.s32 %s20, 2
      %s27 = sadd.s32 %s20, 1
      %s28 = ssub.s32 %s20, %s27
      %p29 = scmp.eq.s32.totalorder %s28, 0
      %s31 = sadd.s32 %s30, 1
      %s32 = scalar_select %p29, %s30, %s31
      %p35 = pneg %p29
      %p36 = scmp.eq.s32.totalorder %s20, 1
      %p37 = por %p35, %p36
      %p38 = scmp.ne.s32.totalorder %s30, %s33
      %p39 = scmp.eq.s32.totalorder %s20, 0
      %p40 = por %p38, %p39
      %p41 = scmp.ne.s32.totalorder %s30, %s33
      %p42 = scmp.eq.s32.totalorder %s25, 1
      %p43 = por %p41, %p42
      %p44 = scmp.ne.s32.totalorder %s33, %s34
      %p45 = scmp.eq.s32.totalorder %s25, 0
      %p46 = por %p44, %p45
      %p47 = scmp.ne.s32.totalorder %s33, %s34
      %p48 = scmp.eq.s32.totalorder %s26, 1
      %p49 = por %p47, %p48
      %p51 = scmp.ne.s32.totalorder %s34, %s50
      %p52 = scmp.eq.s32.totalorder %s26, 0
      %p53 = por %p51, %p52
      %s55 = sadd.s32 %s54, 1
      %p58 = scmp.eq.s32.totalorder %s20, 1
      %p59 = scmp.ne.s32.totalorder %s54, %s56
      %p60 = scmp.eq.s32.totalorder %s20, 0
      %p61 = por %p59, %p60
      %p62 = scmp.ne.s32.totalorder %s54, %s56
      %p63 = scmp.eq.s32.totalorder %s25, 1
      %p64 = por %p62, %p63
      %p65 = scmp.ne.s32.totalorder %s56, %s57
      %p66 = scmp.eq.s32.totalorder %s25, 0
      %p67 = por %p65, %p66
      %p68 = scmp.ne.s32.totalorder %s56, %s57
      %p69 = scmp.eq.s32.totalorder %s26, 1
      %p70 = por %p68, %p69
      %p72 = scmp.ne.s32.totalorder %s57, %s71
      %p73 = scmp.eq.s32.totalorder %s26, 0
      %p74 = por %p72, %p73
      %s76 = sadd.s32 %s75, 1
      %p79 = scmp.eq.s32.totalorder %s20, 1
      %p80 = scmp.ne.s32.totalorder %s75, %s77
      %p81 = scmp.eq.s32.totalorder %s20, 0
      %p82 = por %p80, %p81
      %p83 = scmp.ne.s32.totalorder %s75, %s77
      %p84 = scmp.eq.s32.totalorder %s25, 1
      %p85 = por %p83, %p84
      %p86 = scmp.ne.s32.totalorder %s77, %s78
      %p87 = scmp.eq.s32.totalorder %s25, 0
      %p88 = por %p86, %p87
      %p89 = scmp.ne.s32.totalorder %s77, %s78
      %p90 = scmp.eq.s32.totalorder %s26, 1
      %p91 = por %p89, %p90
      %p93 = scmp.ne.s32.totalorder %s78, %s92
      %p94 = scmp.eq.s32.totalorder %s26, 0
      %p95 = por %p93, %p94
      %s97 = sadd.s32 %s96, 1
      %p100 = scmp.eq.s32.totalorder %s20, 1
      %p101 = scmp.ne.s32.totalorder %s96, %s98
      %p102 = scmp.eq.s32.totalorder %s20, 0
      %p103 = por %p101, %p102
      %p104 = scmp.ne.s32.totalorder %s96, %s98
      %p105 = scmp.eq.s32.totalorder %s25, 1
      %p106 = por %p104, %p105
      %p107 = scmp.ne.s32.totalorder %s98, %s99
      %p108 = scmp.eq.s32.totalorder %s25, 0
      %p109 = por %p107, %p108
      %p110 = scmp.ne.s32.totalorder %s98, %s99
      %p111 = scmp.eq.s32.totalorder %s26, 1
      %p112 = por %p110, %p111
      %p114 = scmp.ne.s32.totalorder %s99, %s113
      %p115 = scmp.eq.s32.totalorder %s26, 0
      %p116 = por %p114, %p115
      %s118 = sadd.s32 %s117, 1
      %p121 = scmp.eq.s32.totalorder %s20, 1
      %p122 = scmp.ne.s32.totalorder %s117, %s119
      %p123 = scmp.eq.s32.totalorder %s20, 0
      %p124 = por %p122, %p123
      %p125 = scmp.ne.s32.totalorder %s117, %s119
      %p126 = scmp.eq.s32.totalorder %s25, 1
      %p127 = por %p125, %p126
      %p128 = scmp.ne.s32.totalorder %s119, %s120
      %p129 = scmp.eq.s32.totalorder %s25, 0
      %p130 = por %p128, %p129
      %p131 = scmp.ne.s32.totalorder %s119, %s120
      %p132 = scmp.eq.s32.totalorder %s26, 1
      %p133 = por %p131, %p132
      %p135 = scmp.ne.s32.totalorder %s120, %s134
      %p136 = scmp.eq.s32.totalorder %s26, 0
      %p137 = por %p135, %p136
      %s139 = sadd.s32 %s138, 1
      %p142 = scmp.eq.s32.totalorder %s20, 1
      %p143 = scmp.ne.s32.totalorder %s138, %s140
      %p144 = scmp.eq.s32.totalorder %s20, 0
      %p145 = por %p143, %p144
      %p146 = scmp.ne.s32.totalorder %s138, %s140
      %p147 = scmp.eq.s32.totalorder %s25, 1
      %p148 = por %p146, %p147
      %p149 = scmp.ne.s32.totalorder %s140, %s141
      %p150 = scmp.eq.s32.totalorder %s25, 0
      %p151 = por %p149, %p150
      %p152 = scmp.ne.s32.totalorder %s140, %s141
      %p153 = scmp.eq.s32.totalorder %s26, 1
      %p154 = por %p152, %p153
      %p156 = scmp.ne.s32.totalorder %s141, %s155
      %p157 = scmp.eq.s32.totalorder %s26, 0
      %p158 = por %p156, %p157
      %s160 = sadd.s32 %s159, 1
      %p163 = scmp.eq.s32.totalorder %s20, 1
      %p164 = scmp.ne.s32.totalorder %s159, %s161
      %p165 = scmp.eq.s32.totalorder %s20, 0
      %p166 = por %p164, %p165
      %p167 = scmp.ne.s32.totalorder %s159, %s161
      %p168 = scmp.eq.s32.totalorder %s25, 1
      %p169 = por %p167, %p168
      %p170 = scmp.ne.s32.totalorder %s161, %s162
      %p171 = scmp.eq.s32.totalorder %s25, 0
      %p172 = por %p170, %p171
      %p173 = scmp.ne.s32.totalorder %s161, %s162
      %p174 = scmp.eq.s32.totalorder %s26, 1
      %p175 = por %p173, %p174
      %p177 = scmp.ne.s32.totalorder %s162, %s176
      %p178 = scmp.eq.s32.totalorder %s26, 0
      %p179 = por %p177, %p178
      %s181 = sadd.s32 %s180, 1
      %p184 = scmp.eq.s32.totalorder %s20, 1
      %p185 = scmp.ne.s32.totalorder %s180, %s182
      %p186 = scmp.eq.s32.totalorder %s20, 0
      %p187 = por %p185, %p186
      %p188 = scmp.ne.s32.totalorder %s180, %s182
      %p189 = scmp.eq.s32.totalorder %s25, 1
      %p190 = por %p188, %p189
      %p191 = scmp.ne.s32.totalorder %s182, %s183
      %p192 = scmp.eq.s32.totalorder %s25, 0
      %p193 = por %p191, %p192
      %p194 = scmp.ne.s32.totalorder %s182, %s183
      %p195 = scmp.eq.s32.totalorder %s26, 1
      %p196 = por %p194, %p195
      %p198 = scmp.ne.s32.totalorder %s183, %s197
      %p199 = scmp.eq.s32.totalorder %s26, 0
      %p200 = por %p198, %p199
      %s201 = ssub.s32 %s20, %s27
      %p202 = scmp.eq.s32.totalorder %s201, 0
      %s204 = sadd.s32 %s203, 1
      %s205 = scalar_select %p202, %s203, %s204
      %p208 = pneg %p202
      %p209 = scmp.eq.s32.totalorder %s20, 1
      %p210 = por %p208, %p209
      %p211 = scmp.ne.s32.totalorder %s203, %s206
      %p212 = scmp.eq.s32.totalorder %s20, 0
      %p213 = por %p211, %p212
      %p214 = scmp.ne.s32.totalorder %s203, %s206
      %p215 = scmp.eq.s32.totalorder %s25, 1
      %p216 = por %p214, %p215
      %p217 = scmp.ne.s32.totalorder %s206, %s207
      %p218 = scmp.eq.s32.totalorder %s25, 0
      %p219 = por %p217, %p218
      %p220 = scmp.ne.s32.totalorder %s206, %s207
      %p221 = scmp.eq.s32.totalorder %s26, 1
      %p222 = por %p220, %p221
      %p224 = scmp.ne.s32.totalorder %s207, %s223
      %p225 = scmp.eq.s32.totalorder %s26, 0
      %p226 = por %p224, %p225
      %p227 = scmp.le.s32.totalorder 1, %s20
      %p228 = scmp.lt.s32.totalorder %s20, 3
      %p229 = pnand %p227, %p228
      %p230 = pneg %p229
      // Predicated region
      $region9: #{tpu_custom_call.1} parent=5 // pred_check
        _
      $region10: #{tpu_custom_call.1} parent=5 // pred_check_branch
        %232 = sbr.rel (%p229) target = $region12
      $region11: #{tpu_custom_call.1} parent=5 // pred_region
        %s233 = ssub.s32 %s20, 1
        // Predicated region
        $region13: #{tpu_custom_call.1} parent=11 // pred_check
          %p234 = pneg %p67
        $region14: #{tpu_custom_call.1} parent=11 // pred_check_branch
          %236 = sbr.rel (%p234) target = $region16
        $region15: #{tpu_custom_call.1} parent=11 // pred_region
          %s238 = ssub.s32 1024, 1024
          %239 = vsyncadd [#allocation3], %s238
          %s240 = sshll.u32 [#allocation2], 4
          %s241 = int_to_ptr.vmem [resolvable:$true] %s240
          %246 = dma.hbm_to_vmem [thread:$0]  %s1, 1024, %s241, [#allocation3], 64, 64, 4
        $region16: #{tpu_custom_call.1} parent=11 // pred_fallthru
          _
        // Predicated region
        $region17: #{tpu_custom_call.1} parent=11 // pred_check
          %p247 = pneg %p88
        $region18: #{tpu_custom_call.1} parent=11 // pred_check_branch
          %249 = sbr.rel (%p247) target = $region20
        $region19: #{tpu_custom_call.1} parent=11 // pred_region
          _
        $region20: #{tpu_custom_call.1} parent=11 // pred_fallthru
          _
        // Predicated region
        $region21: #{tpu_custom_call.1} parent=11 // pred_check
          %p250 = pneg %p109
        $region22: #{tpu_custom_call.1} parent=11 // pred_check_branch
          %252 = sbr.rel (%p250) target = $region24
        $region23: #{tpu_custom_call.1} parent=11 // pred_region
          %s254 = ssub.s32 2048, 2048
          %255 = vsyncadd [#allocation6], %s254
          %s256 = sshll.u32 [#allocation5], 4
          %s257 = int_to_ptr.vmem [resolvable:$true] %s256
          %262 = dma.hbm_to_vmem [thread:$0]  %s3, 2048, %s257, [#allocation6], 64, 64, 4
        $region24: #{tpu_custom_call.1} parent=11 // pred_fallthru
          _
        // Predicated region
        $region25: #{tpu_custom_call.1} parent=11 // pred_check
          %p263 = pneg %p130
        $region26: #{tpu_custom_call.1} parent=11 // pred_check_branch
          %265 = sbr.rel (%p263) target = $region28
        $region27: #{tpu_custom_call.1} parent=11 // pred_region
          %s267 = ssub.s32 4096, 4096
          %268 = vsyncadd [#allocation6], %s267
          %s269 = sshll.u32 [#allocation7], 4
          %s270 = int_to_ptr.vmem [resolvable:$true] %s269
          %275 = dma.hbm_to_vmem [thread:$0]  %s4, 4096, %s270, [#allocation6], 128, 128, 8
        $region28: #{tpu_custom_call.1} parent=11 // pred_fallthru
          _
        // Predicated region
        $region29: #{tpu_custom_call.1} parent=11 // pred_check
          %p276 = pneg %p151
        $region30: #{tpu_custom_call.1} parent=11 // pred_check_branch
          %278 = sbr.rel (%p276) target = $region32
        $region31: #{tpu_custom_call.1} parent=11 // pred_region
          _
        $region32: #{tpu_custom_call.1} parent=11 // pred_fallthru
          _
        // Predicated region
        $region33: #{tpu_custom_call.1} parent=11 // pred_check
          %p279 = pneg %p172
        $region34: #{tpu_custom_call.1} parent=11 // pred_check_branch
          %281 = sbr.rel (%p279) target = $region36
        $region35: #{tpu_custom_call.1} parent=11 // pred_region
          %s283 = ssub.s32 4096, 4096
          %284 = vsyncadd [#allocation9], %s283
          %s285 = sshll.u32 [#allocation8], 4
          %s286 = int_to_ptr.vmem [resolvable:$true] %s285
          %291 = dma.hbm_to_vmem [thread:$0]  %s6, 4096, %s286, [#allocation9], 64, 64, 4
        $region36: #{tpu_custom_call.1} parent=11 // pred_fallthru
          _
        // Predicated region
        $region37: #{tpu_custom_call.1} parent=11 // pred_check
          %p292 = pneg %p193
        $region38: #{tpu_custom_call.1} parent=11 // pred_check_branch
          %294 = sbr.rel (%p292) target = $region40
        $region39: #{tpu_custom_call.1} parent=11 // pred_region
          _
        $region40: #{tpu_custom_call.1} parent=11 // pred_fallthru
          _
      $region12: #{tpu_custom_call.1} parent=5 // pred_fallthru
        _
      %p295 = scmp.lt.s32.totalorder %s20, 2
      // Predicated region
      $region41: #{tpu_custom_call.1} parent=5 // pred_check
        %p296 = pneg %p295
      $region42: #{tpu_custom_call.1} parent=5 // pred_check_branch
        %298 = sbr.rel (%p296) target = $region44
      $region43: #{tpu_custom_call.1} parent=5 // pred_region
        // Predicated region
        $region45: #{tpu_custom_call.1} parent=43 // pred_check
          %p299 = pneg %p40
        $region46: #{tpu_custom_call.1} parent=43 // pred_check_branch
          %301 = sbr.rel (%p299) target = $region48
        $region47: #{tpu_custom_call.1} parent=43 // pred_region
          %p302 = scmp.lt.s32.totalorder %s20, 1
          %s303 = scalar_select %p302, %s20, 1
          %s304 = smul.addr %s303, 8
          %s305 = scalar_lea.vmem %s0, %s304
        $region48: #{tpu_custom_call.1} parent=43 // pred_fallthru
          _
      $region44: #{tpu_custom_call.1} parent=5 // pred_fallthru
        _
      %p306 = scmp.le.s32.totalorder 1, %s20
      %p307 = scmp.lt.s32.totalorder %s20, 3
      %p308 = pnand %p306, %p307
      %p309 = pneg %p308
      // Predicated region
      $region49: #{tpu_custom_call.1} parent=5 // pred_check
        _
      $region50: #{tpu_custom_call.1} parent=5 // pred_check_branch
        %311 = sbr.rel (%p308) target = $region52
      $region51: #{tpu_custom_call.1} parent=5 // pred_region
        %s312 = ssub.s32 %s20, 1
        // Predicated region
        $region53: #{tpu_custom_call.1} parent=51 // pred_check
          %p313 = pneg %p67
        $region54: #{tpu_custom_call.1} parent=51 // pred_check_branch
          %315 = sbr.rel (%p313) target = $region56
        $region55: #{tpu_custom_call.1} parent=51 // pred_region
          %316 = dma.done [#allocation3], 1024
        $region56: #{tpu_custom_call.1} parent=51 // pred_fallthru
          _
        // Predicated region
        $region57: #{tpu_custom_call.1} parent=51 // pred_check
          %p317 = pneg %p109
        $region58: #{tpu_custom_call.1} parent=51 // pred_check_branch
          %319 = sbr.rel (%p317) target = $region60
        $region59: #{tpu_custom_call.1} parent=51 // pred_region
          %320 = dma.done [#allocation6], 2048
        $region60: #{tpu_custom_call.1} parent=51 // pred_fallthru
          _
        // Predicated region
        $region61: #{tpu_custom_call.1} parent=51 // pred_check
          %p321 = pneg %p130
        $region62: #{tpu_custom_call.1} parent=51 // pred_check_branch
          %323 = sbr.rel (%p321) target = $region64
        $region63: #{tpu_custom_call.1} parent=51 // pred_region
          %324 = dma.done [#allocation6], 4096
        $region64: #{tpu_custom_call.1} parent=51 // pred_fallthru
          _
        // Predicated region
        $region65: #{tpu_custom_call.1} parent=51 // pred_check
          %p325 = pneg %p172
        $region66: #{tpu_custom_call.1} parent=51 // pred_check_branch
          %327 = sbr.rel (%p325) target = $region68
        $region67: #{tpu_custom_call.1} parent=51 // pred_region
          %328 = dma.done [#allocation9], 4096
        $region68: #{tpu_custom_call.1} parent=51 // pred_fallthru
          _
        %p329 = scmp.lt.s32.totalorder %s25, 1
        %s330 = scalar_select %p329, %s25, 1
        %s331 = smul.addr %s330, 8
        %s332 = scalar_lea.vmem %s0, %s331
        %p333 = pneg %p46
        %p334 = pneg %p43
        %p335 = pneg %p67
        %p336 = pneg %p64
        %p337 = pneg %p88
        %p338 = pneg %p85
        %p339 = pneg %p109
        %p340 = pneg %p106
        %p341 = pneg %p130
        %p342 = pneg %p127
        %p343 = pneg %p151
        %p344 = pneg %p148
        %p345 = pneg %p172
        %p346 = pneg %p169
        %p347 = pneg %p193
        %p348 = pneg %p190
        %p349 = pneg %p219
        %p350 = pneg %p216
        %s351 = sand.u32 %s206, 1
        %s352 = scalar_lea.sflag [#allocation4], %s351
        %s353 = sand.u32 %s206, 1
        %s354 = smul.addr %s353, 8
        %s355 = scalar_lea.vmem [#allocation10], %s354
        %p356 = scmp.lt.s32.totalorder %s25, 1
        %s357 = scalar_select %p356, %s25, 1
        %s358 = smul.addr %s357, 8
        %s359 = scalar_lea.vmem %s0, %s358
        %v361 = vld [vmem:[%s359] sm:$0xff]
        %v362 = vpack.c.bf16 %v361, %v361
        %v363 = vld [vmem:[#allocation2] sm:$0xf]
        %v364 = vld [vmem:[#allocation2 + $0x4] sm:$0xf]
        %v365 = vld [vmem:[#allocation2 + $0x8] sm:$0xf]
        %v366 = vld [vmem:[#allocation2 + $0xc] sm:$0xf]
        %v367 = vld [vmem:[#allocation2 + $0x10] sm:$0xf]
        %v368 = vld [vmem:[#allocation2 + $0x14] sm:$0xf]
        %v369 = vld [vmem:[#allocation2 + $0x18] sm:$0xf]
        %v370 = vld [vmem:[#allocation2 + $0x1c] sm:$0xf]
        %v371 = vld [vmem:[#allocation2 + $0x20] sm:$0xf]
        %v372 = vld [vmem:[#allocation2 + $0x24] sm:$0xf]
        %v373 = vld [vmem:[#allocation2 + $0x28] sm:$0xf]
        %v374 = vld [vmem:[#allocation2 + $0x2c] sm:$0xf]
        %v375 = vld [vmem:[#allocation2 + $0x30] sm:$0xf]
        %v376 = vld [vmem:[#allocation2 + $0x34] sm:$0xf]
        %v377 = vld [vmem:[#allocation2 + $0x38] sm:$0xf]
        %v378 = vld [vmem:[#allocation2 + $0x3c] sm:$0xf]
        %v379 = vld [vmem:[%s2] sm:$0x1]
        %v381 = vlaneseq
        %v382 = vshrl.u32 %v381, 7
        %v383 = vsub.s32 0, %v382
        %v384 = vrot.slane %v379, %v383
        %v402 = vunpack.c.l.b16 %v363
        %v403 = vunpack.c.l.b16 %v364
        %v404 = vunpack.c.l.b16 %v365
        %v405 = vunpack.c.l.b16 %v366
        %v406 = vunpack.c.l.b16 %v367
        %v407 = vunpack.c.l.b16 %v368
        %v408 = vunpack.c.l.b16 %v369
        %v409 = vunpack.c.l.b16 %v370
        %v410 = vunpack.c.l.b16 %v371
        %v411 = vunpack.c.l.b16 %v372
        %v412 = vunpack.c.l.b16 %v373
        %v413 = vunpack.c.l.b16 %v374
        %v414 = vunpack.c.l.b16 %v375
        %v415 = vunpack.c.l.b16 %v376
        %v416 = vunpack.c.l.b16 %v377
        %v417 = vunpack.c.l.b16 %v378
        %v418 = vpack.c.b16 %v403, %v402
        %v419 = vpack.c.b16 %v405, %v404
        %v420 = vpack.c.b16 %v407, %v406
        %v421 = vpack.c.b16 %v409, %v408
        %v422 = vpack.c.b16 %v411, %v410
        %v423 = vpack.c.b16 %v413, %v412
        %v424 = vpack.c.b16 %v415, %v414
        %v425 = vpack.c.b16 %v417, %v416
        %434 = vmatprep.subr.bf16.mxu0 0
        %435 = vmatpush1.bf16.msra.mxu0 %v418
        %436 = vmatprep.subr.bf16.mxu0 0
        %437 = vmatpush1.bf16.msra.mxu0 %v419
        %438 = vmatprep.subr.bf16.mxu0 0
        %439 = vmatpush1.bf16.msra.mxu0 %v420
        %440 = vmatprep.subr.bf16.mxu0 0
        %441 = vmatpush1.bf16.msra.mxu0 %v421
        %442 = vmatprep.subr.bf16.mxu0 0
        %443 = vmatpush1.bf16.msra.mxu0 %v422
        %444 = vmatprep.subr.bf16.mxu0 0
        %445 = vmatpush1.bf16.msra.mxu0 %v423
        %446 = vmatprep.subr.bf16.mxu0 0
        %447 = vmatpush1.bf16.msra.mxu0 %v424
        %448 = vmatprep.subr.bf16.mxu0 0
        %449 = vmatpush1.bf16.msra.mxu0 %v425
        %450 = vmatprep.subr.bf16.mxu0 0
        %451 = vmatpush1.bf16.msra.mxu0 0
        %452 = vmatprep.subr.bf16.mxu0 0
        %453 = vmatpush1.bf16.msra.mxu0 0
        %454 = vmatprep.subr.bf16.mxu0 0
        %455 = vmatpush1.bf16.msra.mxu0 0
        %456 = vmatprep.subr.bf16.mxu0 0
        %457 = vmatpush1.bf16.msra.mxu0 0
        %458 = vmatprep.subr.bf16.mxu0 0
        %459 = vmatpush1.bf16.msra.mxu0 0
        %460 = vmatprep.subr.bf16.mxu0 0
        %461 = vmatpush1.bf16.msra.mxu0 0
        %462 = vmatprep.subr.bf16.mxu0 0
        %463 = vmatpush1.bf16.msra.mxu0 0
        %464 = vmatprep.subr.bf16.mxu0 0
        %465 = vmatpush1.bf16.msra.mxu0 0
        %466 = vmatprep.mubr.bf16.mxu0 0
        %467 = vmatmul.mubr.bf16.gmra.mrb[0].mxu0 %v362
        %v468 = vpop.f32.mrb[0].mxu0
        %v469 = vadd.f32 %v384, %v468
        %v470 = vpop.f32.mrb[0].mxu0
        %v471 = vpop.f32.mrb[0].mxu0
        %v472 = vpop.f32.mrb[0].mxu0
        %473 = vdwg.mxu0
        %v474 = vld [vmem:[#allocation5] sm:$0xf]
        %v475 = vld [vmem:[#allocation5 + $0x4] sm:$0xf]
        %v476 = vld [vmem:[#allocation5 + $0x8] sm:$0xf]
        %v477 = vld [vmem:[#allocation5 + $0xc] sm:$0xf]
        %v478 = vld [vmem:[#allocation5 + $0x10] sm:$0xf]
        %v479 = vld [vmem:[#allocation5 + $0x14] sm:$0xf]
        %v480 = vld [vmem:[#allocation5 + $0x18] sm:$0xf]
        %v481 = vld [vmem:[#allocation5 + $0x1c] sm:$0xf]
        %v482 = vld [vmem:[#allocation5 + $0x20] sm:$0xf]
        %v483 = vld [vmem:[#allocation5 + $0x24] sm:$0xf]
        %v484 = vld [vmem:[#allocation5 + $0x28] sm:$0xf]
        %v485 = vld [vmem:[#allocation5 + $0x2c] sm:$0xf]
        %v486 = vld [vmem:[#allocation5 + $0x30] sm:$0xf]
        %v487 = vld [vmem:[#allocation5 + $0x34] sm:$0xf]
        %v488 = vld [vmem:[#allocation5 + $0x38] sm:$0xf]
        %v489 = vld [vmem:[#allocation5 + $0x3c] sm:$0xf]
        %v490 = vld [vmem:[#allocation7] sm:$0xff]
        %v491 = vld [vmem:[#allocation7 + $0x8] sm:$0xff]
        %v492 = vld [vmem:[#allocation7 + $0x10] sm:$0xff]
        %v493 = vld [vmem:[#allocation7 + $0x18] sm:$0xff]
        %v494 = vld [vmem:[#allocation7 + $0x20] sm:$0xff]
        %v495 = vld [vmem:[#allocation7 + $0x28] sm:$0xff]
        %v496 = vld [vmem:[#allocation7 + $0x30] sm:$0xff]
        %v497 = vld [vmem:[#allocation7 + $0x38] sm:$0xff]
        %v498 = vld [vmem:[#allocation7 + $0x40] sm:$0xff]
        %v499 = vld [vmem:[#allocation7 + $0x48] sm:$0xff]
        %v500 = vld [vmem:[#allocation7 + $0x50] sm:$0xff]
        %v501 = vld [vmem:[#allocation7 + $0x58] sm:$0xff]
        %v502 = vld [vmem:[#allocation7 + $0x60] sm:$0xff]
        %v503 = vld [vmem:[#allocation7 + $0x68] sm:$0xff]
        %v504 = vld [vmem:[#allocation7 + $0x70] sm:$0xff]
        %v505 = vld [vmem:[#allocation7 + $0x78] sm:$0xff]
        %v506 = vld [vmem:[%s5] sm:$0x3]
        %v507 = vld [vmem:[#allocation8] sm:$0xf]
        %v508 = vld [vmem:[#allocation8 + $0x4] sm:$0xf]
        %v509 = vld [vmem:[#allocation8 + $0x8] sm:$0xf]
        %v510 = vld [vmem:[#allocation8 + $0xc] sm:$0xf]
        %v511 = vld [vmem:[#allocation8 + $0x10] sm:$0xf]
        %v512 = vld [vmem:[#allocation8 + $0x14] sm:$0xf]
        %v513 = vld [vmem:[#allocation8 + $0x18] sm:$0xf]
        %v514 = vld [vmem:[#allocation8 + $0x1c] sm:$0xf]
        %v515 = vld [vmem:[#allocation8 + $0x20] sm:$0xf]
        %v516 = vld [vmem:[#allocation8 + $0x24] sm:$0xf]
        %v517 = vld [vmem:[#allocation8 + $0x28] sm:$0xf]
        %v518 = vld [vmem:[#allocation8 + $0x2c] sm:$0xf]
        %v519 = vld [vmem:[#allocation8 + $0x30] sm:$0xf]
        %v520 = vld [vmem:[#allocation8 + $0x34] sm:$0xf]
        %v521 = vld [vmem:[#allocation8 + $0x38] sm:$0xf]
        %v522 = vld [vmem:[#allocation8 + $0x3c] sm:$0xf]
        %v523 = vld [vmem:[#allocation8 + $0x40] sm:$0xf]
        %v524 = vld [vmem:[#allocation8 + $0x44] sm:$0xf]
        %v525 = vld [vmem:[#allocation8 + $0x48] sm:$0xf]
        %v526 = vld [vmem:[#allocation8 + $0x4c] sm:$0xf]
        %v527 = vld [vmem:[#allocation8 + $0x50] sm:$0xf]
        %v528 = vld [vmem:[#allocation8 + $0x54] sm:$0xf]
        %v529 = vld [vmem:[#allocation8 + $0x58] sm:$0xf]
        %v530 = vld [vmem:[#allocation8 + $0x5c] sm:$0xf]
        %v531 = vld [vmem:[#allocation8 + $0x60] sm:$0xf]
        %v532 = vld [vmem:[#allocation8 + $0x64] sm:$0xf]
        %v533 = vld [vmem:[#allocation8 + $0x68] sm:$0xf]
        %v534 = vld [vmem:[#allocation8 + $0x6c] sm:$0xf]
        %v535 = vld [vmem:[#allocation8 + $0x70] sm:$0xf]
        %v536 = vld [vmem:[#allocation8 + $0x74] sm:$0xf]
        %v537 = vld [vmem:[#allocation8 + $0x78] sm:$0xf]
        %v538 = vld [vmem:[#allocation8 + $0x7c] sm:$0xf]
        %v539 = vld [vmem:[%s7] sm:$0x3f]
        %v540 = vpack.c.bf16 %v469, %v469
        %v541 = vlaneseq
        %v542 = vshrl.u32 %v541, 7
        %v543 = vsub.s32 0, %v542
        %v544 = vrot.slane %v539, %v543
        %v561 = vunpack.c.l.b16 %v474
        %v562 = vunpack.c.l.b16 %v475
        %v563 = vunpack.c.l.b16 %v476
        %v564 = vunpack.c.l.b16 %v477
        %v565 = vunpack.c.l.b16 %v478
        %v566 = vunpack.c.l.b16 %v479
        %v567 = vunpack.c.l.b16 %v480
        %v568 = vunpack.c.l.b16 %v481
        %v569 = vunpack.c.l.b16 %v482
        %v570 = vunpack.c.l.b16 %v483
        %v571 = vunpack.c.l.b16 %v484
        %v572 = vunpack.c.l.b16 %v485
        %v573 = vunpack.c.l.b16 %v486
        %v574 = vunpack.c.l.b16 %v487
        %v575 = vunpack.c.l.b16 %v488
        %v576 = vunpack.c.l.b16 %v489
        %v577 = vpack.c.b16 %v562, %v561
        %v578 = vpack.c.b16 %v564, %v563
        %v579 = vpack.c.b16 %v566, %v565
        %v580 = vpack.c.b16 %v568, %v567
        %v581 = vpack.c.b16 %v570, %v569
        %v582 = vpack.c.b16 %v572, %v571
        %v583 = vpack.c.b16 %v574, %v573
        %v584 = vpack.c.b16 %v576, %v575
        %593 = vmatprep.subr.bf16.mxu0 0
        %594 = vmatpush1.bf16.msra.mxu0 %v577
        %595 = vmatprep.subr.bf16.mxu0 0
        %596 = vmatpush1.bf16.msra.mxu0 %v578
        %597 = vmatprep.subr.bf16.mxu0 0
        %598 = vmatpush1.bf16.msra.mxu0 %v579
        %599 = vmatprep.subr.bf16.mxu0 0
        %600 = vmatpush1.bf16.msra.mxu0 %v580
        %601 = vmatprep.subr.bf16.mxu0 0
        %602 = vmatpush1.bf16.msra.mxu0 %v581
        %603 = vmatprep.subr.bf16.mxu0 0
        %604 = vmatpush1.bf16.msra.mxu0 %v582
        %605 = vmatprep.subr.bf16.mxu0 0
        %606 = vmatpush1.bf16.msra.mxu0 %v583
        %607 = vmatprep.subr.bf16.mxu0 0
        %608 = vmatpush1.bf16.msra.mxu0 %v584
        %609 = vmatprep.subr.bf16.mxu0 0
        %610 = vmatpush1.bf16.msra.mxu0 0
        %611 = vmatprep.subr.bf16.mxu0 0
        %612 = vmatpush1.bf16.msra.mxu0 0
        %613 = vmatprep.subr.bf16.mxu0 0
        %614 = vmatpush1.bf16.msra.mxu0 0
        %615 = vmatprep.subr.bf16.mxu0 0
        %616 = vmatpush1.bf16.msra.mxu0 0
        %617 = vmatprep.subr.bf16.mxu0 0
        %618 = vmatpush1.bf16.msra.mxu0 0
        %619 = vmatprep.subr.bf16.mxu0 0
        %620 = vmatpush1.bf16.msra.mxu0 0
        %621 = vmatprep.subr.bf16.mxu0 0
        %622 = vmatpush1.bf16.msra.mxu0 0
        %623 = vmatprep.subr.bf16.mxu0 0
        %624 = vmatpush1.bf16.msra.mxu0 0
        %625 = vmatprep.mubr.bf16.mxu0 0
        %626 = vmatmul.mubr.bf16.gmra.mrb[0].mxu0 %v540
        %v627 = vpop.f32.mrb[0].mxu0
        %v628 = vadd.f32 %v544, %v627
        %v629 = vpop.f32.mrb[0].mxu0
        %v630 = vpop.f32.mrb[0].mxu0
        %v631 = vpop.f32.mrb[0].mxu0
        %632 = vdwg.mxu0
        %v633 = vadd.f32 %v469, %v628
        %634 = vadd.xlane.f32.xlu0 %v633
        %v635 = vpop.xlane.xlu0 %634
        %v636 = vrcp.pop 128.0
        %v637 = vmul.f32 %v635, %v636
        %v638 = vsub.f32 %v633, %v637
        %v639 = vmul.f32 %v638, %v638
        %640 = vadd.xlane.f32.xlu0 %v639
        %v641 = vpop.xlane.xlu0 %640
        %v642 = vmul.f32 %v641, %v636
        %v643 = vadd.f32 %v642, 1e-05
        %v644 = vrsqrt.pop %v643
        %v645 = vmul.f32 %v638, %v644
        %v646 = vlaneseq
        %v647 = vshrl.u32 %v646, 7
        %v648 = vsub.s32 1, %v647
        %v649 = vrot.slane %v539, %v648
        %v650 = vmul.f32 %v645, %v649
        %v651 = vlaneseq
        %v652 = vshrl.u32 %v651, 7
        %v653 = vsub.s32 2, %v652
        %v654 = vrot.slane %v539, %v653
        %v655 = vadd.f32 %v650, %v654
        %v656 = vpack.c.bf16 %v655, %v655
        %v658 = vlaneseq
        %v659 = vshrl.u32 %v658, 7
        %v660 = vsub.s32 0, %v659
        %v661 = vrot.slane %v506, %v660
        %v662 = vlaneseq
        %v663 = vshrl.u32 %v662, 7
        %v664 = vsub.s32 1, %v663
        %v665 = vrot.slane %v506, %v664
        %v684 = vunpack.c.l.b16 %v490
        %v685 = vunpack.c.h.b16 %v490
        %v686 = vunpack.c.l.b16 %v491
        %v687 = vunpack.c.h.b16 %v491
        %v688 = vunpack.c.l.b16 %v492
        %v689 = vunpack.c.h.b16 %v492
        %v690 = vunpack.c.l.b16 %v493
        %v691 = vunpack.c.h.b16 %v493
        %v692 = vunpack.c.l.b16 %v494
        %v693 = vunpack.c.h.b16 %v494
        %v694 = vunpack.c.l.b16 %v495
        %v695 = vunpack.c.h.b16 %v495
        %v696 = vunpack.c.l.b16 %v496
        %v697 = vunpack.c.h.b16 %v496
        %v698 = vunpack.c.l.b16 %v497
        %v699 = vunpack.c.h.b16 %v497
        %v700 = vunpack.c.l.b16 %v498
        %v701 = vunpack.c.h.b16 %v498
        %v702 = vunpack.c.l.b16 %v499
        %v703 = vunpack.c.h.b16 %v499
        %v704 = vunpack.c.l.b16 %v500
        %v705 = vunpack.c.h.b16 %v500
        %v706 = vunpack.c.l.b16 %v501
        %v707 = vunpack.c.h.b16 %v501
        %v708 = vunpack.c.l.b16 %v502
        %v709 = vunpack.c.h.b16 %v502
        %v710 = vunpack.c.l.b16 %v503
        %v711 = vunpack.c.h.b16 %v503
        %v712 = vunpack.c.l.b16 %v504
        %v713 = vunpack.c.h.b16 %v504
        %v714 = vunpack.c.l.b16 %v505
        %v715 = vunpack.c.h.b16 %v505
        %v716 = vpack.c.b16 %v686, %v684
        %v717 = vpack.c.b16 %v687, %v685
        %v718 = vpack.c.b16 %v690, %v688
        %v719 = vpack.c.b16 %v691, %v689
        %v720 = vpack.c.b16 %v694, %v692
        %v721 = vpack.c.b16 %v695, %v693
        %v722 = vpack.c.b16 %v698, %v696
        %v723 = vpack.c.b16 %v699, %v697
        %v724 = vpack.c.b16 %v702, %v700
        %v725 = vpack.c.b16 %v703, %v701
        %v726 = vpack.c.b16 %v706, %v704
        %v727 = vpack.c.b16 %v707, %v705
        %v728 = vpack.c.b16 %v710, %v708
        %v729 = vpack.c.b16 %v711, %v709
        %v730 = vpack.c.b16 %v714, %v712
        %v731 = vpack.c.b16 %v715, %v713
        %748 = vmatprep.subr.bf16.mxu0 %v717
        %749 = vmatpush1.bf16.msra.mxu0 %v716
        %750 = vmatprep.subr.bf16.mxu0 %v719
        %751 = vmatpush1.bf16.msra.mxu0 %v718
        %752 = vmatprep.subr.bf16.mxu0 %v721
        %753 = vmatpush1.bf16.msra.mxu0 %v720
        %754 = vmatprep.subr.bf16.mxu0 %v723
        %755 = vmatpush1.bf16.msra.mxu0 %v722
        %756 = vmatprep.subr.bf16.mxu0 %v725
        %757 = vmatpush1.bf16.msra.mxu0 %v724
        %758 = vmatprep.subr.bf16.mxu0 %v727
        %759 = vmatpush1.bf16.msra.mxu0 %v726
        %760 = vmatprep.subr.bf16.mxu0 %v729
        %761 = vmatpush1.bf16.msra.mxu0 %v728
        %762 = vmatprep.subr.bf16.mxu0 %v731
        %763 = vmatpush1.bf16.msra.mxu0 %v730
        %764 = vmatprep.subr.bf16.mxu0 0
        %765 = vmatpush1.bf16.msra.mxu0 0
        %766 = vmatprep.subr.bf16.mxu0 0
        %767 = vmatpush1.bf16.msra.mxu0 0
        %768 = vmatprep.subr.bf16.mxu0 0
        %769 = vmatpush1.bf16.msra.mxu0 0
        %770 = vmatprep.subr.bf16.mxu0 0
        %771 = vmatpush1.bf16.msra.mxu0 0
        %772 = vmatprep.subr.bf16.mxu0 0
        %773 = vmatpush1.bf16.msra.mxu0 0
        %774 = vmatprep.subr.bf16.mxu0 0
        %775 = vmatpush1.bf16.msra.mxu0 0
        %776 = vmatprep.subr.bf16.mxu0 0
        %777 = vmatpush1.bf16.msra.mxu0 0
        %778 = vmatprep.subr.bf16.mxu0 0
        %779 = vmatpush1.bf16.msra.mxu0 0
        %780 = vmatprep.mubr.bf16.mxu0 0
        %781 = vmatmul.mubr.bf16.gmra.mrb[0].mxu0 %v656
        %v782 = vpop.f32.mrb[0].mxu0
        %v783 = vadd.f32 %v661, %v782
        %v784 = vpop.f32.mrb[0].mxu0
        %v785 = vadd.f32 %v665, %v784
        %v786 = vpop.f32.mrb[0].mxu0
        %v787 = vpop.f32.mrb[0].mxu0
        %788 = vdwg.mxu0
        %v789 = vmax.f32 %v783, 0.0
        %v790 = vmax.f32 %v785, 0.0
        %v791 = vpack.c.bf16 %v789, %v789
        %v792 = vpack.c.bf16 %v790, %v790
        %v793 = vlaneseq
        %v794 = vshrl.u32 %v793, 7
        %v795 = vsub.s32 3, %v794
        %v796 = vrot.slane %v539, %v795
        %v829 = vunpack.c.l.b16 %v507
        %v830 = vunpack.c.l.b16 %v508
        %v831 = vunpack.c.l.b16 %v509
        %v832 = vunpack.c.l.b16 %v510
        %v833 = vunpack.c.l.b16 %v511
        %v834 = vunpack.c.l.b16 %v512
        %v835 = vunpack.c.l.b16 %v513
        %v836 = vunpack.c.l.b16 %v514
        %v837 = vunpack.c.l.b16 %v515
        %v838 = vunpack.c.l.b16 %v516
        %v839 = vunpack.c.l.b16 %v517
        %v840 = vunpack.c.l.b16 %v518
        %v841 = vunpack.c.l.b16 %v519
        %v842 = vunpack.c.l.b16 %v520
        %v843 = vunpack.c.l.b16 %v521
        %v844 = vunpack.c.l.b16 %v522
        %v845 = vunpack.c.l.b16 %v523
        %v846 = vunpack.c.l.b16 %v524
        %v847 = vunpack.c.l.b16 %v525
        %v848 = vunpack.c.l.b16 %v526
        %v849 = vunpack.c.l.b16 %v527
        %v850 = vunpack.c.l.b16 %v528
        %v851 = vunpack.c.l.b16 %v529
        %v852 = vunpack.c.l.b16 %v530
        %v853 = vunpack.c.l.b16 %v531
        %v854 = vunpack.c.l.b16 %v532
        %v855 = vunpack.c.l.b16 %v533
        %v856 = vunpack.c.l.b16 %v534
        %v857 = vunpack.c.l.b16 %v535
        %v858 = vunpack.c.l.b16 %v536
        %v859 = vunpack.c.l.b16 %v537
        %v860 = vunpack.c.l.b16 %v538
        %v861 = vpack.c.b16 %v830, %v829
        %v862 = vpack.c.b16 %v832, %v831
        %v863 = vpack.c.b16 %v834, %v833
        %v864 = vpack.c.b16 %v836, %v835
        %v865 = vpack.c.b16 %v838, %v837
        %v866 = vpack.c.b16 %v840, %v839
        %v867 = vpack.c.b16 %v842, %v841
        %v868 = vpack.c.b16 %v844, %v843
        %v869 = vpack.c.b16 %v846, %v845
        %v870 = vpack.c.b16 %v848, %v847
        %v871 = vpack.c.b16 %v850, %v849
        %v872 = vpack.c.b16 %v852, %v851
        %v873 = vpack.c.b16 %v854, %v853
        %v874 = vpack.c.b16 %v856, %v855
        %v875 = vpack.c.b16 %v858, %v857
        %v876 = vpack.c.b16 %v860, %v859
        %893 = vmatprep.subr.bf16.mxu0 0
        %894 = vmatpush1.bf16.msra.mxu0 %v861
        %895 = vmatprep.subr.bf16.mxu0 0
        %896 = vmatpush1.bf16.msra.mxu0 %v862
        %897 = vmatprep.subr.bf16.mxu0 0
        %898 = vmatpush1.bf16.msra.mxu0 %v863
        %899 = vmatprep.subr.bf16.mxu0 0
        %900 = vmatpush1.bf16.msra.mxu0 %v864
        %901 = vmatprep.subr.bf16.mxu0 0
        %902 = vmatpush1.bf16.msra.mxu0 %v865
        %903 = vmatprep.subr.bf16.mxu0 0
        %904 = vmatpush1.bf16.msra.mxu0 %v866
        %905 = vmatprep.subr.bf16.mxu0 0
        %906 = vmatpush1.bf16.msra.mxu0 %v867
        %907 = vmatprep.subr.bf16.mxu0 0
        %908 = vmatpush1.bf16.msra.mxu0 %v868
        %909 = vmatprep.subr.bf16.mxu0 0
        %910 = vmatpush1.bf16.msra.mxu0 %v869
        %911 = vmatprep.subr.bf16.mxu0 0
        %912 = vmatpush1.bf16.msra.mxu0 %v870
        %913 = vmatprep.subr.bf16.mxu0 0
        %914 = vmatpush1.bf16.msra.mxu0 %v871
        %915 = vmatprep.subr.bf16.mxu0 0
        %916 = vmatpush1.bf16.msra.mxu0 %v872
        %917 = vmatprep.subr.bf16.mxu0 0
        %918 = vmatpush1.bf16.msra.mxu0 %v873
        %919 = vmatprep.subr.bf16.mxu0 0
        %920 = vmatpush1.bf16.msra.mxu0 %v874
        %921 = vmatprep.subr.bf16.mxu0 0
        %922 = vmatpush1.bf16.msra.mxu0 %v875
        %923 = vmatprep.subr.bf16.mxu0 0
        %924 = vmatpush1.bf16.msra.mxu0 %v876
        %925 = vmatprep.mubr.bf16.mxu0 %v792
        %926 = vmatmul.mubr.bf16.gmra.mrb[0].mxu0 %v791
        %v927 = vpop.f32.mrb[0].mxu0
        %v928 = vadd.f32 %v796, %v927
        %v929 = vpop.f32.mrb[0].mxu0
        %v930 = vpop.f32.mrb[0].mxu0
        %v931 = vpop.f32.mrb[0].mxu0
        %932 = vdwg.mxu0
        %v933 = vadd.f32 %v655, %v928
        %934 = vadd.xlane.f32.xlu0 %v933
        %v935 = vpop.xlane.xlu0 %934
        %v936 = vmul.f32 %v935, %v636
        %v937 = vsub.f32 %v933, %v936
        %v938 = vmul.f32 %v937, %v937
        %939 = vadd.xlane.f32.xlu0 %v938
        %v940 = vpop.xlane.xlu0 %939
        %v941 = vmul.f32 %v940, %v636
        %v942 = vadd.f32 %v941, 1e-05
        %v943 = vrsqrt.pop %v942
        %v944 = vmul.f32 %v937, %v943
        %v945 = vlaneseq
        %v946 = vshrl.u32 %v945, 7
        %v947 = vsub.s32 4, %v946
        %v948 = vrot.slane %v539, %v947
        %v949 = vmul.f32 %v944, %v948
        %v950 = vlaneseq
        %v951 = vshrl.u32 %v950, 7
        %v952 = vsub.s32 5, %v951
        %v953 = vrot.slane %v539, %v952
        %v954 = vadd.f32 %v949, %v953
        %s955 = scalar_lea.vmem [#allocation5], 64
        %v956 = vld [vmem:[%s955] sm:$0xf]
        %v957 = vld [vmem:[%s955 + $0x4] sm:$0xf]
        %v958 = vld [vmem:[%s955 + $0x8] sm:$0xf]
        %v959 = vld [vmem:[%s955 + $0xc] sm:$0xf]
        %v960 = vld [vmem:[%s955 + $0x10] sm:$0xf]
        %v961 = vld [vmem:[%s955 + $0x14] sm:$0xf]
        %v962 = vld [vmem:[%s955 + $0x18] sm:$0xf]
        %v963 = vld [vmem:[%s955 + $0x1c] sm:$0xf]
        %v964 = vld [vmem:[%s955 + $0x20] sm:$0xf]
        %v965 = vld [vmem:[%s955 + $0x24] sm:$0xf]
        %v966 = vld [vmem:[%s955 + $0x28] sm:$0xf]
        %v967 = vld [vmem:[%s955 + $0x2c] sm:$0xf]
        %v968 = vld [vmem:[%s955 + $0x30] sm:$0xf]
        %v969 = vld [vmem:[%s955 + $0x34] sm:$0xf]
        %v970 = vld [vmem:[%s955 + $0x38] sm:$0xf]
        %v971 = vld [vmem:[%s955 + $0x3c] sm:$0xf]
        %s972 = scalar_lea.vmem [#allocation7], 128
        %v973 = vld [vmem:[%s972] sm:$0xff]
        %v974 = vld [vmem:[%s972 + $0x8] sm:$0xff]
        %v975 = vld [vmem:[%s972 + $0x10] sm:$0xff]
        %v976 = vld [vmem:[%s972 + $0x18] sm:$0xff]
        %v977 = vld [vmem:[%s972 + $0x20] sm:$0xff]
        %v978 = vld [vmem:[%s972 + $0x28] sm:$0xff]
        %v979 = vld [vmem:[%s972 + $0x30] sm:$0xff]
        %v980 = vld [vmem:[%s972 + $0x38] sm:$0xff]
        %v981 = vld [vmem:[%s972 + $0x40] sm:$0xff]
        %v982 = vld [vmem:[%s972 + $0x48] sm:$0xff]
        %v983 = vld [vmem:[%s972 + $0x50] sm:$0xff]
        %v984 = vld [vmem:[%s972 + $0x58] sm:$0xff]
        %v985 = vld [vmem:[%s972 + $0x60] sm:$0xff]
        %v986 = vld [vmem:[%s972 + $0x68] sm:$0xff]
        %v987 = vld [vmem:[%s972 + $0x70] sm:$0xff]
        %v988 = vld [vmem:[%s972 + $0x78] sm:$0xff]
        %s989 = scalar_lea.vmem %s5, 2
        %v990 = vld [vmem:[%s989] sm:$0x3]
        %s991 = scalar_lea.vmem [#allocation8], 128
        %v992 = vld [vmem:[%s991] sm:$0xf]
        %v993 = vld [vmem:[%s991 + $0x4] sm:$0xf]
        %v994 = vld [vmem:[%s991 + $0x8] sm:$0xf]
        %v995 = vld [vmem:[%s991 + $0xc] sm:$0xf]
        %v996 = vld [vmem:[%s991 + $0x10] sm:$0xf]
        %v997 = vld [vmem:[%s991 + $0x14] sm:$0xf]
        %v998 = vld [vmem:[%s991 + $0x18] sm:$0xf]
        %v999 = vld [vmem:[%s991 + $0x1c] sm:$0xf]
        %v1000 = vld [vmem:[%s991 + $0x20] sm:$0xf]
        %v1001 = vld [vmem:[%s991 + $0x24] sm:$0xf]
        %v1002 = vld [vmem:[%s991 + $0x28] sm:$0xf]
        %v1003 = vld [vmem:[%s991 + $0x2c] sm:$0xf]
        %v1004 = vld [vmem:[%s991 + $0x30] sm:$0xf]
        %v1005 = vld [vmem:[%s991 + $0x34] sm:$0xf]
        %v1006 = vld [vmem:[%s991 + $0x38] sm:$0xf]
        %v1007 = vld [vmem:[%s991 + $0x3c] sm:$0xf]
        %v1008 = vld [vmem:[%s991 + $0x40] sm:$0xf]
        %v1009 = vld [vmem:[%s991 + $0x44] sm:$0xf]
        %v1010 = vld [vmem:[%s991 + $0x48] sm:$0xf]
        %v1011 = vld [vmem:[%s991 + $0x4c] sm:$0xf]
        %v1012 = vld [vmem:[%s991 + $0x50] sm:$0xf]
        %v1013 = vld [vmem:[%s991 + $0x54] sm:$0xf]
        %v1014 = vld [vmem:[%s991 + $0x58] sm:$0xf]
        %v1015 = vld [vmem:[%s991 + $0x5c] sm:$0xf]
        %v1016 = vld [vmem:[%s991 + $0x60] sm:$0xf]
        %v1017 = vld [vmem:[%s991 + $0x64] sm:$0xf]
        %v1018 = vld [vmem:[%s991 + $0x68] sm:$0xf]
        %v1019 = vld [vmem:[%s991 + $0x6c] sm:$0xf]
        %v1020 = vld [vmem:[%s991 + $0x70] sm:$0xf]
        %v1021 = vld [vmem:[%s991 + $0x74] sm:$0xf]
        %v1022 = vld [vmem:[%s991 + $0x78] sm:$0xf]
        %v1023 = vld [vmem:[%s991 + $0x7c] sm:$0xf]
        %s1024 = scalar_lea.vmem %s7, 8
        %v1025 = vld [vmem:[%s1024] sm:$0x3f]
        %v1026 = vpack.c.bf16 %v954, %v954
        %v1027 = vlaneseq
        %v1028 = vshrl.u32 %v1027, 7
        %v1029 = vsub.s32 0, %v1028
        %v1030 = vrot.slane %v1025, %v1029
        %v1047 = vunpack.c.l.b16 %v956
        %v1048 = vunpack.c.l.b16 %v957
        %v1049 = vunpack.c.l.b16 %v958
        %v1050 = vunpack.c.l.b16 %v959
        %v1051 = vunpack.c.l.b16 %v960
        %v1052 = vunpack.c.l.b16 %v961
        %v1053 = vunpack.c.l.b16 %v962
        %v1054 = vunpack.c.l.b16 %v963
        %v1055 = vunpack.c.l.b16 %v964
        %v1056 = vunpack.c.l.b16 %v965
        %v1057 = vunpack.c.l.b16 %v966
        %v1058 = vunpack.c.l.b16 %v967
        %v1059 = vunpack.c.l.b16 %v968
        %v1060 = vunpack.c.l.b16 %v969
        %v1061 = vunpack.c.l.b16 %v970
        %v1062 = vunpack.c.l.b16 %v971
        %v1063 = vpack.c.b16 %v1048, %v1047
        %v1064 = vpack.c.b16 %v1050, %v1049
        %v1065 = vpack.c.b16 %v1052, %v1051
        %v1066 = vpack.c.b16 %v1054, %v1053
        %v1067 = vpack.c.b16 %v1056, %v1055
        %v1068 = vpack.c.b16 %v1058, %v1057
        %v1069 = vpack.c.b16 %v1060, %v1059
        %v1070 = vpack.c.b16 %v1062, %v1061
        %1079 = vmatprep.subr.bf16.mxu0 0
        %1080 = vmatpush1.bf16.msra.mxu0 %v1063
        %1081 = vmatprep.subr.bf16.mxu0 0
        %1082 = vmatpush1.bf16.msra.mxu0 %v1064
        %1083 = vmatprep.subr.bf16.mxu0 0
        %1084 = vmatpush1.bf16.msra.mxu0 %v1065
        %1085 = vmatprep.subr.bf16.mxu0 0
        %1086 = vmatpush1.bf16.msra.mxu0 %v1066
        %1087 = vmatprep.subr.bf16.mxu0 0
        %1088 = vmatpush1.bf16.msra.mxu0 %v1067
        %1089 = vmatprep.subr.bf16.mxu0 0
        %1090 = vmatpush1.bf16.msra.mxu0 %v1068
        %1091 = vmatprep.subr.bf16.mxu0 0
        %1092 = vmatpush1.bf16.msra.mxu0 %v1069
        %1093 = vmatprep.subr.bf16.mxu0 0
        %1094 = vmatpush1.bf16.msra.mxu0 %v1070
        %1095 = vmatprep.subr.bf16.mxu0 0
        %1096 = vmatpush1.bf16.msra.mxu0 0
        %1097 = vmatprep.subr.bf16.mxu0 0
        %1098 = vmatpush1.bf16.msra.mxu0 0
        %1099 = vmatprep.subr.bf16.mxu0 0
        %1100 = vmatpush1.bf16.msra.mxu0 0
        %1101 = vmatprep.subr.bf16.mxu0 0
        %1102 = vmatpush1.bf16.msra.mxu0 0
        %1103 = vmatprep.subr.bf16.mxu0 0
        %1104 = vmatpush1.bf16.msra.mxu0 0
        %1105 = vmatprep.subr.bf16.mxu0 0
        %1106 = vmatpush1.bf16.msra.mxu0 0
        %1107 = vmatprep.subr.bf16.mxu0 0
        %1108 = vmatpush1.bf16.msra.mxu0 0
        %1109 = vmatprep.subr.bf16.mxu0 0
        %1110 = vmatpush1.bf16.msra.mxu0 0
        %1111 = vmatprep.mubr.bf16.mxu0 0
        %1112 = vmatmul.mubr.bf16.gmra.mrb[0].mxu0 %v1026
        %v1113 = vpop.f32.mrb[0].mxu0
        %v1114 = vadd.f32 %v1030, %v1113
        %v1115 = vpop.f32.mrb[0].mxu0
        %v1116 = vpop.f32.mrb[0].mxu0
        %v1117 = vpop.f32.mrb[0].mxu0
        %1118 = vdwg.mxu0
        %v1119 = vadd.f32 %v954, %v1114
        %1120 = vadd.xlane.f32.xlu0 %v1119
        %v1121 = vpop.xlane.xlu0 %1120
        %v1122 = vmul.f32 %v1121, %v636
        %v1123 = vsub.f32 %v1119, %v1122
        %v1124 = vmul.f32 %v1123, %v1123
        %1125 = vadd.xlane.f32.xlu0 %v1124
        %v1126 = vpop.xlane.xlu0 %1125
        %v1127 = vmul.f32 %v1126, %v636
        %v1128 = vadd.f32 %v1127, 1e-05
        %v1129 = vrsqrt.pop %v1128
        %v1130 = vmul.f32 %v1123, %v1129
        %v1131 = vlaneseq
        %v1132 = vshrl.u32 %v1131, 7
        %v1133 = vsub.s32 1, %v1132
        %v1134 = vrot.slane %v1025, %v1133
        %v1135 = vmul.f32 %v1130, %v1134
        %v1136 = vlaneseq
        %v1137 = vshrl.u32 %v1136, 7
        %v1138 = vsub.s32 2, %v1137
        %v1139 = vrot.slane %v1025, %v1138
        %v1140 = vadd.f32 %v1135, %v1139
        %v1141 = vpack.c.bf16 %v1140, %v1140
        %v1143 = vlaneseq
        %v1144 = vshrl.u32 %v1143, 7
        %v1145 = vsub.s32 0, %v1144
        %v1146 = vrot.slane %v990, %v1145
        %v1147 = vlaneseq
        %v1148 = vshrl.u32 %v1147, 7
        %v1149 = vsub.s32 1, %v1148
        %v1150 = vrot.slane %v990, %v1149
        %v1169 = vunpack.c.l.b16 %v973
        %v1170 = vunpack.c.h.b16 %v973
        %v1171 = vunpack.c.l.b16 %v974
        %v1172 = vunpack.c.h.b16 %v974
        %v1173 = vunpack.c.l.b16 %v975
        %v1174 = vunpack.c.h.b16 %v975
        %v1175 = vunpack.c.l.b16 %v976
        %v1176 = vunpack.c.h.b16 %v976
        %v1177 = vunpack.c.l.b16 %v977
        %v1178 = vunpack.c.h.b16 %v977
        %v1179 = vunpack.c.l.b16 %v978
        %v1180 = vunpack.c.h.b16 %v978
        %v1181 = vunpack.c.l.b16 %v979
        %v1182 = vunpack.c.h.b16 %v979
        %v1183 = vunpack.c.l.b16 %v980
        %v1184 = vunpack.c.h.b16 %v980
        %v1185 = vunpack.c.l.b16 %v981
        %v1186 = vunpack.c.h.b16 %v981
        %v1187 = vunpack.c.l.b16 %v982
        %v1188 = vunpack.c.h.b16 %v982
        %v1189 = vunpack.c.l.b16 %v983
        %v1190 = vunpack.c.h.b16 %v983
        %v1191 = vunpack.c.l.b16 %v984
        %v1192 = vunpack.c.h.b16 %v984
        %v1193 = vunpack.c.l.b16 %v985
        %v1194 = vunpack.c.h.b16 %v985
        %v1195 = vunpack.c.l.b16 %v986
        %v1196 = vunpack.c.h.b16 %v986
        %v1197 = vunpack.c.l.b16 %v987
        %v1198 = vunpack.c.h.b16 %v987
        %v1199 = vunpack.c.l.b16 %v988
        %v1200 = vunpack.c.h.b16 %v988
        %v1201 = vpack.c.b16 %v1171, %v1169
        %v1202 = vpack.c.b16 %v1172, %v1170
        %v1203 = vpack.c.b16 %v1175, %v1173
        %v1204 = vpack.c.b16 %v1176, %v1174
        %v1205 = vpack.c.b16 %v1179, %v1177
        %v1206 = vpack.c.b16 %v1180, %v1178
        %v1207 = vpack.c.b16 %v1183, %v1181
        %v1208 = vpack.c.b16 %v1184, %v1182
        %v1209 = vpack.c.b16 %v1187, %v1185
        %v1210 = vpack.c.b16 %v1188, %v1186
        %v1211 = vpack.c.b16 %v1191, %v1189
        %v1212 = vpack.c.b16 %v1192, %v1190
        %v1213 = vpack.c.b16 %v1195, %v1193
        %v1214 = vpack.c.b16 %v1196, %v1194
        %v1215 = vpack.c.b16 %v1199, %v1197
        %v1216 = vpack.c.b16 %v1200, %v1198
        %1233 = vmatprep.subr.bf16.mxu0 %v1202
        %1234 = vmatpush1.bf16.msra.mxu0 %v1201
        %1235 = vmatprep.subr.bf16.mxu0 %v1204
        %1236 = vmatpush1.bf16.msra.mxu0 %v1203
        %1237 = vmatprep.subr.bf16.mxu0 %v1206
        %1238 = vmatpush1.bf16.msra.mxu0 %v1205
        %1239 = vmatprep.subr.bf16.mxu0 %v1208
        %1240 = vmatpush1.bf16.msra.mxu0 %v1207
        %1241 = vmatprep.subr.bf16.mxu0 %v1210
        %1242 = vmatpush1.bf16.msra.mxu0 %v1209
        %1243 = vmatprep.subr.bf16.mxu0 %v1212
        %1244 = vmatpush1.bf16.msra.mxu0 %v1211
        %1245 = vmatprep.subr.bf16.mxu0 %v1214
        %1246 = vmatpush1.bf16.msra.mxu0 %v1213
        %1247 = vmatprep.subr.bf16.mxu0 %v1216
        %1248 = vmatpush1.bf16.msra.mxu0 %v1215
        %1249 = vmatprep.subr.bf16.mxu0 0
        %1250 = vmatpush1.bf16.msra.mxu0 0
        %1251 = vmatprep.subr.bf16.mxu0 0
        %1252 = vmatpush1.bf16.msra.mxu0 0
        %1253 = vmatprep.subr.bf16.mxu0 0
        %1254 = vmatpush1.bf16.msra.mxu0 0
        %1255 = vmatprep.subr.bf16.mxu0 0
        %1256 = vmatpush1.bf16.msra.mxu0 0
        %1257 = vmatprep.subr.bf16.mxu0 0
        %1258 = vmatpush1.bf16.msra.mxu0 0
        %1259 = vmatprep.subr.bf16.mxu0 0
        %1260 = vmatpush1.bf16.msra.mxu0 0
        %1261 = vmatprep.subr.bf16.mxu0 0
        %1262 = vmatpush1.bf16.msra.mxu0 0
        %1263 = vmatprep.subr.bf16.mxu0 0
        %1264 = vmatpush1.bf16.msra.mxu0 0
        %1265 = vmatprep.mubr.bf16.mxu0 0
        %1266 = vmatmul.mubr.bf16.gmra.mrb[0].mxu0 %v1141
        %v1267 = vpop.f32.mrb[0].mxu0
        %v1268 = vadd.f32 %v1146, %v1267
        %v1269 = vpop.f32.mrb[0].mxu0
        %v1270 = vadd.f32 %v1150, %v1269
        %v1271 = vpop.f32.mrb[0].mxu0
        %v1272 = vpop.f32.mrb[0].mxu0
        %1273 = vdwg.mxu0
        %v1274 = vmax.f32 %v1268, 0.0
        %v1275 = vmax.f32 %v1270, 0.0
        %v1276 = vpack.c.bf16 %v1274, %v1274
        %v1277 = vpack.c.bf16 %v1275, %v1275
        %v1278 = vlaneseq
        %v1279 = vshrl.u32 %v1278, 7
        %v1280 = vsub.s32 3, %v1279
        %v1281 = vrot.slane %v1025, %v1280
        %v1314 = vunpack.c.l.b16 %v992
        %v1315 = vunpack.c.l.b16 %v993
        %v1316 = vunpack.c.l.b16 %v994
        %v1317 = vunpack.c.l.b16 %v995
        %v1318 = vunpack.c.l.b16 %v996
        %v1319 = vunpack.c.l.b16 %v997
        %v1320 = vunpack.c.l.b16 %v998
        %v1321 = vunpack.c.l.b16 %v999
        %v1322 = vunpack.c.l.b16 %v1000
        %v1323 = vunpack.c.l.b16 %v1001
        %v1324 = vunpack.c.l.b16 %v1002
        %v1325 = vunpack.c.l.b16 %v1003
        %v1326 = vunpack.c.l.b16 %v1004
        %v1327 = vunpack.c.l.b16 %v1005
        %v1328 = vunpack.c.l.b16 %v1006
        %v1329 = vunpack.c.l.b16 %v1007
        %v1330 = vunpack.c.l.b16 %v1008
        %v1331 = vunpack.c.l.b16 %v1009
        %v1332 = vunpack.c.l.b16 %v1010
        %v1333 = vunpack.c.l.b16 %v1011
        %v1334 = vunpack.c.l.b16 %v1012
        %v1335 = vunpack.c.l.b16 %v1013
        %v1336 = vunpack.c.l.b16 %v1014
        %v1337 = vunpack.c.l.b16 %v1015
        %v1338 = vunpack.c.l.b16 %v1016
        %v1339 = vunpack.c.l.b16 %v1017
        %v1340 = vunpack.c.l.b16 %v1018
        %v1341 = vunpack.c.l.b16 %v1019
        %v1342 = vunpack.c.l.b16 %v1020
        %v1343 = vunpack.c.l.b16 %v1021
        %v1344 = vunpack.c.l.b16 %v1022
        %v1345 = vunpack.c.l.b16 %v1023
        %v1346 = vpack.c.b16 %v1315, %v1314
        %v1347 = vpack.c.b16 %v1317, %v1316
        %v1348 = vpack.c.b16 %v1319, %v1318
        %v1349 = vpack.c.b16 %v1321, %v1320
        %v1350 = vpack.c.b16 %v1323, %v1322
        %v1351 = vpack.c.b16 %v1325, %v1324
        %v1352 = vpack.c.b16 %v1327, %v1326
        %v1353 = vpack.c.b16 %v1329, %v1328
        %v1354 = vpack.c.b16 %v1331, %v1330
        %v1355 = vpack.c.b16 %v1333, %v1332
        %v1356 = vpack.c.b16 %v1335, %v1334
        %v1357 = vpack.c.b16 %v1337, %v1336
        %v1358 = vpack.c.b16 %v1339, %v1338
        %v1359 = vpack.c.b16 %v1341, %v1340
        %v1360 = vpack.c.b16 %v1343, %v1342
        %v1361 = vpack.c.b16 %v1345, %v1344
        %1378 = vmatprep.subr.bf16.mxu0 0
        %1379 = vmatpush1.bf16.msra.mxu0 %v1346
        %1380 = vmatprep.subr.bf16.mxu0 0
        %1381 = vmatpush1.bf16.msra.mxu0 %v1347
        %1382 = vmatprep.subr.bf16.mxu0 0
        %1383 = vmatpush1.bf16.msra.mxu0 %v1348
        %1384 = vmatprep.subr.bf16.mxu0 0
        %1385 = vmatpush1.bf16.msra.mxu0 %v1349
        %1386 = vmatprep.subr.bf16.mxu0 0
        %1387 = vmatpush1.bf16.msra.mxu0 %v1350
        %1388 = vmatprep.subr.bf16.mxu0 0
        %1389 = vmatpush1.bf16.msra.mxu0 %v1351
        %1390 = vmatprep.subr.bf16.mxu0 0
        %1391 = vmatpush1.bf16.msra.mxu0 %v1352
        %1392 = vmatprep.subr.bf16.mxu0 0
        %1393 = vmatpush1.bf16.msra.mxu0 %v1353
        %1394 = vmatprep.subr.bf16.mxu0 0
        %1395 = vmatpush1.bf16.msra.mxu0 %v1354
        %1396 = vmatprep.subr.bf16.mxu0 0
        %1397 = vmatpush1.bf16.msra.mxu0 %v1355
        %1398 = vmatprep.subr.bf16.mxu0 0
        %1399 = vmatpush1.bf16.msra.mxu0 %v1356
        %1400 = vmatprep.subr.bf16.mxu0 0
        %1401 = vmatpush1.bf16.msra.mxu0 %v1357
        %1402 = vmatprep.subr.bf16.mxu0 0
        %1403 = vmatpush1.bf16.msra.mxu0 %v1358
        %1404 = vmatprep.subr.bf16.mxu0 0
        %1405 = vmatpush1.bf16.msra.mxu0 %v1359
        %1406 = vmatprep.subr.bf16.mxu0 0
        %1407 = vmatpush1.bf16.msra.mxu0 %v1360
        %1408 = vmatprep.subr.bf16.mxu0 0
        %1409 = vmatpush1.bf16.msra.mxu0 %v1361
        %1410 = vmatprep.mubr.bf16.mxu0 %v1277
        %1411 = vmatmul.mubr.bf16.gmra.mrb[0].mxu0 %v1276
        %v1412 = vpop.f32.mrb[0].mxu0
        %v1413 = vadd.f32 %v1281, %v1412
        %v1414 = vpop.f32.mrb[0].mxu0
        %v1415 = vpop.f32.mrb[0].mxu0
        %v1416 = vpop.f32.mrb[0].mxu0
        %1417 = vdwg.mxu0
        %v1418 = vadd.f32 %v1140, %v1413
        %1419 = vadd.xlane.f32.xlu0 %v1418
        %v1420 = vpop.xlane.xlu0 %1419
        %v1421 = vmul.f32 %v1420, %v636
        %v1422 = vsub.f32 %v1418, %v1421
        %v1423 = vmul.f32 %v1422, %v1422
        %1424 = vadd.xlane.f32.xlu0 %v1423
        %v1425 = vpop.xlane.xlu0 %1424
        %v1426 = vmul.f32 %v1425, %v636
        %v1427 = vadd.f32 %v1426, 1e-05
        %v1428 = vrsqrt.pop %v1427
        %v1429 = vmul.f32 %v1422, %v1428
        %v1430 = vlaneseq
        %v1431 = vshrl.u32 %v1430, 7
        %v1432 = vsub.s32 4, %v1431
        %v1433 = vrot.slane %v1025, %v1432
        %v1434 = vmul.f32 %v1429, %v1433
        %v1435 = vlaneseq
        %v1436 = vshrl.u32 %v1435, 7
        %v1437 = vsub.s32 5, %v1436
        %v1438 = vrot.slane %v1025, %v1437
        %v1439 = vadd.f32 %v1434, %v1438
        %1440 = vst [vmem:[%s355] sm:$0xff] %v1439
        %s1441 = sand.u32 %s206, 1
        %s1442 = scalar_lea.sflag [#allocation4], %s1441
        %s1443 = sand.u32 %s206, 1
        %s1444 = smul.addr %s1443, 8
        %s1445 = scalar_lea.vmem [#allocation10], %s1444
        // Predicated region
        $region69: #{tpu_custom_call.1} parent=51 // pred_check
          %p1446 = pneg %p216
        $region70: #{tpu_custom_call.1} parent=51 // pred_check_branch
          %1448 = sbr.rel (%p1446) target = $region72
        $region71: #{tpu_custom_call.1} parent=51 // pred_region
          %s1450 = ssub.s32 128, 128
          %1451 = vsyncadd %s1442, %s1450
          %s1452 = smul.addr %s25, 128
          %s1453 = scalar_lea.hbm %s8, %s1452
          %s1455 = sshll.u32 %s1445, 4
          %s1456 = int_to_ptr.vmem [resolvable:$true] %s1455
          %1458 = dma.vmem_to_hbm [thread:$0]  %s1456, 128, %s1453, %s1442
        $region72: #{tpu_custom_call.1} parent=51 // pred_fallthru
          _
      $region52: #{tpu_custom_call.1} parent=5 // pred_fallthru
        _
      %p1459 = scmp.le.s32.totalorder 2, %s20
      // Predicated region
      $region73: #{tpu_custom_call.1} parent=5 // pred_check
        %p1460 = pneg %p1459
      $region74: #{tpu_custom_call.1} parent=5 // pred_check_branch
        %1462 = sbr.rel (%p1460) target = $region76
      $region75: #{tpu_custom_call.1} parent=5 // pred_region
        %s1463 = ssub.s32 %s20, 2
        // Predicated region
        $region77: #{tpu_custom_call.1} parent=75 // pred_check
          %p1464 = pneg %p222
        $region78: #{tpu_custom_call.1} parent=75 // pred_check_branch
          %1466 = sbr.rel (%p1464) target = $region80
        $region79: #{tpu_custom_call.1} parent=75 // pred_region
          %s1467 = sand.u32 %s207, 1
          %s1468 = scalar_lea.sflag [#allocation4], %s1467
          %s1469 = sand.u32 %s207, 1
          %s1470 = smul.addr %s1469, 8
          %s1471 = scalar_lea.vmem [#allocation10], %s1470
          %1472 = dma.done %s1468, 128
        $region80: #{tpu_custom_call.1} parent=75 // pred_fallthru
          _
      $region76: #{tpu_custom_call.1} parent=5 // pred_fallthru
        _
    $region6: #{tpu_custom_call.1} parent=1 // loop_footer
      %s24 = sadd.s32 1, %s20
    $region7: #{tpu_custom_call.1} parent=1 // loop_footer_branch
      %19 = sbr.rel target = $region3
    $region8: #{tpu_custom_call.1} parent=1 // loop_exit
      _
    %1473 = vsyncpa [#allocation3], 1
    %s1474 = scalar_lea.sflag [#allocation3], 1
    %1475 = vsyncpa %s1474, 1
    %1476 = vsyncpa [#allocation6], 1
    %1477 = vsyncpa [#allocation9], 1
    %1478 = vsyncpa [#allocation4], 1
    %s1479 = scalar_lea.sflag [#allocation4], 1
    %1480 = vsyncpa %s1479, 1

// kernel: tpu_custom_call.1
$region0: #{tpu_custom_call.1}
  #allocation0 [shape = 'u32[]', space=smem, size = 0x4, offset = 0x4, fixed_abs, tag = 'smem constant byte address 0x4 - core index']
  #allocation1 [shape = 'u32[144,128]{1,0:T(1,128)}', space=vmem, size = 0x12000, scoped, tag = 'internal scratch']
  %s0 = inlined_call_operand.vmem [shape: f32[16,128], index: 0, kind: input, shape index: {}]
  %s1 = inlined_call_operand.hbm [shape: bf16[128,128], index: 1, kind: input, shape index: {}]
  %s2 = inlined_call_operand.vmem [shape: f32[1,128], index: 2, kind: input, shape index: {}]
  %s3 = inlined_call_operand.hbm [shape: bf16[2,128,128], index: 3, kind: input, shape index: {}]
  %s4 = inlined_call_operand.hbm [shape: bf16[2,128,256], index: 4, kind: input, shape index: {}]
  %s5 = inlined_call_operand.vmem [shape: f32[2,1,256], index: 5, kind: input, shape index: {}]
  %s6 = inlined_call_operand.hbm [shape: bf16[2,256,128], index: 6, kind: input, shape index: {}]
  %s7 = inlined_call_operand.vmem [shape: f32[2,6,128], index: 7, kind: input, shape index: {}]
  %s8 = inlined_call_operand.hbm [shape: f32[16,128], index: 8, kind: output, shape index: {}]
  %s9 = sld [smem:[#allocation0]]
  $region81: #{tpu_custom_call.1} parent=0
    _
  %s11 = ssub.s32 1, %s9
  %s12 = scalar_select 0, %s11, %s9
  $region1: #{tpu_custom_call.1} parent=0
    #allocation2 [shape = 'u8[32768]{0}', space=vmem, size = 0x8000, scoped, tag = 'input window, operand 1, single buffered']
    #allocation3 [shape = 's32[2]{0}', space=sflag, size = 0x8, scoped, tag = 'scoped memory for tpu_custom_call.1']
    #allocation4 [shape = 's32[2]{0}', space=sflag, size = 0x8, scoped, tag = 'scoped memory for tpu_custom_call.1']
    #allocation5 [shape = 'u8[65536]{0}', space=vmem, size = 0x10000, scoped, tag = 'input window, operand 3, single buffered']
    #allocation6 [shape = 's32[1]{0}', space=sflag, size = 0x4, scoped, tag = 'scoped memory for tpu_custom_call.1']
    #allocation7 [shape = 'u8[131072]{0}', space=vmem, size = 0x20000, scoped, tag = 'input window, operand 4, single buffered']
    #allocation8 [shape = 'u8[131072]{0}', space=vmem, size = 0x20000, scoped, tag = 'input window, operand 6, single buffered']
    #allocation9 [shape = 's32[1]{0}', space=sflag, size = 0x4, scoped, tag = 'scoped memory for tpu_custom_call.1']
    #allocation10 [shape = 'u8[8192]{0}', space=vmem, size = 0x2000, scoped, tag = 'output window, operand 0']
    %13 = vsyncpa [#allocation3], 0
    %14 = vsyncpa [#allocation6], 0
    %15 = vsyncpa [#allocation9], 0
    %16 = vsyncpa [#allocation4], 0
    %s17 = scalar_lea.sflag [#allocation4], 1
    %18 = vsyncpa %s17, 0
    loop: start=0, step=1, limit=4
    $region2: #{tpu_custom_call.1} parent=1 // loop_pre_header
      _
    $region3: #{tpu_custom_call.1} parent=1 // loop_header
      %s20 = sphi 0, %s24
      %p21 = scmp.ge.s32.totalorder %s20, 4
      %s30 = sphi 0, %s32
      %s33 = sphi 0, %s30
      %s34 = sphi 0, %s33
      %s50 = sphi 0, %s34
      %s54 = sphi 0, %s54
      %s56 = sphi 0, %s54
      %s57 = sphi 0, %s56
      %s71 = sphi 0, %s57
      %s75 = sphi 0, %s75
      %s77 = sphi 0, %s75
      %s78 = sphi 0, %s77
      %s92 = sphi 0, %s78
      %s96 = sphi 0, %s96
      %s98 = sphi 0, %s96
      %s99 = sphi 0, %s98
      %s113 = sphi 0, %s99
      %s117 = sphi 0, %s117
      %s119 = sphi 0, %s117
      %s120 = sphi 0, %s119
      %s134 = sphi 0, %s120
      %s138 = sphi 0, %s138
      %s140 = sphi 0, %s138
      %s141 = sphi 0, %s140
      %s155 = sphi 0, %s141
      %s159 = sphi 0, %s159
      %s161 = sphi 0, %s159
      %s162 = sphi 0, %s161
      %s176 = sphi 0, %s162
      %s180 = sphi 0, %s180
      %s182 = sphi 0, %s180
      %s183 = sphi 0, %s182
      %s197 = sphi 0, %s183
      %s203 = sphi 0, %s205
      %s206 = sphi 0, %s203
      %s207 = sphi 0, %s206
      %s223 = sphi 0, %s207
    $region4: #{tpu_custom_call.1} parent=1 // loop_header_branch
      %23 = sbr.rel (%p21) target = $region8
    $region5: #{tpu_custom_call.1} parent=1 // loop_body
      %s25 = ssub.s32 %s20, 1
      %s26 = ssub.s32 %s20, 2
      %s27 = sadd.s32 %s20, 1
      %s28 = ssub.s32 %s20, %s27
      %p29 = scmp.eq.s32.totalorder %s28, 0
      %s31 = sadd.s32 %s30, 1
      %s32 = scalar_select %p29, %s30, %s31
      %p35 = pneg %p29
      %p36 = scmp.eq.s32.totalorder %s20, 1
      %p37 = por %p35, %p36
      %p38 = scmp.ne.s32.totalorder %s30, %s33
      %p39 = scmp.eq.s32.totalorder %s20, 0
      %p40 = por %p38, %p39
      %p41 = scmp.ne.s32.totalorder %s30, %s33
      %p42 = scmp.eq.s32.totalorder %s25, 1
      %p43 = por %p41, %p42
      %p44 = scmp.ne.s32.totalorder %s33, %s34
      %p45 = scmp.eq.s32.totalorder %s25, 0
      %p46 = por %p44, %p45
      %p47 = scmp.ne.s32.totalorder %s33, %s34
      %p48 = scmp.eq.s32.totalorder %s26, 1
      %p49 = por %p47, %p48
      %p51 = scmp.ne.s32.totalorder %s34, %s50
      %p52 = scmp.eq.s32.totalorder %s26, 0
      %p53 = por %p51, %p52
      %s55 = sadd.s32 %s54, 1
      %p58 = scmp.eq.s32.totalorder %s20, 1
      %p59 = scmp.ne.s32.totalorder %s54, %s56
      %p60 = scmp.eq.s32.totalorder %s20, 0
      %p61 = por %p59, %p60
      %p62 = scmp.ne.s32.totalorder %s54, %s56
      %p63 = scmp.eq.s32.totalorder %s25, 1
      %p64 = por %p62, %p63
      %p65 = scmp.ne.s32.totalorder %s56, %s57
      %p66 = scmp.eq.s32.totalorder %s25, 0
      %p67 = por %p65, %p66
      %p68 = scmp.ne.s32.totalorder %s56, %s57
      %p69 = scmp.eq.s32.totalorder %s26, 1
      %p70 = por %p68, %p69
      %p72 = scmp.ne.s32.totalorder %s57, %s71
      %p73 = scmp.eq.s32.totalorder %s26, 0
      %p74 = por %p72, %p73
      %s76 = sadd.s32 %s75, 1
      %p79 = scmp.eq.s32.totalorder %s20, 1
      %p80 = scmp.ne.s32.totalorder %s75, %s77
      %p81 = scmp.eq.s32.totalorder %s20, 0
      %p82 = por %p80, %p81
      %p83 = scmp.ne.s32.totalorder %s75, %s77
      %p84 = scmp.eq.s32.totalorder %s25, 1
      %p85 = por %p83, %p84
      %p86 = scmp.ne.s32.totalorder %s77, %s78
      %p87 = scmp.eq.s32.totalorder %s25, 0
      %p88 = por %p86, %p87
      %p89 = scmp.ne.s32.totalorder %s77, %s78
      %p90 = scmp.eq.s32.totalorder %s26, 1
      %p91 = por %p89, %p90
      %p93 = scmp.ne.s32.totalorder %s78, %s92
      %p94 = scmp.eq.s32.totalorder %s26, 0
      %p95 = por %p93, %p94
      %s97 = sadd.s32 %s96, 1
      %p100 = scmp.eq.s32.totalorder %s20, 1
      %p101 = scmp.ne.s32.totalorder %s96, %s98
      %p102 = scmp.eq.s32.totalorder %s20, 0
      %p103 = por %p101, %p102
      %p104 = scmp.ne.s32.totalorder %s96, %s98
      %p105 = scmp.eq.s32.totalorder %s25, 1
      %p106 = por %p104, %p105
      %p107 = scmp.ne.s32.totalorder %s98, %s99
      %p108 = scmp.eq.s32.totalorder %s25, 0
      %p109 = por %p107, %p108
      %p110 = scmp.ne.s32.totalorder %s98, %s99
      %p111 = scmp.eq.s32.totalorder %s26, 1
      %p112 = por %p110, %p111
      %p114 = scmp.ne.s32.totalorder %s99, %s113
      %p115 = scmp.eq.s32.totalorder %s26, 0
      %p116 = por %p114, %p115
      %s118 = sadd.s32 %s117, 1
      %p121 = scmp.eq.s32.totalorder %s20, 1
      %p122 = scmp.ne.s32.totalorder %s117, %s119
      %p123 = scmp.eq.s32.totalorder %s20, 0
      %p124 = por %p122, %p123
      %p125 = scmp.ne.s32.totalorder %s117, %s119
      %p126 = scmp.eq.s32.totalorder %s25, 1
      %p127 = por %p125, %p126
      %p128 = scmp.ne.s32.totalorder %s119, %s120
      %p129 = scmp.eq.s32.totalorder %s25, 0
      %p130 = por %p128, %p129
      %p131 = scmp.ne.s32.totalorder %s119, %s120
      %p132 = scmp.eq.s32.totalorder %s26, 1
      %p133 = por %p131, %p132
      %p135 = scmp.ne.s32.totalorder %s120, %s134
      %p136 = scmp.eq.s32.totalorder %s26, 0
      %p137 = por %p135, %p136
      %s139 = sadd.s32 %s138, 1
      %p142 = scmp.eq.s32.totalorder %s20, 1
      %p143 = scmp.ne.s32.totalorder %s138, %s140
      %p144 = scmp.eq.s32.totalorder %s20, 0
      %p145 = por %p143, %p144
      %p146 = scmp.ne.s32.totalorder %s138, %s140
      %p147 = scmp.eq.s32.totalorder %s25, 1
      %p148 = por %p146, %p147
      %p149 = scmp.ne.s32.totalorder %s140, %s141
      %p150 = scmp.eq.s32.totalorder %s25, 0
      %p151 = por %p149, %p150
      %p152 = scmp.ne.s32.totalorder %s140, %s141
      %p153 = scmp.eq.s32.totalorder %s26, 1
      %p154 = por %p152, %p153
      %p156 = scmp.ne.s32.totalorder %s141, %s155
      %p157 = scmp.eq.s32.totalorder %s26, 0
      %p158 = por %p156, %p157
      %s160 = sadd.s32 %s159, 1
      %p163 = scmp.eq.s32.totalorder %s20, 1
      %p164 = scmp.ne.s32.totalorder %s159, %s161
      %p165 = scmp.eq.s32.totalorder %s20, 0
      %p166 = por %p164, %p165
      %p167 = scmp.ne.s32.totalorder %s159, %s161
      %p168 = scmp.eq.s32.totalorder %s25, 1
      %p169 = por %p167, %p168
      %p170 = scmp.ne.s32.totalorder %s161, %s162
      %p171 = scmp.eq.s32.totalorder %s25, 0
      %p172 = por %p170, %p171
      %p173 = scmp.ne.s32.totalorder %s161, %s162
      %p174 = scmp.eq.s32.totalorder %s26, 1
      %p175 = por %p173, %p174
      %p177 = scmp.ne.s32.totalorder %s162, %s176
      %p178 = scmp.eq.s32.totalorder %s26, 0
      %p179 = por %p177, %p178
      %s181 = sadd.s32 %s180, 1
      %p184 = scmp.eq.s32.totalorder %s20, 1
      %p185 = scmp.ne.s32.totalorder %s180, %s182
      %p186 = scmp.eq.s32.totalorder %s20, 0
      %p187 = por %p185, %p186
      %p188 = scmp.ne.s32.totalorder %s180, %s182
      %p189 = scmp.eq.s32.totalorder %s25, 1
      %p190 = por %p188, %p189
      %p191 = scmp.ne.s32.totalorder %s182, %s183
      %p192 = scmp.eq.s32.totalorder %s25, 0
      %p193 = por %p191, %p192
      %p194 = scmp.ne.s32.totalorder %s182, %s183
      %p195 = scmp.eq.s32.totalorder %s26, 1
      %p196 = por %p194, %p195
      %p198 = scmp.ne.s32.totalorder %s183, %s197
      %p199 = scmp.eq.s32.totalorder %s26, 0
      %p200 = por %p198, %p199
      %s201 = ssub.s32 %s20, %s27
      %p202 = scmp.eq.s32.totalorder %s201, 0
      %s204 = sadd.s32 %s203, 1
      %s205 = scalar_select %p202, %s203, %s204
      %p208 = pneg %p202
      %p209 = scmp.eq.s32.totalorder %s20, 1
      %p210 = por %p208, %p209
      %p211 = scmp.ne.s32.totalorder %s203, %s206
      %p212 = scmp.eq.s32.totalorder %s20, 0
      %p213 = por %p211, %p212
      %p214 = scmp.ne.s32.totalorder %s203, %s206
      %p215 = scmp.eq.s32.totalorder %s25, 1
      %p216 = por %p214, %p215
      %p217 = scmp.ne.s32.totalorder %s206, %s207
      %p218 = scmp.eq.s32.totalorder %s25, 0
      %p219 = por %p217, %p218
      %p220 = scmp.ne.s32.totalorder %s206, %s207
      %p221 = scmp.eq.s32.totalorder %s26, 1
      %p222 = por %p220, %p221
      %p224 = scmp.ne.s32.totalorder %s207, %s223
      %p225 = scmp.eq.s32.totalorder %s26, 0
      %p226 = por %p224, %p225
      %p227 = scmp.le.s32.totalorder 1, %s20
      %p228 = scmp.lt.s32.totalorder %s20, 3
      %p229 = pnand %p227, %p228
      %p230 = pneg %p229
      // Predicated region
      $region9: #{tpu_custom_call.1} parent=5 // pred_check
        _
      $region10: #{tpu_custom_call.1} parent=5 // pred_check_branch
        %232 = sbr.rel (%p229) target = $region12
      $region11: #{tpu_custom_call.1} parent=5 // pred_region
        %s233 = ssub.s32 %s20, 1
        // Predicated region
        $region13: #{tpu_custom_call.1} parent=11 // pred_check
          %p234 = pneg %p67
        $region14: #{tpu_custom_call.1} parent=11 // pred_check_branch
          %236 = sbr.rel (%p234) target = $region16
        $region15: #{tpu_custom_call.1} parent=11 // pred_region
          %s238 = ssub.s32 1024, 1024
          %239 = vsyncadd [#allocation3], %s238
          %s240 = sshll.u32 [#allocation2], 4
          %s241 = int_to_ptr.vmem [resolvable:$true] %s240
          %246 = dma.hbm_to_vmem [thread:$0]  %s1, 1024, %s241, [#allocation3], 64, 64, 4
        $region16: #{tpu_custom_call.1} parent=11 // pred_fallthru
          _
        // Predicated region
        $region17: #{tpu_custom_call.1} parent=11 // pred_check
          %p247 = pneg %p88
        $region18: #{tpu_custom_call.1} parent=11 // pred_check_branch
          %249 = sbr.rel (%p247) target = $region20
        $region19: #{tpu_custom_call.1} parent=11 // pred_region
          _
        $region20: #{tpu_custom_call.1} parent=11 // pred_fallthru
          _
        // Predicated region
        $region21: #{tpu_custom_call.1} parent=11 // pred_check
          %p250 = pneg %p109
        $region22: #{tpu_custom_call.1} parent=11 // pred_check_branch
          %252 = sbr.rel (%p250) target = $region24
        $region23: #{tpu_custom_call.1} parent=11 // pred_region
          %s254 = ssub.s32 2048, 2048
          %255 = vsyncadd [#allocation6], %s254
          %s256 = sshll.u32 [#allocation5], 4
          %s257 = int_to_ptr.vmem [resolvable:$true] %s256
          %262 = dma.hbm_to_vmem [thread:$0]  %s3, 2048, %s257, [#allocation6], 64, 64, 4
        $region24: #{tpu_custom_call.1} parent=11 // pred_fallthru
          _
        // Predicated region
        $region25: #{tpu_custom_call.1} parent=11 // pred_check
          %p263 = pneg %p130
        $region26: #{tpu_custom_call.1} parent=11 // pred_check_branch
          %265 = sbr.rel (%p263) target = $region28
        $region27: #{tpu_custom_call.1} parent=11 // pred_region
          %s267 = ssub.s32 4096, 4096
          %268 = vsyncadd [#allocation6], %s267
          %s269 = sshll.u32 [#allocation7], 4
          %s270 = int_to_ptr.vmem [resolvable:$true] %s269
          %275 = dma.hbm_to_vmem [thread:$0]  %s4, 4096, %s270, [#allocation6], 128, 128, 8
        $region28: #{tpu_custom_call.1} parent=11 // pred_fallthru
          _
        // Predicated region
        $region29: #{tpu_custom_call.1} parent=11 // pred_check
          %p276 = pneg %p151
        $region30: #{tpu_custom_call.1} parent=11 // pred_check_branch
          %278 = sbr.rel (%p276) target = $region32
        $region31: #{tpu_custom_call.1} parent=11 // pred_region
          _
        $region32: #{tpu_custom_call.1} parent=11 // pred_fallthru
          _
        // Predicated region
        $region33: #{tpu_custom_call.1} parent=11 // pred_check
          %p279 = pneg %p172
        $region34: #{tpu_custom_call.1} parent=11 // pred_check_branch
          %281 = sbr.rel (%p279) target = $region36
        $region35: #{tpu_custom_call.1} parent=11 // pred_region
          %s283 = ssub.s32 4096, 4096
          %284 = vsyncadd [#allocation9], %s283
          %s285 = sshll.u32 [#allocation8], 4
          %s286 = int_to_ptr.vmem [resolvable:$true] %s285
          %291 = dma.hbm_to_vmem [thread:$0]  %s6, 4096, %s286, [#allocation9], 64, 64, 4
        $region36: #{tpu_custom_call.1} parent=11 // pred_fallthru
          _
        // Predicated region
        $region37: #{tpu_custom_call.1} parent=11 // pred_check
          %p292 = pneg %p193
        $region38: #{tpu_custom_call.1} parent=11 // pred_check_branch
          %294 = sbr.rel (%p292) target = $region40
        $region39: #{tpu_custom_call.1} parent=11 // pred_region
          _
        $region40: #{tpu_custom_call.1} parent=11 // pred_fallthru
          _
      $region12: #{tpu_custom_call.1} parent=5 // pred_fallthru
        _
      %p295 = scmp.lt.s32.totalorder %s20, 2
      // Predicated region
      $region41: #{tpu_custom_call.1} parent=5 // pred_check
        %p296 = pneg %p295
      $region42: #{tpu_custom_call.1} parent=5 // pred_check_branch
        %298 = sbr.rel (%p296) target = $region44
      $region43: #{tpu_custom_call.1} parent=5 // pred_region
        // Predicated region
        $region45: #{tpu_custom_call.1} parent=43 // pred_check
          %p299 = pneg %p40
        $region46: #{tpu_custom_call.1} parent=43 // pred_check_branch
          %301 = sbr.rel (%p299) target = $region48
        $region47: #{tpu_custom_call.1} parent=43 // pred_region
          %p302 = scmp.lt.s32.totalorder %s20, 1
          %s303 = scalar_select %p302, %s20, 1
          %s304 = smul.addr %s303, 8
          %s305 = scalar_lea.vmem %s0, %s304
        $region48: #{tpu_custom_call.1} parent=43 // pred_fallthru
          _
      $region44: #{tpu_custom_call.1} parent=5 // pred_fallthru
        _
      %p306 = scmp.le.s32.totalorder 1, %s20
      %p307 = scmp.lt.s32.totalorder %s20, 3
      %p308 = pnand %p306, %p307
      %p309 = pneg %p308
      // Predicated region
      $region49: #{tpu_custom_call.1} parent=5 // pred_check
        _
      $region50: #{tpu_custom_call.1} parent=5 // pred_check_branch
        %311 = sbr.rel (%p308) target = $region52
      $region51: #{tpu_custom_call.1} parent=5 // pred_region
        %s312 = ssub.s32 %s20, 1
        // Predicated region
        $region53: #{tpu_custom_call.1} parent=51 // pred_check
          %p313 = pneg %p67
        $region54: #{tpu_custom_call.1} parent=51 // pred_check_branch
          %315 = sbr.rel (%p313) target = $region56
        $region55: #{tpu_custom_call.1} parent=51 // pred_region
          %316 = dma.done [#allocation3], 1024
        $region56: #{tpu_custom_call.1} parent=51 // pred_fallthru
          _
        // Predicated region
        $region57: #{tpu_custom_call.1} parent=51 // pred_check
          %p317 = pneg %p109
        $region58: #{tpu_custom_call.1} parent=51 // pred_check_branch
          %319 = sbr.rel (%p317) target = $region60
        $region59: #{tpu_custom_call.1} parent=51 // pred_region
          %320 = dma.done [#allocation6], 2048
        $region60: #{tpu_custom_call.1} parent=51 // pred_fallthru
          _
        // Predicated region
        $region61: #{tpu_custom_call.1} parent=51 // pred_check
          %p321 = pneg %p130
        $region62: #{tpu_custom_call.1} parent=51 // pred_check_branch
          %323 = sbr.rel (%p321) target = $region64
        $region63: #{tpu_custom_call.1} parent=51 // pred_region
          %324 = dma.done [#allocation6], 4096
        $region64: #{tpu_custom_call.1} parent=51 // pred_fallthru
          _
        // Predicated region
        $region65: #{tpu_custom_call.1} parent=51 // pred_check
          %p325 = pneg %p172
        $region66: #{tpu_custom_call.1} parent=51 // pred_check_branch
          %327 = sbr.rel (%p325) target = $region68
        $region67: #{tpu_custom_call.1} parent=51 // pred_region
          %328 = dma.done [#allocation9], 4096
        $region68: #{tpu_custom_call.1} parent=51 // pred_fallthru
          _
        %p329 = scmp.lt.s32.totalorder %s25, 1
        %s330 = scalar_select %p329, %s25, 1
        %s331 = smul.addr %s330, 8
        %s332 = scalar_lea.vmem %s0, %s331
        %p333 = pneg %p46
        %p334 = pneg %p43
        %p335 = pneg %p67
        %p336 = pneg %p64
        %p337 = pneg %p88
        %p338 = pneg %p85
        %p339 = pneg %p109
        %p340 = pneg %p106
        %p341 = pneg %p130
        %p342 = pneg %p127
        %p343 = pneg %p151
        %p344 = pneg %p148
        %p345 = pneg %p172
        %p346 = pneg %p169
        %p347 = pneg %p193
        %p348 = pneg %p190
        %p349 = pneg %p219
        %p350 = pneg %p216
        %s351 = sand.u32 %s206, 1
        %s352 = scalar_lea.sflag [#allocation4], %s351
        %s353 = sand.u32 %s206, 1
        %s354 = smul.addr %s353, 8
        %s355 = scalar_lea.vmem [#allocation10], %s354
        %p356 = scmp.lt.s32.totalorder %s25, 1
        %s357 = scalar_select %p356, %s25, 1
        %s358 = smul.addr %s357, 8
        %s359 = scalar_lea.vmem %s0, %s358
        %v361 = vld [vmem:[%s359] sm:$0xff]
        %v362 = vpack.c.bf16 %v361, %v361
        %v363 = vld [vmem:[#allocation2] sm:$0xf]
        %v364 = vld [vmem:[#allocation2 + $0x4] sm:$0xf]
        %v365 = vld [vmem:[#allocation2 + $0x8] sm:$0xf]
        %v366 = vld [vmem:[#allocation2 + $0xc] sm:$0xf]
        %v367 = vld [vmem:[#allocation2 + $0x10] sm:$0xf]
        %v368 = vld [vmem:[#allocation2 + $0x14] sm:$0xf]
        %v369 = vld [vmem:[#allocation2 + $0x18] sm:$0xf]
        %v370 = vld [vmem:[#allocation2 + $0x1c] sm:$0xf]
        %v371 = vld [vmem:[#allocation2 + $0x20] sm:$0xf]
        %v372 = vld [vmem:[#allocation2 + $0x24] sm:$0xf]
        %v373 = vld [vmem:[#allocation2 + $0x28] sm:$0xf]
        %v374 = vld [vmem:[#allocation2 + $0x2c] sm:$0xf]
        %v375 = vld [vmem:[#allocation2 + $0x30] sm:$0xf]
        %v376 = vld [vmem:[#allocation2 + $0x34] sm:$0xf]
        %v377 = vld [vmem:[#allocation2 + $0x38] sm:$0xf]
        %v378 = vld [vmem:[#allocation2 + $0x3c] sm:$0xf]
        %v379 = vld [vmem:[%s2] sm:$0x1]
        %v381 = vlaneseq
        %v382 = vshrl.u32 %v381, 7
        %v383 = vsub.s32 0, %v382
        %v384 = vrot.slane %v379, %v383
        %v402 = vunpack.c.l.b16 %v363
        %v403 = vunpack.c.l.b16 %v364
        %v404 = vunpack.c.l.b16 %v365
        %v405 = vunpack.c.l.b16 %v366
        %v406 = vunpack.c.l.b16 %v367
        %v407 = vunpack.c.l.b16 %v368
        %v408 = vunpack.c.l.b16 %v369
        %v409 = vunpack.c.l.b16 %v370
        %v410 = vunpack.c.l.b16 %v371
        %v411 = vunpack.c.l.b16 %v372
        %v412 = vunpack.c.l.b16 %v373
        %v413 = vunpack.c.l.b16 %v374
        %v414 = vunpack.c.l.b16 %v375
        %v415 = vunpack.c.l.b16 %v376
        %v416 = vunpack.c.l.b16 %v377
        %v417 = vunpack.c.l.b16 %v378
        %v418 = vpack.c.b16 %v403, %v402
        %v419 = vpack.c.b16 %v405, %v404
        %v420 = vpack.c.b16 %v407, %v406
        %v421 = vpack.c.b16 %v409, %v408
        %v422 = vpack.c.b16 %v411, %v410
        %v423 = vpack.c.b16 %v413, %v412
        %v424 = vpack.c.b16 %v415, %v414
        %v425 = vpack.c.b16 %v417, %v416
        %434 = vmatprep.subr.bf16.mxu0 0
        %435 = vmatpush1.bf16.msra.mxu0 %v418
        %436 = vmatprep.subr.bf16.mxu0 0
        %437 = vmatpush1.bf16.msra.mxu0 %v419
        %438 = vmatprep.subr.bf16.mxu0 0
        %439 = vmatpush1.bf16.msra.mxu0 %v420
        %440 = vmatprep.subr.bf16.mxu0 0
        %441 = vmatpush1.bf16.msra.mxu0 %v421
        %442 = vmatprep.subr.bf16.mxu0 0
        %443 = vmatpush1.bf16.msra.mxu0 %v422
        %444 = vmatprep.subr.bf16.mxu0 0
        %445 = vmatpush1.bf16.msra.mxu0 %v423
        %446 = vmatprep.subr.bf16.mxu0 0
        %447 = vmatpush1.bf16.msra.mxu0 %v424
        %448 = vmatprep.subr.bf16.mxu0 0
        %449 = vmatpush1.bf16.msra.mxu0 %v425
        %450 = vmatprep.subr.bf16.mxu0 0
        %451 = vmatpush1.bf16.msra.mxu0 0
        %452 = vmatprep.subr.bf16.mxu0 0
        %453 = vmatpush1.bf16.msra.mxu0 0
        %454 = vmatprep.subr.bf16.mxu0 0
        %455 = vmatpush1.bf16.msra.mxu0 0
        %456 = vmatprep.subr.bf16.mxu0 0
        %457 = vmatpush1.bf16.msra.mxu0 0
        %458 = vmatprep.subr.bf16.mxu0 0
        %459 = vmatpush1.bf16.msra.mxu0 0
        %460 = vmatprep.subr.bf16.mxu0 0
        %461 = vmatpush1.bf16.msra.mxu0 0
        %462 = vmatprep.subr.bf16.mxu0 0
        %463 = vmatpush1.bf16.msra.mxu0 0
        %464 = vmatprep.subr.bf16.mxu0 0
        %465 = vmatpush1.bf16.msra.mxu0 0
        %466 = vmatprep.mubr.bf16.mxu0 0
        %467 = vmatmul.mubr.bf16.gmra.mrb[0].mxu0 %v362
        %v468 = vpop.f32.mrb[0].mxu0
        %v469 = vadd.f32 %v384, %v468
        %v470 = vpop.f32.mrb[0].mxu0
        %v471 = vpop.f32.mrb[0].mxu0
        %v472 = vpop.f32.mrb[0].mxu0
        %473 = vdwg.mxu0
        %v474 = vld [vmem:[#allocation5] sm:$0xf]
        %v475 = vld [vmem:[#allocation5 + $0x4] sm:$0xf]
        %v476 = vld [vmem:[#allocation5 + $0x8] sm:$0xf]
        %v477 = vld [vmem:[#allocation5 + $0xc] sm:$0xf]
        %v478 = vld [vmem:[#allocation5 + $0x10] sm:$0xf]
        %v479 = vld [vmem:[#allocation5 + $0x14] sm:$0xf]
        %v480 = vld [vmem:[#allocation5 + $0x18] sm:$0xf]
        %v481 = vld [vmem:[#allocation5 + $0x1c] sm:$0xf]
        %v482 = vld [vmem:[#allocation5 + $0x20] sm:$0xf]
        %v483 = vld [vmem:[#allocation5 + $0x24] sm:$0xf]
        %v484 = vld [vmem:[#allocation5 + $0x28] sm:$0xf]
        %v485 = vld [vmem:[#allocation5 + $0x2c] sm:$0xf]
        %v486 = vld [vmem:[#allocation5 + $0x30] sm:$0xf]
        %v487 = vld [vmem:[#allocation5 + $0x34] sm:$0xf]
        %v488 = vld [vmem:[#allocation5 + $0x38] sm:$0xf]
        %v489 = vld [vmem:[#allocation5 + $0x3c] sm:$0xf]
        %v490 = vld [vmem:[#allocation7] sm:$0xff]
        %v491 = vld [vmem:[#allocation7 + $0x8] sm:$0xff]
        %v492 = vld [vmem:[#allocation7 + $0x10] sm:$0xff]
        %v493 = vld [vmem:[#allocation7 + $0x18] sm:$0xff]
        %v494 = vld [vmem:[#allocation7 + $0x20] sm:$0xff]
        %v495 = vld [vmem:[#allocation7 + $0x28] sm:$0xff]
        %v496 = vld [vmem:[#allocation7 + $0x30] sm:$0xff]
        %v497 = vld [vmem:[#allocation7 + $0x38] sm:$0xff]
        %v498 = vld [vmem:[#allocation7 + $0x40] sm:$0xff]
        %v499 = vld [vmem:[#allocation7 + $0x48] sm:$0xff]
        %v500 = vld [vmem:[#allocation7 + $0x50] sm:$0xff]
        %v501 = vld [vmem:[#allocation7 + $0x58] sm:$0xff]
        %v502 = vld [vmem:[#allocation7 + $0x60] sm:$0xff]
        %v503 = vld [vmem:[#allocation7 + $0x68] sm:$0xff]
        %v504 = vld [vmem:[#allocation7 + $0x70] sm:$0xff]
        %v505 = vld [vmem:[#allocation7 + $0x78] sm:$0xff]
        %v506 = vld [vmem:[%s5] sm:$0x3]
        %v507 = vld [vmem:[#allocation8] sm:$0xf]
        %v508 = vld [vmem:[#allocation8 + $0x4] sm:$0xf]
        %v509 = vld [vmem:[#allocation8 + $0x8] sm:$0xf]
        %v510 = vld [vmem:[#allocation8 + $0xc] sm:$0xf]
        %v511 = vld [vmem:[#allocation8 + $0x10] sm:$0xf]
        %v512 = vld [vmem:[#allocation8 + $0x14] sm:$0xf]
        %v513 = vld [vmem:[#allocation8 + $0x18] sm:$0xf]
        %v514 = vld [vmem:[#allocation8 + $0x1c] sm:$0xf]
        %v515 = vld [vmem:[#allocation8 + $0x20] sm:$0xf]
        %v516 = vld [vmem:[#allocation8 + $0x24] sm:$0xf]
        %v517 = vld [vmem:[#allocation8 + $0x28] sm:$0xf]
        %v518 = vld [vmem:[#allocation8 + $0x2c] sm:$0xf]
        %v519 = vld [vmem:[#allocation8 + $0x30] sm:$0xf]
        %v520 = vld [vmem:[#allocation8 + $0x34] sm:$0xf]
        %v521 = vld [vmem:[#allocation8 + $0x38] sm:$0xf]
        %v522 = vld [vmem:[#allocation8 + $0x3c] sm:$0xf]
        %v523 = vld [vmem:[#allocation8 + $0x40] sm:$0xf]
        %v524 = vld [vmem:[#allocation8 + $0x44] sm:$0xf]
        %v525 = vld [vmem:[#allocation8 + $0x48] sm:$0xf]
        %v526 = vld [vmem:[#allocation8 + $0x4c] sm:$0xf]
        %v527 = vld [vmem:[#allocation8 + $0x50] sm:$0xf]
        %v528 = vld [vmem:[#allocation8 + $0x54] sm:$0xf]
        %v529 = vld [vmem:[#allocation8 + $0x58] sm:$0xf]
        %v530 = vld [vmem:[#allocation8 + $0x5c] sm:$0xf]
        %v531 = vld [vmem:[#allocation8 + $0x60] sm:$0xf]
        %v532 = vld [vmem:[#allocation8 + $0x64] sm:$0xf]
        %v533 = vld [vmem:[#allocation8 + $0x68] sm:$0xf]
        %v534 = vld [vmem:[#allocation8 + $0x6c] sm:$0xf]
        %v535 = vld [vmem:[#allocation8 + $0x70] sm:$0xf]
        %v536 = vld [vmem:[#allocation8 + $0x74] sm:$0xf]
        %v537 = vld [vmem:[#allocation8 + $0x78] sm:$0xf]
        %v538 = vld [vmem:[#allocation8 + $0x7c] sm:$0xf]
        %v539 = vld [vmem:[%s7] sm:$0x3f]
        %v540 = vpack.c.bf16 %v469, %v469
        %v541 = vlaneseq
        %v542 = vshrl.u32 %v541, 7
        %v543 = vsub.s32 0, %v542
        %v544 = vrot.slane %v539, %v543
        %v561 = vunpack.c.l.b16 %v474
        %v562 = vunpack.c.l.b16 %v475
        %v563 = vunpack.c.l.b16 %v476
        %v564 = vunpack.c.l.b16 %v477
        %v565 = vunpack.c.l.b16 %v478
        %v566 = vunpack.c.l.b16 %v479
        %v567 = vunpack.c.l.b16 %v480
        %v568 = vunpack.c.l.b16 %v481
        %v569 = vunpack.c.l.b16 %v482
        %v570 = vunpack.c.l.b16 %v483
        %v571 = vunpack.c.l.b16 %v484
        %v572 = vunpack.c.l.b16 %v485
        %v573 = vunpack.c.l.b16 %v486
        %v574 = vunpack.c.l.b16 %v487
        %v575 = vunpack.c.l.b16 %v488
        %v576 = vunpack.c.l.b16 %v489
        %v577 = vpack.c.b16 %v562, %v561
        %v578 = vpack.c.b16 %v564, %v563
        %v579 = vpack.c.b16 %v566, %v565
        %v580 = vpack.c.b16 %v568, %v567
        %v581 = vpack.c.b16 %v570, %v569
        %v582 = vpack.c.b16 %v572, %v571
        %v583 = vpack.c.b16 %v574, %v573
        %v584 = vpack.c.b16 %v576, %v575
        %593 = vmatprep.subr.bf16.mxu0 0
        %594 = vmatpush1.bf16.msra.mxu0 %v577
        %595 = vmatprep.subr.bf16.mxu0 0
        %596 = vmatpush1.bf16.msra.mxu0 %v578
        %597 = vmatprep.subr.bf16.mxu0 0
        %598 = vmatpush1.bf16.msra.mxu0 %v579
        %599 = vmatprep.subr.bf16.mxu0 0
        %600 = vmatpush1.bf16.msra.mxu0 %v580
        %601 = vmatprep.subr.bf16.mxu0 0
        %602 = vmatpush1.bf16.msra.mxu0 %v581
        %603 = vmatprep.subr.bf16.mxu0 0
        %604 = vmatpush1.bf16.msra.mxu0 %v582
        %605 = vmatprep.subr.bf16.mxu0 0
        %606 = vmatpush1.bf16.msra.mxu0 %v583
        %607 = vmatprep.subr.bf16.mxu0 0
        %608 = vmatpush1.bf16.msra.mxu0 %v584
        %609 = vmatprep.subr.bf16.mxu0 0
        %610 = vmatpush1.bf16.msra.mxu0 0
        %611 = vmatprep.subr.bf16.mxu0 0
        %612 = vmatpush1.bf16.msra.mxu0 0
        %613 = vmatprep.subr.bf16.mxu0 0
        %614 = vmatpush1.bf16.msra.mxu0 0
        %615 = vmatprep.subr.bf16.mxu0 0
        %616 = vmatpush1.bf16.msra.mxu0 0
        %617 = vmatprep.subr.bf16.mxu0 0
        %618 = vmatpush1.bf16.msra.mxu0 0
        %619 = vmatprep.subr.bf16.mxu0 0
        %620 = vmatpush1.bf16.msra.mxu0 0
        %621 = vmatprep.subr.bf16.mxu0 0
        %622 = vmatpush1.bf16.msra.mxu0 0
        %623 = vmatprep.subr.bf16.mxu0 0
        %624 = vmatpush1.bf16.msra.mxu0 0
        %625 = vmatprep.mubr.bf16.mxu0 0
        %626 = vmatmul.mubr.bf16.gmra.mrb[0].mxu0 %v540
        %v627 = vpop.f32.mrb[0].mxu0
        %v628 = vadd.f32 %v544, %v627
        %v629 = vpop.f32.mrb[0].mxu0
        %v630 = vpop.f32.mrb[0].mxu0
        %v631 = vpop.f32.mrb[0].mxu0
        %632 = vdwg.mxu0
        %v633 = vadd.f32 %v469, %v628
        %634 = vadd.xlane.f32.xlu0 %v633
        %v635 = vpop.xlane.xlu0 %634
        %v636 = vrcp.pop 128.0
        %v637 = vmul.f32 %v635, %v636
        %v638 = vsub.f32 %v633, %v637
        %v639 = vmul.f32 %v638, %v638
        %640 = vadd.xlane.f32.xlu0 %v639
        %v641 = vpop.xlane.xlu0 %640
        %v642 = vmul.f32 %v641, %v636
        %v643 = vadd.f32 %v642, 1e-05
        %v644 = vrsqrt.pop %v643
        %v645 = vmul.f32 %v638, %v644
        %v646 = vlaneseq
        %v647 = vshrl.u32 %v646, 7
        %v648 = vsub.s32 1, %v647
        %v649 = vrot.slane %v539, %v648
        %v650 = vmul.f32 %v645, %v649
        %v651 = vlaneseq
        %v652 = vshrl.u32 %v651, 7
        %v653 = vsub.s32 2, %v652
        %v654 = vrot.slane %v539, %v653
        %v655 = vadd.f32 %v650, %v654
        %v656 = vpack.c.bf16 %v655, %v655
        %v658 = vlaneseq
        %v659 = vshrl.u32 %v658, 7
        %v660 = vsub.s32 0, %v659
        %v661 = vrot.slane %v506, %v660
        %v662 = vlaneseq
        %v663 = vshrl.u32 %v662, 7
        %v664 = vsub.s32 1, %v663
        %v665 = vrot.slane %v506, %v664
        %v684 = vunpack.c.l.b16 %v490
        %v685 = vunpack.c.h.b16 %v490
        %v686 = vunpack.c.l.b16 %v491
        %v687 = vunpack.c.h.b16 %v491
        %v688 = vunpack.c.l.b16 %v492
        %v689 = vunpack.c.h.b16 %v492
        %v690 = vunpack.c.l.b16 %v493
        %v691 = vunpack.c.h.b16 %v493
        %v692 = vunpack.c.l.b16 %v494
        %v693 = vunpack.c.h.b16 %v494
        %v694 = vunpack.c.l.b16 %v495
        %v695 = vunpack.c.h.b16 %v495
        %v696 = vunpack.c.l.b16 %v496
        %v697 = vunpack.c.h.b16 %v496
        %v698 = vunpack.c.l.b16 %v497
        %v699 = vunpack.c.h.b16 %v497
        %v700 = vunpack.c.l.b16 %v498
        %v701 = vunpack.c.h.b16 %v498
        %v702 = vunpack.c.l.b16 %v499
        %v703 = vunpack.c.h.b16 %v499
        %v704 = vunpack.c.l.b16 %v500
        %v705 = vunpack.c.h.b16 %v500
        %v706 = vunpack.c.l.b16 %v501
        %v707 = vunpack.c.h.b16 %v501
        %v708 = vunpack.c.l.b16 %v502
        %v709 = vunpack.c.h.b16 %v502
        %v710 = vunpack.c.l.b16 %v503
        %v711 = vunpack.c.h.b16 %v503
        %v712 = vunpack.c.l.b16 %v504
        %v713 = vunpack.c.h.b16 %v504
        %v714 = vunpack.c.l.b16 %v505
        %v715 = vunpack.c.h.b16 %v505
        %v716 = vpack.c.b16 %v686, %v684
        %v717 = vpack.c.b16 %v687, %v685
        %v718 = vpack.c.b16 %v690, %v688
        %v719 = vpack.c.b16 %v691, %v689
        %v720 = vpack.c.b16 %v694, %v692
        %v721 = vpack.c.b16 %v695, %v693
        %v722 = vpack.c.b16 %v698, %v696
        %v723 = vpack.c.b16 %v699, %v697
        %v724 = vpack.c.b16 %v702, %v700
        %v725 = vpack.c.b16 %v703, %v701
        %v726 = vpack.c.b16 %v706, %v704
        %v727 = vpack.c.b16 %v707, %v705
        %v728 = vpack.c.b16 %v710, %v708
        %v729 = vpack.c.b16 %v711, %v709
        %v730 = vpack.c.b16 %v714, %v712
        %v731 = vpack.c.b16 %v715, %v713
        %748 = vmatprep.subr.bf16.mxu0 %v717
        %749 = vmatpush1.bf16.msra.mxu0 %v716
        %750 = vmatprep.subr.bf16.mxu0 %v719
        %751 = vmatpush1.bf16.msra.mxu0 %v718
        %752 = vmatprep.subr.bf16.mxu0 %v721
        %753 = vmatpush1.bf16.msra.mxu0 %v720
        %754 = vmatprep.subr.bf16.mxu0 %v723
        %755 = vmatpush1.bf16.msra.mxu0 %v722
        %756 = vmatprep.subr.bf16.mxu0 %v725
        %757 = vmatpush1.bf16.msra.mxu0 %v724
        %758 = vmatprep.subr.bf16.mxu0 %v727
        %759 = vmatpush1.bf16.msra.mxu0 %v726
        %760 = vmatprep.subr.bf16.mxu0 %v729
        %761 = vmatpush1.bf16.msra.mxu0 %v728
        %762 = vmatprep.subr.bf16.mxu0 %v731
        %763 = vmatpush1.bf16.msra.mxu0 %v730
        %764 = vmatprep.subr.bf16.mxu0 0
        %765 = vmatpush1.bf16.msra.mxu0 0
        %766 = vmatprep.subr.bf16.mxu0 0
        %767 = vmatpush1.bf16.msra.mxu0 0
        %768 = vmatprep.subr.bf16.mxu0 0
        %769 = vmatpush1.bf16.msra.mxu0 0
        %770 = vmatprep.subr.bf16.mxu0 0
        %771 = vmatpush1.bf16.msra.mxu0 0
        %772 = vmatprep.subr.bf16.mxu0 0
        %773 = vmatpush1.bf16.msra.mxu0 0
        %774 = vmatprep.subr.bf16.mxu0 0
        %775 = vmatpush1.bf16.msra.mxu0 0
        %776 = vmatprep.subr.bf16.mxu0 0
        %777 = vmatpush1.bf16.msra.mxu0 0
        %778 = vmatprep.subr.bf16.mxu0 0
        %779 = vmatpush1.bf16.msra.mxu0 0
        %780 = vmatprep.mubr.bf16.mxu0 0
        %781 = vmatmul.mubr.bf16.gmra.mrb[0].mxu0 %v656
        %v782 = vpop.f32.mrb[0].mxu0
        %v783 = vadd.f32 %v661, %v782
        %v784 = vpop.f32.mrb[0].mxu0
        %v785 = vadd.f32 %v665, %v784
        %v786 = vpop.f32.mrb[0].mxu0
        %v787 = vpop.f32.mrb[0].mxu0
        %788 = vdwg.mxu0
        %v789 = vmax.f32 %v783, 0.0
        %v790 = vmax.f32 %v785, 0.0
        %v791 = vpack.c.bf16 %v789, %v789
        %v792 = vpack.c.bf16 %v790, %v790
        %v793 = vlaneseq
        %v794 = vshrl.u32 %v793, 7
        %v795 = vsub.s32 3, %v794
        %v796 = vrot.slane %v539, %v795
        %v829 = vunpack.c.l.b16 %v507
        %v830 = vunpack.c.l.b16 %v508
        %v831 = vunpack.c.l.b16 %v509
        %v832 = vunpack.c.l.b16 %v510
        %v833 = vunpack.c.l.b16 %v511
        %v834 = vunpack.c.l.b16 %v512
        %v835 = vunpack.c.l.b16 %v513
        %v836 = vunpack.c.l.b16 %v514
        %v837 = vunpack.c.l.b16 %v515
        %v838 = vunpack.c.l.b16 %v516
        %v839 = vunpack.c.l.b16 %v517
        %v840 = vunpack.c.l.b16 %v518
        %v841 = vunpack.c.l.b16 %v519
        %v842 = vunpack.c.l.b16 %v520
        %v843 = vunpack.c.l.b16 %v521
        %v844 = vunpack.c.l.b16 %v522
        %v845 = vunpack.c.l.b16 %v523
        %v846 = vunpack.c.l.b16 %v524
        %v847 = vunpack.c.l.b16 %v525
        %v848 = vunpack.c.l.b16 %v526
        %v849 = vunpack.c.l.b16 %v527
        %v850 = vunpack.c.l.b16 %v528
        %v851 = vunpack.c.l.b16 %v529
        %v852 = vunpack.c.l.b16 %v530
        %v853 = vunpack.c.l.b16 %v531
        %v854 = vunpack.c.l.b16 %v532
        %v855 = vunpack.c.l.b16 %v533
        %v856 = vunpack.c.l.b16 %v534
        %v857 = vunpack.c.l.b16 %v535
        %v858 = vunpack.c.l.b16 %v536
        %v859 = vunpack.c.l.b16 %v537
        %v860 = vunpack.c.l.b16 %v538
        %v861 = vpack.c.b16 %v830, %v829
        %v862 = vpack.c.b16 %v832, %v831
        %v863 = vpack.c.b16 %v834, %v833
        %v864 = vpack.c.b16 %v836, %v835
        %v865 = vpack.c.b16 %v838, %v837
        %v866 = vpack.c.b16 %v840, %v839
        %v867 = vpack.c.b16 %v842, %v841
        %v868 = vpack.c.b16 %v844, %v843
        %v869 = vpack.c.b16 %v846, %v845
        %v870 = vpack.c.b16 %v848, %v847
        %v871 = vpack.c.b16 %v850, %v849
        %v872 = vpack.c.b16 %v852, %v851
        %v873 = vpack.c.b16 %v854, %v853
        %v874 = vpack.c.b16 %v856, %v855
        %v875 = vpack.c.b16 %v858, %v857
        %v876 = vpack.c.b16 %v860, %v859
        %893 = vmatprep.subr.bf16.mxu0 0
        %894 = vmatpush1.bf16.msra.mxu0 %v861
        %895 = vmatprep.subr.bf16.mxu0 0
        %896 = vmatpush1.bf16.msra.mxu0 %v862
        %897 = vmatprep.subr.bf16.mxu0 0
        %898 = vmatpush1.bf16.msra.mxu0 %v863
        %899 = vmatprep.subr.bf16.mxu0 0
        %900 = vmatpush1.bf16.msra.mxu0 %v864
        %901 = vmatprep.subr.bf16.mxu0 0
        %902 = vmatpush1.bf16.msra.mxu0 %v865
        %903 = vmatprep.subr.bf16.mxu0 0
        %904 = vmatpush1.bf16.msra.mxu0 %v866
        %905 = vmatprep.subr.bf16.mxu0 0
        %906 = vmatpush1.bf16.msra.mxu0 %v867
        %907 = vmatprep.subr.bf16.mxu0 0
        %908 = vmatpush1.bf16.msra.mxu0 %v868
        %909 = vmatprep.subr.bf16.mxu0 0
        %910 = vmatpush1.bf16.msra.mxu0 %v869
        %911 = vmatprep.subr.bf16.mxu0 0
        %912 = vmatpush1.bf16.msra.mxu0 %v870
        %913 = vmatprep.subr.bf16.mxu0 0
        %914 = vmatpush1.bf16.msra.mxu0 %v871
        %915 = vmatprep.subr.bf16.mxu0 0
        %916 = vmatpush1.bf16.msra.mxu0 %v872
        %917 = vmatprep.subr.bf16.mxu0 0
        %918 = vmatpush1.bf16.msra.mxu0 %v873
        %919 = vmatprep.subr.bf16.mxu0 0
        %920 = vmatpush1.bf16.msra.mxu0 %v874
        %921 = vmatprep.subr.bf16.mxu0 0
        %922 = vmatpush1.bf16.msra.mxu0 %v875
        %923 = vmatprep.subr.bf16.mxu0 0
        %924 = vmatpush1.bf16.msra.mxu0 %v876
        %925 = vmatprep.mubr.bf16.mxu0 %v792
        %926 = vmatmul.mubr.bf16.gmra.mrb[0].mxu0 %v791
        %v927 = vpop.f32.mrb[0].mxu0
        %v928 = vadd.f32 %v796, %v927
        %v929 = vpop.f32.mrb[0].mxu0
        %v930 = vpop.f32.mrb[0].mxu0
        %v931 = vpop.f32.mrb[0].mxu0
        %932 = vdwg.mxu0
        %v933 = vadd.f32 %v655, %v928
        %934 = vadd.xlane.f32.xlu0 %v933
        %v935 = vpop.xlane.xlu0 %934
        %v936 = vmul.f32 %v935, %v636
        %v937 = vsub.f32 %v933, %v936
        %v938 = vmul.f32 %v937, %v937
        %939 = vadd.xlane.f32.xlu0 %v938
        %v940 = vpop.xlane.xlu0 %939
        %v941 = vmul.f32 %v940, %v636
        %v942 = vadd.f32 %v941, 1e-05
        %v943 = vrsqrt.pop %v942
        %v944 = vmul.f32 %v937, %v943
        %v945 = vlaneseq
        %v946 = vshrl.u32 %v945, 7
        %v947 = vsub.s32 4, %v946
        %v948 = vrot.slane %v539, %v947
        %v949 = vmul.f32 %v944, %v948
        %v950 = vlaneseq
        %v951 = vshrl.u32 %v950, 7
        %v952 = vsub.s32 5, %v951
        %v953 = vrot.slane %v539, %v952
        %v954 = vadd.f32 %v949, %v953
        %s955 = scalar_lea.vmem [#allocation5], 64
        %v956 = vld [vmem:[%s955] sm:$0xf]
        %v957 = vld [vmem:[%s955 + $0x4] sm:$0xf]
        %v958 = vld [vmem:[%s955 + $0x8] sm:$0xf]
        %v959 = vld [vmem:[%s955 + $0xc] sm:$0xf]
        %v960 = vld [vmem:[%s955 + $0x10] sm:$0xf]
        %v961 = vld [vmem:[%s955 + $0x14] sm:$0xf]
        %v962 = vld [vmem:[%s955 + $0x18] sm:$0xf]
        %v963 = vld [vmem:[%s955 + $0x1c] sm:$0xf]
        %v964 = vld [vmem:[%s955 + $0x20] sm:$0xf]
        %v965 = vld [vmem:[%s955 + $0x24] sm:$0xf]
        %v966 = vld [vmem:[%s955 + $0x28] sm:$0xf]
        %v967 = vld [vmem:[%s955 + $0x2c] sm:$0xf]
        %v968 = vld [vmem:[%s955 + $0x30] sm:$0xf]
        %v969 = vld [vmem:[%s955 + $0x34] sm:$0xf]
        %v970 = vld [vmem:[%s955 + $0x38] sm:$0xf]
        %v971 = vld [vmem:[%s955 + $0x3c] sm:$0xf]
        %s972 = scalar_lea.vmem [#allocation7], 128
        %v973 = vld [vmem:[%s972] sm:$0xff]
        %v974 = vld [vmem:[%s972 + $0x8] sm:$0xff]
        %v975 = vld [vmem:[%s972 + $0x10] sm:$0xff]
        %v976 = vld [vmem:[%s972 + $0x18] sm:$0xff]
        %v977 = vld [vmem:[%s972 + $0x20] sm:$0xff]
        %v978 = vld [vmem:[%s972 + $0x28] sm:$0xff]
        %v979 = vld [vmem:[%s972 + $0x30] sm:$0xff]
        %v980 = vld [vmem:[%s972 + $0x38] sm:$0xff]
        %v981 = vld [vmem:[%s972 + $0x40] sm:$0xff]
        %v982 = vld [vmem:[%s972 + $0x48] sm:$0xff]
        %v983 = vld [vmem:[%s972 + $0x50] sm:$0xff]
        %v984 = vld [vmem:[%s972 + $0x58] sm:$0xff]
        %v985 = vld [vmem:[%s972 + $0x60] sm:$0xff]
        %v986 = vld [vmem:[%s972 + $0x68] sm:$0xff]
        %v987 = vld [vmem:[%s972 + $0x70] sm:$0xff]
        %v988 = vld [vmem:[%s972 + $0x78] sm:$0xff]
        %s989 = scalar_lea.vmem %s5, 2
        %v990 = vld [vmem:[%s989] sm:$0x3]
        %s991 = scalar_lea.vmem [#allocation8], 128
        %v992 = vld [vmem:[%s991] sm:$0xf]
        %v993 = vld [vmem:[%s991 + $0x4] sm:$0xf]
        %v994 = vld [vmem:[%s991 + $0x8] sm:$0xf]
        %v995 = vld [vmem:[%s991 + $0xc] sm:$0xf]
        %v996 = vld [vmem:[%s991 + $0x10] sm:$0xf]
        %v997 = vld [vmem:[%s991 + $0x14] sm:$0xf]
        %v998 = vld [vmem:[%s991 + $0x18] sm:$0xf]
        %v999 = vld [vmem:[%s991 + $0x1c] sm:$0xf]
        %v1000 = vld [vmem:[%s991 + $0x20] sm:$0xf]
        %v1001 = vld [vmem:[%s991 + $0x24] sm:$0xf]
        %v1002 = vld [vmem:[%s991 + $0x28] sm:$0xf]
        %v1003 = vld [vmem:[%s991 + $0x2c] sm:$0xf]
        %v1004 = vld [vmem:[%s991 + $0x30] sm:$0xf]
        %v1005 = vld [vmem:[%s991 + $0x34] sm:$0xf]
        %v1006 = vld [vmem:[%s991 + $0x38] sm:$0xf]
        %v1007 = vld [vmem:[%s991 + $0x3c] sm:$0xf]
        %v1008 = vld [vmem:[%s991 + $0x40] sm:$0xf]
        %v1009 = vld [vmem:[%s991 + $0x44] sm:$0xf]
        %v1010 = vld [vmem:[%s991 + $0x48] sm:$0xf]
        %v1011 = vld [vmem:[%s991 + $0x4c] sm:$0xf]
        %v1012 = vld [vmem:[%s991 + $0x50] sm:$0xf]
        %v1013 = vld [vmem:[%s991 + $0x54] sm:$0xf]
        %v1014 = vld [vmem:[%s991 + $0x58] sm:$0xf]
        %v1015 = vld [vmem:[%s991 + $0x5c] sm:$0xf]
        %v1016 = vld [vmem:[%s991 + $0x60] sm:$0xf]
        %v1017 = vld [vmem:[%s991 + $0x64] sm:$0xf]
        %v1018 = vld [vmem:[%s991 + $0x68] sm:$0xf]
        %v1019 = vld [vmem:[%s991 + $0x6c] sm:$0xf]
        %v1020 = vld [vmem:[%s991 + $0x70] sm:$0xf]
        %v1021 = vld [vmem:[%s991 + $0x74] sm:$0xf]
        %v1022 = vld [vmem:[%s991 + $0x78] sm:$0xf]
        %v1023 = vld [vmem:[%s991 + $0x7c] sm:$0xf]
        %s1024 = scalar_lea.vmem %s7, 8
        %v1025 = vld [vmem:[%s1024] sm:$0x3f]
        %v1026 = vpack.c.bf16 %v954, %v954
        %v1027 = vlaneseq
        %v1028 = vshrl.u32 %v1027, 7
        %v1029 = vsub.s32 0, %v1028
        %v1030 = vrot.slane %v1025, %v1029
        %v1047 = vunpack.c.l.b16 %v956
        %v1048 = vunpack.c.l.b16 %v957
        %v1049 = vunpack.c.l.b16 %v958
        %v1050 = vunpack.c.l.b16 %v959
        %v1051 = vunpack.c.l.b16 %v960
        %v1052 = vunpack.c.l.b16 %v961
        %v1053 = vunpack.c.l.b16 %v962
        %v1054 = vunpack.c.l.b16 %v963
        %v1055 = vunpack.c.l.b16 %v964
        %v1056 = vunpack.c.l.b16 %v965
        %v1057 = vunpack.c.l.b16 %v966
        %v1058 = vunpack.c.l.b16 %v967
        %v1059 = vunpack.c.l.b16 %v968
        %v1060 = vunpack.c.l.b16 %v969
        %v1061 = vunpack.c.l.b16 %v970
        %v1062 = vunpack.c.l.b16 %v971
        %v1063 = vpack.c.b16 %v1048, %v1047
        %v1064 = vpack.c.b16 %v1050, %v1049
        %v1065 = vpack.c.b16 %v1052, %v1051
        %v1066 = vpack.c.b16 %v1054, %v1053
        %v1067 = vpack.c.b16 %v1056, %v1055
        %v1068 = vpack.c.b16 %v1058, %v1057
        %v1069 = vpack.c.b16 %v1060, %v1059
        %v1070 = vpack.c.b16 %v1062, %v1061
        %1079 = vmatprep.subr.bf16.mxu0 0
        %1080 = vmatpush1.bf16.msra.mxu0 %v1063
        %1081 = vmatprep.subr.bf16.mxu0 0
        %1082 = vmatpush1.bf16.msra.mxu0 %v1064
        %1083 = vmatprep.subr.bf16.mxu0 0
        %1084 = vmatpush1.bf16.msra.mxu0 %v1065
        %1085 = vmatprep.subr.bf16.mxu0 0
        %1086 = vmatpush1.bf16.msra.mxu0 %v1066
        %1087 = vmatprep.subr.bf16.mxu0 0
        %1088 = vmatpush1.bf16.msra.mxu0 %v1067
        %1089 = vmatprep.subr.bf16.mxu0 0
        %1090 = vmatpush1.bf16.msra.mxu0 %v1068
        %1091 = vmatprep.subr.bf16.mxu0 0
        %1092 = vmatpush1.bf16.msra.mxu0 %v1069
        %1093 = vmatprep.subr.bf16.mxu0 0
        %1094 = vmatpush1.bf16.msra.mxu0 %v1070
        %1095 = vmatprep.subr.bf16.mxu0 0
        %1096 = vmatpush1.bf16.msra.mxu0 0
        %1097 = vmatprep.subr.bf16.mxu0 0
        %1098 = vmatpush1.bf16.msra.mxu0 0
        %1099 = vmatprep.subr.bf16.mxu0 0
        %1100 = vmatpush1.bf16.msra.mxu0 0
        %1101 = vmatprep.subr.bf16.mxu0 0
        %1102 = vmatpush1.bf16.msra.mxu0 0
        %1103 = vmatprep.subr.bf16.mxu0 0
        %1104 = vmatpush1.bf16.msra.mxu0 0
        %1105 = vmatprep.subr.bf16.mxu0 0
        %1106 = vmatpush1.bf16.msra.mxu0 0
        %1107 = vmatprep.subr.bf16.mxu0 0
        %1108 = vmatpush1.bf16.msra.mxu0 0
        %1109 = vmatprep.subr.bf16.mxu0 0
        %1110 = vmatpush1.bf16.msra.mxu0 0
        %1111 = vmatprep.mubr.bf16.mxu0 0
        %1112 = vmatmul.mubr.bf16.gmra.mrb[0].mxu0 %v1026
        %v1113 = vpop.f32.mrb[0].mxu0
        %v1114 = vadd.f32 %v1030, %v1113
        %v1115 = vpop.f32.mrb[0].mxu0
        %v1116 = vpop.f32.mrb[0].mxu0
        %v1117 = vpop.f32.mrb[0].mxu0
        %1118 = vdwg.mxu0
        %v1119 = vadd.f32 %v954, %v1114
        %1120 = vadd.xlane.f32.xlu0 %v1119
        %v1121 = vpop.xlane.xlu0 %1120
        %v1122 = vmul.f32 %v1121, %v636
        %v1123 = vsub.f32 %v1119, %v1122
        %v1124 = vmul.f32 %v1123, %v1123
        %1125 = vadd.xlane.f32.xlu0 %v1124
        %v1126 = vpop.xlane.xlu0 %1125
        %v1127 = vmul.f32 %v1126, %v636
        %v1128 = vadd.f32 %v1127, 1e-05
        %v1129 = vrsqrt.pop %v1128
        %v1130 = vmul.f32 %v1123, %v1129
        %v1131 = vlaneseq
        %v1132 = vshrl.u32 %v1131, 7
        %v1133 = vsub.s32 1, %v1132
        %v1134 = vrot.slane %v1025, %v1133
        %v1135 = vmul.f32 %v1130, %v1134
        %v1136 = vlaneseq
        %v1137 = vshrl.u32 %v1136, 7
        %v1138 = vsub.s32 2, %v1137
        %v1139 = vrot.slane %v1025, %v1138
        %v1140 = vadd.f32 %v1135, %v1139
        %v1141 = vpack.c.bf16 %v1140, %v1140
        %v1143 = vlaneseq
        %v1144 = vshrl.u32 %v1143, 7
        %v1145 = vsub.s32 0, %v1144
        %v1146 = vrot.slane %v990, %v1145
        %v1147 = vlaneseq
        %v1148 = vshrl.u32 %v1147, 7
        %v1149 = vsub.s32 1, %v1148
        %v1150 = vrot.slane %v990, %v1149
        %v1169 = vunpack.c.l.b16 %v973
        %v1170 = vunpack.c.h.b16 %v973
        %v1171 = vunpack.c.l.b16 %v974
        %v1172 = vunpack.c.h.b16 %v974
        %v1173 = vunpack.c.l.b16 %v975
        %v1174 = vunpack.c.h.b16 %v975
        %v1175 = vunpack.c.l.b16 %v976
        %v1176 = vunpack.c.h.b16 %v976
        %v1177 = vunpack.c.l.b16 %v977
        %v1178 = vunpack.c.h.b16 %v977
        %v1179 = vunpack.c.l.b16 %v978
        %v1180 = vunpack.c.h.b16 %v978
        %v1181 = vunpack.c.l.b16 %v979
        %v1182 = vunpack.c.h.b16 %v979
        %v1183 = vunpack.c.l.b16 %v980
        %v1184 = vunpack.c.h.b16 %v980
        %v1185 = vunpack.c.l.b16 %v981
        %v1186 = vunpack.c.h.b16 %v981
        %v1187 = vunpack.c.l.b16 %v982
        %v1188 = vunpack.c.h.b16 %v982
        %v1189 = vunpack.c.l.b16 %v983
        %v1190 = vunpack.c.h.b16 %v983
        %v1191 = vunpack.c.l.b16 %v984
        %v1192 = vunpack.c.h.b16 %v984
        %v1193 = vunpack.c.l.b16 %v985
        %v1194 = vunpack.c.h.b16 %v985
        %v1195 = vunpack.c.l.b16 %v986
        %v1196 = vunpack.c.h.b16 %v986
        %v1197 = vunpack.c.l.b16 %v987
        %v1198 = vunpack.c.h.b16 %v987
        %v1199 = vunpack.c.l.b16 %v988
        %v1200 = vunpack.c.h.b16 %v988
        %v1201 = vpack.c.b16 %v1171, %v1169
        %v1202 = vpack.c.b16 %v1172, %v1170
        %v1203 = vpack.c.b16 %v1175, %v1173
        %v1204 = vpack.c.b16 %v1176, %v1174
        %v1205 = vpack.c.b16 %v1179, %v1177
        %v1206 = vpack.c.b16 %v1180, %v1178
        %v1207 = vpack.c.b16 %v1183, %v1181
        %v1208 = vpack.c.b16 %v1184, %v1182
        %v1209 = vpack.c.b16 %v1187, %v1185
        %v1210 = vpack.c.b16 %v1188, %v1186
        %v1211 = vpack.c.b16 %v1191, %v1189
        %v1212 = vpack.c.b16 %v1192, %v1190
        %v1213 = vpack.c.b16 %v1195, %v1193
        %v1214 = vpack.c.b16 %v1196, %v1194
        %v1215 = vpack.c.b16 %v1199, %v1197
        %v1216 = vpack.c.b16 %v1200, %v1198
        %1233 = vmatprep.subr.bf16.mxu0 %v1202
        %1234 = vmatpush1.bf16.msra.mxu0 %v1201
        %1235 = vmatprep.subr.bf16.mxu0 %v1204
        %1236 = vmatpush1.bf16.msra.mxu0 %v1203
        %1237 = vmatprep.subr.bf16.mxu0 %v1206
        %1238 = vmatpush1.bf16.msra.mxu0 %v1205
        %1239 = vmatprep.subr.bf16.mxu0 %v1208
        %1240 = vmatpush1.bf16.msra.mxu0 %v1207
        %1241 = vmatprep.subr.bf16.mxu0 %v1210
        %1242 = vmatpush1.bf16.msra.mxu0 %v1209
        %1243 = vmatprep.subr.bf16.mxu0 %v1212
        %1244 = vmatpush1.bf16.msra.mxu0 %v1211
        %1245 = vmatprep.subr.bf16.mxu0 %v1214
        %1246 = vmatpush1.bf16.msra.mxu0 %v1213
        %1247 = vmatprep.subr.bf16.mxu0 %v1216
        %1248 = vmatpush1.bf16.msra.mxu0 %v1215
        %1249 = vmatprep.subr.bf16.mxu0 0
        %1250 = vmatpush1.bf16.msra.mxu0 0
        %1251 = vmatprep.subr.bf16.mxu0 0
        %1252 = vmatpush1.bf16.msra.mxu0 0
        %1253 = vmatprep.subr.bf16.mxu0 0
        %1254 = vmatpush1.bf16.msra.mxu0 0
        %1255 = vmatprep.subr.bf16.mxu0 0
        %1256 = vmatpush1.bf16.msra.mxu0 0
        %1257 = vmatprep.subr.bf16.mxu0 0
        %1258 = vmatpush1.bf16.msra.mxu0 0
        %1259 = vmatprep.subr.bf16.mxu0 0
        %1260 = vmatpush1.bf16.msra.mxu0 0
        %1261 = vmatprep.subr.bf16.mxu0 0
        %1262 = vmatpush1.bf16.msra.mxu0 0
        %1263 = vmatprep.subr.bf16.mxu0 0
        %1264 = vmatpush1.bf16.msra.mxu0 0
        %1265 = vmatprep.mubr.bf16.mxu0 0
        %1266 = vmatmul.mubr.bf16.gmra.mrb[0].mxu0 %v1141
        %v1267 = vpop.f32.mrb[0].mxu0
        %v1268 = vadd.f32 %v1146, %v1267
        %v1269 = vpop.f32.mrb[0].mxu0
        %v1270 = vadd.f32 %v1150, %v1269
        %v1271 = vpop.f32.mrb[0].mxu0
        %v1272 = vpop.f32.mrb[0].mxu0
        %1273 = vdwg.mxu0
        %v1274 = vmax.f32 %v1268, 0.0
        %v1275 = vmax.f32 %v1270, 0.0
        %v1276 = vpack.c.bf16 %v1274, %v1274
        %v1277 = vpack.c.bf16 %v1275, %v1275
        %v1278 = vlaneseq
        %v1279 = vshrl.u32 %v1278, 7
        %v1280 = vsub.s32 3, %v1279
        %v1281 = vrot.slane %v1025, %v1280
        %v1314 = vunpack.c.l.b16 %v992
        %v1315 = vunpack.c.l.b16 %v993
        %v1316 = vunpack.c.l.b16 %v994
        %v1317 = vunpack.c.l.b16 %v995
        %v1318 = vunpack.c.l.b16 %v996
        %v1319 = vunpack.c.l.b16 %v997
        %v1320 = vunpack.c.l.b16 %v998
        %v1321 = vunpack.c.l.b16 %v999
        %v1322 = vunpack.c.l.b16 %v1000
        %v1323 = vunpack.c.l.b16 %v1001
        %v1324 = vunpack.c.l.b16 %v1002
        %v1325 = vunpack.c.l.b16 %v1003
        %v1326 = vunpack.c.l.b16 %v1004
        %v1327 = vunpack.c.l.b16 %v1005
        %v1328 = vunpack.c.l.b16 %v1006
        %v1329 = vunpack.c.l.b16 %v1007
        %v1330 = vunpack.c.l.b16 %v1008
        %v1331 = vunpack.c.l.b16 %v1009
        %v1332 = vunpack.c.l.b16 %v1010
        %v1333 = vunpack.c.l.b16 %v1011
        %v1334 = vunpack.c.l.b16 %v1012
        %v1335 = vunpack.c.l.b16 %v1013
        %v1336 = vunpack.c.l.b16 %v1014
        %v1337 = vunpack.c.l.b16 %v1015
        %v1338 = vunpack.c.l.b16 %v1016
        %v1339 = vunpack.c.l.b16 %v1017
        %v1340 = vunpack.c.l.b16 %v1018
        %v1341 = vunpack.c.l.b16 %v1019
        %v1342 = vunpack.c.l.b16 %v1020
        %v1343 = vunpack.c.l.b16 %v1021
        %v1344 = vunpack.c.l.b16 %v1022
        %v1345 = vunpack.c.l.b16 %v1023
        %v1346 = vpack.c.b16 %v1315, %v1314
        %v1347 = vpack.c.b16 %v1317, %v1316
        %v1348 = vpack.c.b16 %v1319, %v1318
        %v1349 = vpack.c.b16 %v1321, %v1320
        %v1350 = vpack.c.b16 %v1323, %v1322
        %v1351 = vpack.c.b16 %v1325, %v1324
        %v1352 = vpack.c.b16 %v1327, %v1326
        %v1353 = vpack.c.b16 %v1329, %v1328
        %v1354 = vpack.c.b16 %v1331, %v1330
        %v1355 = vpack.c.b16 %v1333, %v1332
        %v1356 = vpack.c.b16 %v1335, %v1334
        %v1357 = vpack.c.b16 %v1337, %v1336
        %v1358 = vpack.c.b16 %v1339, %v1338
        %v1359 = vpack.c.b16 %v1341, %v1340
        %v1360 = vpack.c.b16 %v1343, %v1342
        %v1361 = vpack.c.b16 %v1345, %v1344
        %1378 = vmatprep.subr.bf16.mxu0 0
        %1379 = vmatpush1.bf16.msra.mxu0 %v1346
        %1380 = vmatprep.subr.bf16.mxu0 0
        %1381 = vmatpush1.bf16.msra.mxu0 %v1347
        %1382 = vmatprep.subr.bf16.mxu0 0
        %1383 = vmatpush1.bf16.msra.mxu0 %v1348
        %1384 = vmatprep.subr.bf16.mxu0 0
        %1385 = vmatpush1.bf16.msra.mxu0 %v1349
        %1386 = vmatprep.subr.bf16.mxu0 0
        %1387 = vmatpush1.bf16.msra.mxu0 %v1350
        %1388 = vmatprep.subr.bf16.mxu0 0
        %1389 = vmatpush1.bf16.msra.mxu0 %v1351
        %1390 = vmatprep.subr.bf16.mxu0 0
        %1391 = vmatpush1.bf16.msra.mxu0 %v1352
        %1392 = vmatprep.subr.bf16.mxu0 0
        %1393 = vmatpush1.bf16.msra.mxu0 %v1353
        %1394 = vmatprep.subr.bf16.mxu0 0
        %1395 = vmatpush1.bf16.msra.mxu0 %v1354
        %1396 = vmatprep.subr.bf16.mxu0 0
        %1397 = vmatpush1.bf16.msra.mxu0 %v1355
        %1398 = vmatprep.subr.bf16.mxu0 0
        %1399 = vmatpush1.bf16.msra.mxu0 %v1356
        %1400 = vmatprep.subr.bf16.mxu0 0
        %1401 = vmatpush1.bf16.msra.mxu0 %v1357
        %1402 = vmatprep.subr.bf16.mxu0 0
        %1403 = vmatpush1.bf16.msra.mxu0 %v1358
        %1404 = vmatprep.subr.bf16.mxu0 0
        %1405 = vmatpush1.bf16.msra.mxu0 %v1359
        %1406 = vmatprep.subr.bf16.mxu0 0
        %1407 = vmatpush1.bf16.msra.mxu0 %v1360
        %1408 = vmatprep.subr.bf16.mxu0 0
        %1409 = vmatpush1.bf16.msra.mxu0 %v1361
        %1410 = vmatprep.mubr.bf16.mxu0 %v1277
        %1411 = vmatmul.mubr.bf16.gmra.mrb[0].mxu0 %v1276
        %v1412 = vpop.f32.mrb[0].mxu0
        %v1413 = vadd.f32 %v1281, %v1412
        %v1414 = vpop.f32.mrb[0].mxu0
        %v1415 = vpop.f32.mrb[0].mxu0
        %v1416 = vpop.f32.mrb[0].mxu0
        %1417 = vdwg.mxu0
        %v1418 = vadd.f32 %v1140, %v1413
        %1419 = vadd.xlane.f32.xlu0 %v1418
        %v1420 = vpop.xlane.xlu0 %1419
        %v1421 = vmul.f32 %v1420, %v636
        %v1422 = vsub.f32 %v1418, %v1421
        %v1423 = vmul.f32 %v1422, %v1422
        %1424 = vadd.xlane.f32.xlu0 %v1423
        %v1425 = vpop.xlane.xlu0 %1424
        %v1426 = vmul.f32 %v1425, %v636
        %v1427 = vadd.f32 %v1426, 1e-05
        %v1428 = vrsqrt.pop %v1427
        %v1429 = vmul.f32 %v1422, %v1428
        %v1430 = vlaneseq
        %v1431 = vshrl.u32 %v1430, 7
        %v1432 = vsub.s32 4, %v1431
        %v1433 = vrot.slane %v1025, %v1432
        %v1434 = vmul.f32 %v1429, %v1433
        %v1435 = vlaneseq
        %v1436 = vshrl.u32 %v1435, 7
        %v1437 = vsub.s32 5, %v1436
        %v1438 = vrot.slane %v1025, %v1437
        %v1439 = vadd.f32 %v1434, %v1438
        %1440 = vst [vmem:[%s355] sm:$0xff] %v1439
        %s1441 = sand.u32 %s206, 1
        %s1442 = scalar_lea.sflag [#allocation4], %s1441
        %s1443 = sand.u32 %s206, 1
        %s1444 = smul.addr %s1443, 8
        %s1445 = scalar_lea.vmem [#allocation10], %s1444
        // Predicated region
        $region69: #{tpu_custom_call.1} parent=51 // pred_check
          %p1446 = pneg %p216
        $region70: #{tpu_custom_call.1} parent=51 // pred_check_branch
          %1448 = sbr.rel (%p1446) target = $region72
        $region71: #{tpu_custom_call.1} parent=51 // pred_region
          %s1450 = ssub.s32 128, 128
          %1451 = vsyncadd %s1442, %s1450
          %s1452 = smul.addr %s25, 128
          %s1453 = scalar_lea.hbm %s8, %s1452
          %s1455 = sshll.u32 %s1445, 4
          %s1456 = int_to_ptr.vmem [resolvable:$true] %s1455
          %1458 = dma.vmem_to_hbm [thread:$0]  %s1456, 128, %s1453, %s1442
        $region72: #{tpu_custom_call.1} parent=51 // pred_fallthru
          _
      $region52: #{tpu_custom_call.1} parent=5 // pred_fallthru
        _
      %p1459 = scmp.le.s32.totalorder 2, %s20
      // Predicated region
      $region73: #{tpu_custom_call.1} parent=5 // pred_check
        %p1460 = pneg %p1459
      $region74: #{tpu_custom_call.1} parent=5 // pred_check_branch
        %1462 = sbr.rel (%p1460) target = $region76
      $region75: #{tpu_custom_call.1} parent=5 // pred_region
        %s1463 = ssub.s32 %s20, 2
        // Predicated region
        $region77: #{tpu_custom_call.1} parent=75 // pred_check
          %p1464 = pneg %p222
        $region78: #{tpu_custom_call.1} parent=75 // pred_check_branch
          %1466 = sbr.rel (%p1464) target = $region80
        $region79: #{tpu_custom_call.1} parent=75 // pred_region
          %s1467 = sand.u32 %s207, 1
          %s1468 = scalar_lea.sflag [#allocation4], %s1467
          %s1469 = sand.u32 %s207, 1
          %s1470 = smul.addr %s1469, 8
          %s1471 = scalar_lea.vmem [#allocation10], %s1470
          %1472 = dma.done %s1468, 128
        $region80: #{tpu_custom_call.1} parent=75 // pred_fallthru
          _
      $region76: #{tpu_custom_call.1} parent=5 // pred_fallthru
        _
    $region6: #{tpu_custom_call.1} parent=1 // loop_footer
      %s24 = sadd.s32 1, %s20
    $region7: #{tpu_custom_call.1} parent=1 // loop_footer_branch
      %19 = sbr.rel target = $region3
    $region8: #{tpu_custom_call.1} parent=1 // loop_exit
      _
    %1473 = vsyncpa [#allocation3], 1
    %s1474 = scalar_lea.sflag [#allocation3], 1
    %1475 = vsyncpa %s1474, 1
    %1476 = vsyncpa [#allocation6], 1
    %1477 = vsyncpa [#allocation9], 1
    %1478 = vsyncpa [#allocation4], 1
    %s1479 = scalar_lea.sflag [#allocation4], 1
    %1480 = vsyncpa %s1479, 1

</llo_original>
